<compile_context>
chip_gen: v6e
topology: v6e:2x2x1
jax: 0.10.0
libtpu: 0.0.40
codegen_flags: <defaults>
</compile_context>

<pallas_src>
import jax
import jax.numpy as jnp
from jax import lax
from jax.experimental import pallas as pl
from jax.experimental.pallas import tpu as pltpu

HIDDEN = 50          # nn.LSTM hidden_size
HP = 128             # hidden padded to the 128-lane vreg width
GP = 4 * HP          # padded gate width: each gate on its own 128-lane block
IN_FEAT = 3 * 2 * 3  # 18
OUT_CLASSES = 23
OUTP = 128           # lane-dense padded class count


def _lstm_head_kernel(
    x_ref,      # (S*Bp, 18)   f32  flattened time-major LSTM input (batch padded)
    h0_ref,     # (2, Bp, HP)  f32  initial hidden (layer0, layer1), zero-padded
    c0_ref,     # (2, Bp, HP)  f32  initial cell
    wih0_ref,   # (18, GP)     bf16 layer-0 input weights, gate-block padded
    b0_ref,     # (1, GP)      f32  b_ih_l0 + b_hh_l0, gate-block padded
    whh_ref,    # (2*HP, GP)   bf16 vstack(w_hh_l0, w_hh_l1), gate-block padded
    wih1_ref,   # (HP, GP)     bf16
    b1_ref,     # (1, GP)      f32  b_ih_l1 + b_hh_l1
    wlin_ref,   # (HP, OUTP)   bf16 classes padded to 128 lanes
    blin_ref,   # (1, OUTP)    f32  padded class cols = -1e30 (softmax mask)
    o_ref,      # (Bp, OUTP)   f32  log_softmax output (lane-dense)
    xp_ref,     # (S*Bp, GP)   f32  scratch: hoisted layer-0 input projection
):
    Bp = h0_ref.shape[1]
    S = x_ref.shape[0] // Bp

    # --- Hoisted, time-independent layer-0 input projection (+ fused bias). ---
    # bf16 MXU operands, f32 accumulation; this matmul is off the serial loop.
    xp_ref[...] = (
        jnp.dot(x_ref[...].astype(jnp.bfloat16), wih0_ref[...],
                preferred_element_type=jnp.float32)
        + b0_ref[...]
    )

    # Hoist only the tiny bias broadcast (JAX won't CSE broadcast_in_dim).
    # The big weights are deliberately NOT hoisted into vregs: read the refs
    # inside step() and let the MXU stream RHS from VMEM (avoids vreg spills
    # across the fully unrolled 8-step body).
    b1 = jnp.broadcast_to(b1_ref[...], (Bp, GP))
    zeros_blk = jnp.zeros((Bp, HP), jnp.bfloat16)

    def fast_sigmoid(x):
        # Exact sigmoid via a single EUP tanh + VPU fma.
        return 0.5 * jnp.tanh(0.5 * x) + 0.5

    def gates_to_hc(gates, c):
        # Each gate sits on its own 128-lane block -> lane-aligned slices,
        # no cross-lane shuffles on the serial path.
        i = fast_sigmoid(gates[:, 0 * HP:1 * HP])
        f = fast_sigmoid(gates[:, 1 * HP:2 * HP])
        g = jnp.tanh(gates[:, 2 * HP:3 * HP])
        o = fast_sigmoid(gates[:, 3 * HP:4 * HP])
        c_new = f * c + i * g
        h_new = o * jnp.tanh(c_new)
        return h_new, c_new

    def step(t, carry):
        h1, c1, h2, c2 = carry
        # Fused block-diagonal recurrent matmul: one K=256 dot computes both
        # h1 @ whh0 (rows 0:Bp) and h2 @ whh1 (rows Bp:2Bp). Fills the 256-deep
        # MXU on v6e/v7x and halves recurrent weight-tile loads per step.
        h1b = h1.astype(jnp.bfloat16)
        h2b = h2.astype(jnp.bfloat16)
        lhs = jnp.concatenate(
            [jnp.concatenate([h1b, zeros_blk], axis=1),
             jnp.concatenate([zeros_blk, h2b], axis=1)],
            axis=0)                                                  # (2Bp, 2HP)
        rec = jnp.dot(lhs, whh_ref[...],
                      preferred_element_type=jnp.float32)            # (2Bp, GP)
        rec0 = rec[:Bp]
        rec1 = rec[Bp:]

        row = pl.multiple_of(t * Bp, Bp)
        x_t = xp_ref[pl.ds(row, Bp), :]                              # (Bp, GP)
        h1n, c1n = gates_to_hc(x_t + rec0, c1)
        # TODO(synk): nn.LSTM dropout=0.8 between layers is training-only; eval semantics (no dropout).
        gates1 = (
            jnp.dot(h1n.astype(jnp.bfloat16), wih1_ref[...],
                    preferred_element_type=jnp.float32)
            + rec1 + b1
        )
        h2n, c2n = gates_to_hc(gates1, c2)
        return (h1n, c1n, h2n, c2n)

    carry0 = (h0_ref[0], c0_ref[0], h0_ref[1], c0_ref[1])
    # S is small & static: full unroll gives the scheduler cross-step visibility.
    _, _, h2, _ = lax.fori_loop(0, S, step, carry0, unroll=True)

    # Final linear on the last timestep of the top layer + log_softmax (dim 1).
    # Padded class columns carry a -1e30 bias, so no in-kernel masking needed
    # and the store is an unmasked, lane-dense (Bp, 128) vst.
    logits = (
        jnp.dot(h2.astype(jnp.bfloat16), wlin_ref[...],
                preferred_element_type=jnp.float32)
        + blin_ref[...]
    )
    z = logits - jnp.max(logits, axis=1, keepdims=True)
    o_ref[...] = z - jnp.log(jnp.sum(jnp.exp(z), axis=1, keepdims=True))


def _gate_pad_cols(w_t):
    """(K, 4*HIDDEN) -> (K, GP): gate g placed at columns [g*HP, g*HP+HIDDEN)."""
    K = w_t.shape[0]
    out = jnp.zeros((K, GP), jnp.float32)
    for g in range(4):
        out = out.at[:, g * HP: g * HP + HIDDEN].set(
            w_t[:, g * HIDDEN:(g + 1) * HIDDEN].astype(jnp.float32))
    return out


def _row_pad(w, rows):
    return jnp.zeros((rows, w.shape[1]), jnp.float32).at[: w.shape[0]].set(
        w.astype(jnp.float32))


def init_params(key):
    """Deterministic parameter init matching PyTorch LSTM/Linear shapes."""
    k_lstm = 1.0 / jnp.sqrt(jnp.float32(HIDDEN))
    k_lin = 1.0 / jnp.sqrt(jnp.float32(HIDDEN))
    keys = jax.random.split(key, 12)

    def u(k, shape, scale):
        return jax.random.uniform(k, shape, jnp.float32, -scale, scale)

    return dict(
        w_ih_l0=u(keys[0], (4 * HIDDEN, IN_FEAT), k_lstm),
        w_hh_l0=u(keys[1], (4 * HIDDEN, HIDDEN), k_lstm),
        b_ih_l0=u(keys[2], (4 * HIDDEN,), k_lstm),
        b_hh_l0=u(keys[3], (4 * HIDDEN,), k_lstm),
        w_ih_l1=u(keys[4], (4 * HIDDEN, HIDDEN), k_lstm),
        w_hh_l1=u(keys[5], (4 * HIDDEN, HIDDEN), k_lstm),
        b_ih_l1=u(keys[6], (4 * HIDDEN,), k_lstm),
        b_hh_l1=u(keys[7], (4 * HIDDEN,), k_lstm),
        w_lin=u(keys[8], (OUT_CLASSES, HIDDEN), k_lin),
        b_lin=u(keys[9], (OUT_CLASSES,), k_lin),
    )


def prepare_weights(params):
    """One-time weight prep: gate-block padding, transposes, bf16 casts.

    Call once and reuse across forward calls so the per-call path carries no
    padding/transpose XLA ops or HBM round-trips for weights.
    """
    wih0 = _gate_pad_cols(params["w_ih_l0"].T).astype(jnp.bfloat16)          # (18, GP)
    b0 = _gate_pad_cols((params["b_ih_l0"] + params["b_hh_l0"]).reshape(1, -1))  # (1, GP) f32
    whh0 = _row_pad(_gate_pad_cols(params["w_hh_l0"].T), HP)                 # (HP, GP)
    whh1 = _row_pad(_gate_pad_cols(params["w_hh_l1"].T), HP)                 # (HP, GP)
    whh = jnp.concatenate([whh0, whh1], axis=0).astype(jnp.bfloat16)         # (2*HP, GP)
    wih1 = _row_pad(_gate_pad_cols(params["w_ih_l1"].T), HP).astype(jnp.bfloat16)  # (HP, GP)
    b1 = _gate_pad_cols((params["b_ih_l1"] + params["b_hh_l1"]).reshape(1, -1))    # (1, GP) f32
    wlin = jnp.zeros((HP, OUTP), jnp.float32).at[:, :OUT_CLASSES].set(
        _row_pad(params["w_lin"].T, HP)).astype(jnp.bfloat16)                # (HP, OUTP)
    blin = jnp.full((1, OUTP), -1e30, jnp.float32).at[0, :OUT_CLASSES].set(
        params["b_lin"].astype(jnp.float32))                                 # (1, OUTP)
    return dict(wih0=wih0, b0=b0, whh=whh, wih1=wih1, b1=b1, wlin=wlin, blin=blin)


def cnn_lstm_forward(x, weights, h0=None, c0=None):
    """Reproduces CNN_LSTM.forward. x: (B, T, C, H, W, S) float32.

    `weights` is the output of prepare_weights(params).
    """
    B, T, C, Hh, W, S = x.shape

    # PyTorch: c_in = x.view(B*T*S, C, H, W)  (raw contiguous reinterpretation)
    c_in = x.reshape(B * T * S, C, Hh, W)
    # TODO(synk): self.cnn is never defined in the reference __init__; identity here.
    c_out = c_in
    # PyTorch: r_in = c_out.view(B, S, -1)
    r_in = c_out.reshape(B, S, -1)
    assert r_in.shape[-1] == IN_FEAT, "feature dim must be 18 (=3*2*3) for the LSTM (requires T=1)"

    # Pad batch to the 8-sublane width. (For throughput, batch many sequences
    # per call — the per-step recurrence latency is ~independent of M up to the
    # MXU height; on v7x a parallel grid axis over sequences would use both TCs.)
    Bp = max(8, ((B + 7) // 8) * 8)

    # Time-major (S, Bp, 18), zero-padded batch rows, flattened to (S*Bp, 18).
    x_tm = jnp.transpose(r_in, (1, 0, 2)).astype(jnp.float32)
    x_tm = jnp.zeros((S, Bp, IN_FEAT), jnp.float32).at[:, :B, :].set(x_tm)
    x2d = x_tm.reshape(S * Bp, IN_FEAT)

    def pad_state(s):
        if s is None:
            return jnp.zeros((2, Bp, HP), jnp.float32)
        return jnp.zeros((2, Bp, HP), jnp.float32).at[:, :B, :HIDDEN].set(
            s.astype(jnp.float32))

    h0p = pad_state(h0)
    c0p = pad_state(c0)

    inputs = (x2d, h0p, c0p,
              weights["wih0"], weights["b0"], weights["whh"],
              weights["wih1"], weights["b1"], weights["wlin"], weights["blin"])

    out = pl.pallas_call(
        _lstm_head_kernel,
        out_shape=jax.ShapeDtypeStruct((Bp, OUTP), jnp.float32),
        in_specs=[pl.BlockSpec(memory_space=pltpu.MemorySpace.VMEM)] * len(inputs),
        out_specs=pl.BlockSpec(memory_space=pltpu.MemorySpace.VMEM),
        scratch_shapes=[pltpu.VMEM((S * Bp, GP), jnp.float32)],
    )(*inputs)
    return out[:B, :OUT_CLASSES]


if __name__ == "__main__":
    key = jax.random.PRNGKey(0)
    kx, kp = jax.random.split(key)

    # Shapes consistent with the module's forward:
    # (batch=2, timesteps=1, C=3, H=2, W=3, sequence=8) -> LSTM input feature = 18.
    B, T, C, Hh, W, S = 2, 1, 3, 2, 3, 8
    x = jax.random.normal(kx, (B, T, C, Hh, W, S), jnp.float32)

    params = init_params(kp)
    weights = prepare_weights(params)          # one-time padded bf16 weight prep
    weights = jax.tree.map(jax.block_until_ready, weights)

    fwd = jax.jit(cnn_lstm_forward)
    out = fwd(x, weights)
    out = jax.block_until_ready(out)

    assert out.shape == (B, OUT_CLASSES)
    # log_softmax rows should exponentiate-and-sum to ~1.
    assert jnp.allclose(jnp.sum(jnp.exp(out), axis=1), 1.0, atol=1e-3)
    print("KERNEL_OK")
</pallas_src>

<mosaic_0001>
module attributes {stable_mosaic.version = 11 : i64} {
  func.func @_lstm_head_kernel(%arg0: memref<64x18xf32, #tpu.memory_space<vmem>>, %arg1: memref<2x8x128xf32, #tpu.memory_space<vmem>>, %arg2: memref<2x8x128xf32, #tpu.memory_space<vmem>>, %arg3: memref<18x512xbf16, #tpu.memory_space<vmem>>, %arg4: memref<1x512xf32, #tpu.memory_space<vmem>>, %arg5: memref<256x512xbf16, #tpu.memory_space<vmem>>, %arg6: memref<128x512xbf16, #tpu.memory_space<vmem>>, %arg7: memref<1x512xf32, #tpu.memory_space<vmem>>, %arg8: memref<128x128xbf16, #tpu.memory_space<vmem>>, %arg9: memref<1x128xf32, #tpu.memory_space<vmem>>, %arg10: memref<8x128xf32, #tpu.memory_space<vmem>>, %arg11: memref<64x512xf32, #tpu.memory_space<vmem>>) attributes {dimension_semantics = [], scalar_prefetch = 0 : i64, scratch_operands = 1 : i64, tpu.core_type = #tpu.core_type<tc>} {
    %c0 = arith.constant 0 : index
    %c0_0 = arith.constant 0 : index
    %0 = vector.load %arg0[%c0, %c0_0] : memref<64x18xf32, #tpu.memory_space<vmem>>, vector<64x18xf32>
    %1 = arith.truncf %0 : vector<64x18xf32> to vector<64x18xbf16>
    %c0_1 = arith.constant 0 : index
    %c0_2 = arith.constant 0 : index
    %2 = vector.load %arg3[%c0_1, %c0_2] : memref<18x512xbf16, #tpu.memory_space<vmem>>, vector<18x512xbf16>
    %cst = arith.constant dense<0.000000e+00> : vector<64x512xf32>
    %3 = tpu.matmul %1, %2, %cst {dimension_numbers = #tpu.dot_dimension_numbers<[1], [0], [0], [1], [0, 0, 1, 1], [], []>} : vector<64x18xbf16>, vector<18x512xbf16>, vector<64x512xf32> -> vector<64x512xf32>
    %c0_3 = arith.constant 0 : index
    %c0_4 = arith.constant 0 : index
    %4 = vector.load %arg4[%c0_3, %c0_4] : memref<1x512xf32, #tpu.memory_space<vmem>>, vector<1x512xf32>
    %5 = vector.broadcast %4 : vector<1x512xf32> to vector<64x512xf32>
    %6 = arith.addf %3, %5 : vector<64x512xf32>
    %c0_5 = arith.constant 0 : index
    %c0_6 = arith.constant 0 : index
    %7 = vector.load %arg11[%c0_5, %c0_6] : memref<64x512xf32, #tpu.memory_space<vmem>>, vector<64x512xf32>
    tpu.vector_store %arg11[%c0_5, %c0_6], %6 {strides = array<i32>} : memref<64x512xf32, #tpu.memory_space<vmem>>, vector<64x512xf32>,
    %c0_7 = arith.constant 0 : index
    %c0_8 = arith.constant 0 : index
    %8 = vector.load %arg7[%c0_7, %c0_8] : memref<1x512xf32, #tpu.memory_space<vmem>>, vector<1x512xf32>
    %9 = vector.shape_cast %8 : vector<1x512xf32> to vector<1x512xf32>
    %10 = vector.broadcast %9 : vector<1x512xf32> to vector<8x512xf32>
    %cst_9 = arith.constant 0.000000e+00 : bf16
    %11 = vector.broadcast %cst_9 : bf16 to vector<8x128xbf16>
    %c0_10 = arith.constant 0 : index
    %c0_11 = arith.constant 0 : index
    %c0_12 = arith.constant 0 : index
    %12 = vector.load %arg1[%c0_10, %c0_11, %c0_12] : memref<2x8x128xf32, #tpu.memory_space<vmem>>, vector<1x8x128xf32>
    %13 = vector.shape_cast %12 : vector<1x8x128xf32> to vector<8x128xf32>
    %c0_13 = arith.constant 0 : index
    %c0_14 = arith.constant 0 : index
    %c0_15 = arith.constant 0 : index
    %14 = vector.load %arg2[%c0_13, %c0_14, %c0_15] : memref<2x8x128xf32, #tpu.memory_space<vmem>>, vector<1x8x128xf32>
    %15 = vector.shape_cast %14 : vector<1x8x128xf32> to vector<8x128xf32>
    %c1 = arith.constant 1 : index
    %c0_16 = arith.constant 0 : index
    %c0_17 = arith.constant 0 : index
    %16 = vector.load %arg1[%c1, %c0_16, %c0_17] : memref<2x8x128xf32, #tpu.memory_space<vmem>>, vector<1x8x128xf32>
    %17 = vector.shape_cast %16 : vector<1x8x128xf32> to vector<8x128xf32>
    %c1_18 = arith.constant 1 : index
    %c0_19 = arith.constant 0 : index
    %c0_20 = arith.constant 0 : index
    %18 = vector.load %arg2[%c1_18, %c0_19, %c0_20] : memref<2x8x128xf32, #tpu.memory_space<vmem>>, vector<1x8x128xf32>
    %19 = vector.shape_cast %18 : vector<1x8x128xf32> to vector<8x128xf32>
    %c0_i32 = arith.constant 0 : i32
    %20 = arith.truncf %13 : vector<8x128xf32> to vector<8x128xbf16>
    %21 = arith.truncf %17 : vector<8x128xf32> to vector<8x128xbf16>
    %22 = tpu.concatenate %20, %11 in 1 : vector<8x128xbf16>, vector<8x128xbf16> -> vector<8x256xbf16>
    %23 = tpu.concatenate %11, %21 in 1 : vector<8x128xbf16>, vector<8x128xbf16> -> vector<8x256xbf16>
    %24 = tpu.concatenate %22, %23 in 0 : vector<8x256xbf16>, vector<8x256xbf16> -> vector<16x256xbf16>
    %c0_21 = arith.constant 0 : index
    %c0_22 = arith.constant 0 : index
    %25 = vector.load %arg5[%c0_21, %c0_22] : memref<256x512xbf16, #tpu.memory_space<vmem>>, vector<256x512xbf16>
    %cst_23 = arith.constant dense<0.000000e+00> : vector<16x512xf32>
    %26 = tpu.matmul %24, %25, %cst_23 {dimension_numbers = #tpu.dot_dimension_numbers<[1], [0], [0], [1], [0, 0, 1, 1], [], []>} : vector<16x256xbf16>, vector<256x512xbf16>, vector<16x512xf32> -> vector<16x512xf32>
    %27 = vector.extract_strided_slice %26 {offsets = [0, 0], sizes = [8, 512], strides = [1, 1]} : vector<16x512xf32> to vector<8x512xf32>
    %28 = vector.extract_strided_slice %26 {offsets = [8, 0], sizes = [8, 512], strides = [1, 1]} : vector<16x512xf32> to vector<8x512xf32>
    %c8_i32 = arith.constant 8 : i32
    %29 = arith.muli %c0_i32, %c8_i32 : i32
    %30 = tpu.assume_multiple %29, 8 : i32
    %31 = arith.index_cast %30 : i32 to index
    %c0_24 = arith.constant 0 : index
    %32 = vector.load %arg11[%31, %c0_24] : memref<64x512xf32, #tpu.memory_space<vmem>>, vector<8x512xf32>
    %33 = arith.addf %32, %27 : vector<8x512xf32>
    %34 = vector.extract_strided_slice %33 {offsets = [0, 0], sizes = [8, 128], strides = [1, 1]} : vector<8x512xf32> to vector<8x128xf32>
    %cst_25 = arith.constant 5.000000e-01 : f32
    %35 = vector.broadcast %cst_25 : f32 to vector<8x128xf32>
    %36 = arith.mulf %35, %34 : vector<8x128xf32>
    %37 = math.tanh %36 : vector<8x128xf32>
    %cst_26 = arith.constant 5.000000e-01 : f32
    %38 = vector.broadcast %cst_26 : f32 to vector<8x128xf32>
    %39 = arith.mulf %38, %37 : vector<8x128xf32>
    %cst_27 = arith.constant 5.000000e-01 : f32
    %40 = vector.broadcast %cst_27 : f32 to vector<8x128xf32>
    %41 = arith.addf %39, %40 : vector<8x128xf32>
    %42 = vector.extract_strided_slice %33 {offsets = [0, 128], sizes = [8, 128], strides = [1, 1]} : vector<8x512xf32> to vector<8x128xf32>
    %cst_28 = arith.constant 5.000000e-01 : f32
    %43 = vector.broadcast %cst_28 : f32 to vector<8x128xf32>
    %44 = arith.mulf %43, %42 : vector<8x128xf32>
    %45 = math.tanh %44 : vector<8x128xf32>
    %cst_29 = arith.constant 5.000000e-01 : f32
    %46 = vector.broadcast %cst_29 : f32 to vector<8x128xf32>
    %47 = arith.mulf %46, %45 : vector<8x128xf32>
    %cst_30 = arith.constant 5.000000e-01 : f32
    %48 = vector.broadcast %cst_30 : f32 to vector<8x128xf32>
    %49 = arith.addf %47, %48 : vector<8x128xf32>
    %50 = vector.extract_strided_slice %33 {offsets = [0, 256], sizes = [8, 128], strides = [1, 1]} : vector<8x512xf32> to vector<8x128xf32>
    %51 = math.tanh %50 : vector<8x128xf32>
    %52 = vector.extract_strided_slice %33 {offsets = [0, 384], sizes = [8, 128], strides = [1, 1]} : vector<8x512xf32> to vector<8x128xf32>
    %cst_31 = arith.constant 5.000000e-01 : f32
    %53 = vector.broadcast %cst_31 : f32 to vector<8x128xf32>
    %54 = arith.mulf %53, %52 : vector<8x128xf32>
    %55 = math.tanh %54 : vector<8x128xf32>
    %cst_32 = arith.constant 5.000000e-01 : f32
    %56 = vector.broadcast %cst_32 : f32 to vector<8x128xf32>
    %57 = arith.mulf %56, %55 : vector<8x128xf32>
    %cst_33 = arith.constant 5.000000e-01 : f32
    %58 = vector.broadcast %cst_33 : f32 to vector<8x128xf32>
    %59 = arith.addf %57, %58 : vector<8x128xf32>
    %60 = arith.mulf %49, %15 : vector<8x128xf32>
    %61 = arith.mulf %41, %51 : vector<8x128xf32>
    %62 = arith.addf %60, %61 : vector<8x128xf32>
    %63 = math.tanh %62 : vector<8x128xf32>
    %64 = arith.mulf %59, %63 : vector<8x128xf32>
    %65 = arith.truncf %64 : vector<8x128xf32> to vector<8x128xbf16>
    %c0_34 = arith.constant 0 : index
    %c0_35 = arith.constant 0 : index
    %66 = vector.load %arg6[%c0_34, %c0_35] : memref<128x512xbf16, #tpu.memory_space<vmem>>, vector<128x512xbf16>
    %cst_36 = arith.constant dense<0.000000e+00> : vector<8x512xf32>
    %67 = tpu.matmul %65, %66, %cst_36 {dimension_numbers = #tpu.dot_dimension_numbers<[1], [0], [0], [1], [0, 0, 1, 1], [], []>} : vector<8x128xbf16>, vector<128x512xbf16>, vector<8x512xf32> -> vector<8x512xf32>
    %68 = arith.addf %67, %28 : vector<8x512xf32>
    %69 = arith.addf %68, %10 : vector<8x512xf32>
    %70 = vector.extract_strided_slice %69 {offsets = [0, 0], sizes = [8, 128], strides = [1, 1]} : vector<8x512xf32> to vector<8x128xf32>
    %cst_37 = arith.constant 5.000000e-01 : f32
    %71 = vector.broadcast %cst_37 : f32 to vector<8x128xf32>
    %72 = arith.mulf %71, %70 : vector<8x128xf32>
    %73 = math.tanh %72 : vector<8x128xf32>
    %cst_38 = arith.constant 5.000000e-01 : f32
    %74 = vector.broadcast %cst_38 : f32 to vector<8x128xf32>
    %75 = arith.mulf %74, %73 : vector<8x128xf32>
    %cst_39 = arith.constant 5.000000e-01 : f32
    %76 = vector.broadcast %cst_39 : f32 to vector<8x128xf32>
    %77 = arith.addf %75, %76 : vector<8x128xf32>
    %78 = vector.extract_strided_slice %69 {offsets = [0, 128], sizes = [8, 128], strides = [1, 1]} : vector<8x512xf32> to vector<8x128xf32>
    %cst_40 = arith.constant 5.000000e-01 : f32
    %79 = vector.broadcast %cst_40 : f32 to vector<8x128xf32>
    %80 = arith.mulf %79, %78 : vector<8x128xf32>
    %81 = math.tanh %80 : vector<8x128xf32>
    %cst_41 = arith.constant 5.000000e-01 : f32
    %82 = vector.broadcast %cst_41 : f32 to vector<8x128xf32>
    %83 = arith.mulf %82, %81 : vector<8x128xf32>
    %cst_42 = arith.constant 5.000000e-01 : f32
    %84 = vector.broadcast %cst_42 : f32 to vector<8x128xf32>
    %85 = arith.addf %83, %84 : vector<8x128xf32>
    %86 = vector.extract_strided_slice %69 {offsets = [0, 256], sizes = [8, 128], strides = [1, 1]} : vector<8x512xf32> to vector<8x128xf32>
    %87 = math.tanh %86 : vector<8x128xf32>
    %88 = vector.extract_strided_slice %69 {offsets = [0, 384], sizes = [8, 128], strides = [1, 1]} : vector<8x512xf32> to vector<8x128xf32>
    %cst_43 = arith.constant 5.000000e-01 : f32
    %89 = vector.broadcast %cst_43 : f32 to vector<8x128xf32>
    %90 = arith.mulf %89, %88 : vector<8x128xf32>
    %91 = math.tanh %90 : vector<8x128xf32>
    %cst_44 = arith.constant 5.000000e-01 : f32
    %92 = vector.broadcast %cst_44 : f32 to vector<8x128xf32>
    %93 = arith.mulf %92, %91 : vector<8x128xf32>
    %cst_45 = arith.constant 5.000000e-01 : f32
    %94 = vector.broadcast %cst_45 : f32 to vector<8x128xf32>
    %95 = arith.addf %93, %94 : vector<8x128xf32>
    %96 = arith.mulf %85, %19 : vector<8x128xf32>
    %97 = arith.mulf %77, %87 : vector<8x128xf32>
    %98 = arith.addf %96, %97 : vector<8x128xf32>
    %99 = math.tanh %98 : vector<8x128xf32>
    %100 = arith.mulf %95, %99 : vector<8x128xf32>
    %c1_i32 = arith.constant 1 : i32
    %101 = arith.truncf %64 : vector<8x128xf32> to vector<8x128xbf16>
    %102 = arith.truncf %100 : vector<8x128xf32> to vector<8x128xbf16>
    %103 = tpu.concatenate %101, %11 in 1 : vector<8x128xbf16>, vector<8x128xbf16> -> vector<8x256xbf16>
    %104 = tpu.concatenate %11, %102 in 1 : vector<8x128xbf16>, vector<8x128xbf16> -> vector<8x256xbf16>
    %105 = tpu.concatenate %103, %104 in 0 : vector<8x256xbf16>, vector<8x256xbf16> -> vector<16x256xbf16>
    %c0_46 = arith.constant 0 : index
    %c0_47 = arith.constant 0 : index
    %106 = vector.load %arg5[%c0_46, %c0_47] : memref<256x512xbf16, #tpu.memory_space<vmem>>, vector<256x512xbf16>
    %cst_48 = arith.constant dense<0.000000e+00> : vector<16x512xf32>
    %107 = tpu.matmul %105, %106, %cst_48 {dimension_numbers = #tpu.dot_dimension_numbers<[1], [0], [0], [1], [0, 0, 1, 1], [], []>} : vector<16x256xbf16>, vector<256x512xbf16>, vector<16x512xf32> -> vector<16x512xf32>
    %108 = vector.extract_strided_slice %107 {offsets = [0, 0], sizes = [8, 512], strides = [1, 1]} : vector<16x512xf32> to vector<8x512xf32>
    %109 = vector.extract_strided_slice %107 {offsets = [8, 0], sizes = [8, 512], strides = [1, 1]} : vector<16x512xf32> to vector<8x512xf32>
    %c8_i32_49 = arith.constant 8 : i32
    %110 = arith.muli %c1_i32, %c8_i32_49 : i32
    %111 = tpu.assume_multiple %110, 8 : i32
    %112 = arith.index_cast %111 : i32 to index
    %c0_50 = arith.constant 0 : index
    %113 = vector.load %arg11[%112, %c0_50] : memref<64x512xf32, #tpu.memory_space<vmem>>, vector<8x512xf32>
    %114 = arith.addf %113, %108 : vector<8x512xf32>
    %115 = vector.extract_strided_slice %114 {offsets = [0, 0], sizes = [8, 128], strides = [1, 1]} : vector<8x512xf32> to vector<8x128xf32>
    %cst_51 = arith.constant 5.000000e-01 : f32
    %116 = vector.broadcast %cst_51 : f32 to vector<8x128xf32>
    %117 = arith.mulf %116, %115 : vector<8x128xf32>
    %118 = math.tanh %117 : vector<8x128xf32>
    %cst_52 = arith.constant 5.000000e-01 : f32
    %119 = vector.broadcast %cst_52 : f32 to vector<8x128xf32>
    %120 = arith.mulf %119, %118 : vector<8x128xf32>
    %cst_53 = arith.constant 5.000000e-01 : f32
    %121 = vector.broadcast %cst_53 : f32 to vector<8x128xf32>
    %122 = arith.addf %120, %121 : vector<8x128xf32>
    %123 = vector.extract_strided_slice %114 {offsets = [0, 128], sizes = [8, 128], strides = [1, 1]} : vector<8x512xf32> to vector<8x128xf32>
    %cst_54 = arith.constant 5.000000e-01 : f32
    %124 = vector.broadcast %cst_54 : f32 to vector<8x128xf32>
    %125 = arith.mulf %124, %123 : vector<8x128xf32>
    %126 = math.tanh %125 : vector<8x128xf32>
    %cst_55 = arith.constant 5.000000e-01 : f32
    %127 = vector.broadcast %cst_55 : f32 to vector<8x128xf32>
    %128 = arith.mulf %127, %126 : vector<8x128xf32>
    %cst_56 = arith.constant 5.000000e-01 : f32
    %129 = vector.broadcast %cst_56 : f32 to vector<8x128xf32>
    %130 = arith.addf %128, %129 : vector<8x128xf32>
    %131 = vector.extract_strided_slice %114 {offsets = [0, 256], sizes = [8, 128], strides = [1, 1]} : vector<8x512xf32> to vector<8x128xf32>
    %132 = math.tanh %131 : vector<8x128xf32>
    %133 = vector.extract_strided_slice %114 {offsets = [0, 384], sizes = [8, 128], strides = [1, 1]} : vector<8x512xf32> to vector<8x128xf32>
    %cst_57 = arith.constant 5.000000e-01 : f32
    %134 = vector.broadcast %cst_57 : f32 to vector<8x128xf32>
    %135 = arith.mulf %134, %133 : vector<8x128xf32>
    %136 = math.tanh %135 : vector<8x128xf32>
    %cst_58 = arith.constant 5.000000e-01 : f32
    %137 = vector.broadcast %cst_58 : f32 to vector<8x128xf32>
    %138 = arith.mulf %137, %136 : vector<8x128xf32>
    %cst_59 = arith.constant 5.000000e-01 : f32
    %139 = vector.broadcast %cst_59 : f32 to vector<8x128xf32>
    %140 = arith.addf %138, %139 : vector<8x128xf32>
    %141 = arith.mulf %130, %62 : vector<8x128xf32>
    %142 = arith.mulf %122, %132 : vector<8x128xf32>
    %143 = arith.addf %141, %142 : vector<8x128xf32>
    %144 = math.tanh %143 : vector<8x128xf32>
    %145 = arith.mulf %140, %144 : vector<8x128xf32>
    %146 = arith.truncf %145 : vector<8x128xf32> to vector<8x128xbf16>
    %c0_60 = arith.constant 0 : index
    %c0_61 = arith.constant 0 : index
    %147 = vector.load %arg6[%c0_60, %c0_61] : memref<128x512xbf16, #tpu.memory_space<vmem>>, vector<128x512xbf16>
    %cst_62 = arith.constant dense<0.000000e+00> : vector<8x512xf32>
    %148 = tpu.matmul %146, %147, %cst_62 {dimension_numbers = #tpu.dot_dimension_numbers<[1], [0], [0], [1], [0, 0, 1, 1], [], []>} : vector<8x128xbf16>, vector<128x512xbf16>, vector<8x512xf32> -> vector<8x512xf32>
    %149 = arith.addf %148, %109 : vector<8x512xf32>
    %150 = arith.addf %149, %10 : vector<8x512xf32>
    %151 = vector.extract_strided_slice %150 {offsets = [0, 0], sizes = [8, 128], strides = [1, 1]} : vector<8x512xf32> to vector<8x128xf32>
    %cst_63 = arith.constant 5.000000e-01 : f32
    %152 = vector.broadcast %cst_63 : f32 to vector<8x128xf32>
    %153 = arith.mulf %152, %151 : vector<8x128xf32>
    %154 = math.tanh %153 : vector<8x128xf32>
    %cst_64 = arith.constant 5.000000e-01 : f32
    %155 = vector.broadcast %cst_64 : f32 to vector<8x128xf32>
    %156 = arith.mulf %155, %154 : vector<8x128xf32>
    %cst_65 = arith.constant 5.000000e-01 : f32
    %157 = vector.broadcast %cst_65 : f32 to vector<8x128xf32>
    %158 = arith.addf %156, %157 : vector<8x128xf32>
    %159 = vector.extract_strided_slice %150 {offsets = [0, 128], sizes = [8, 128], strides = [1, 1]} : vector<8x512xf32> to vector<8x128xf32>
    %cst_66 = arith.constant 5.000000e-01 : f32
    %160 = vector.broadcast %cst_66 : f32 to vector<8x128xf32>
    %161 = arith.mulf %160, %159 : vector<8x128xf32>
    %162 = math.tanh %161 : vector<8x128xf32>
    %cst_67 = arith.constant 5.000000e-01 : f32
    %163 = vector.broadcast %cst_67 : f32 to vector<8x128xf32>
    %164 = arith.mulf %163, %162 : vector<8x128xf32>
    %cst_68 = arith.constant 5.000000e-01 : f32
    %165 = vector.broadcast %cst_68 : f32 to vector<8x128xf32>
    %166 = arith.addf %164, %165 : vector<8x128xf32>
    %167 = vector.extract_strided_slice %150 {offsets = [0, 256], sizes = [8, 128], strides = [1, 1]} : vector<8x512xf32> to vector<8x128xf32>
    %168 = math.tanh %167 : vector<8x128xf32>
    %169 = vector.extract_strided_slice %150 {offsets = [0, 384], sizes = [8, 128], strides = [1, 1]} : vector<8x512xf32> to vector<8x128xf32>
    %cst_69 = arith.constant 5.000000e-01 : f32
    %170 = vector.broadcast %cst_69 : f32 to vector<8x128xf32>
    %171 = arith.mulf %170, %169 : vector<8x128xf32>
    %172 = math.tanh %171 : vector<8x128xf32>
    %cst_70 = arith.constant 5.000000e-01 : f32
    %173 = vector.broadcast %cst_70 : f32 to vector<8x128xf32>
    %174 = arith.mulf %173, %172 : vector<8x128xf32>
    %cst_71 = arith.constant 5.000000e-01 : f32
    %175 = vector.broadcast %cst_71 : f32 to vector<8x128xf32>
    %176 = arith.addf %174, %175 : vector<8x128xf32>
    %177 = arith.mulf %166, %98 : vector<8x128xf32>
    %178 = arith.mulf %158, %168 : vector<8x128xf32>
    %179 = arith.addf %177, %178 : vector<8x128xf32>
    %180 = math.tanh %179 : vector<8x128xf32>
    %181 = arith.mulf %176, %180 : vector<8x128xf32>
    %c2_i32 = arith.constant 2 : i32
    %182 = arith.truncf %145 : vector<8x128xf32> to vector<8x128xbf16>
    %183 = arith.truncf %181 : vector<8x128xf32> to vector<8x128xbf16>
    %184 = tpu.concatenate %182, %11 in 1 : vector<8x128xbf16>, vector<8x128xbf16> -> vector<8x256xbf16>
    %185 = tpu.concatenate %11, %183 in 1 : vector<8x128xbf16>, vector<8x128xbf16> -> vector<8x256xbf16>
    %186 = tpu.concatenate %184, %185 in 0 : vector<8x256xbf16>, vector<8x256xbf16> -> vector<16x256xbf16>
    %c0_72 = arith.constant 0 : index
    %c0_73 = arith.constant 0 : index
    %187 = vector.load %arg5[%c0_72, %c0_73] : memref<256x512xbf16, #tpu.memory_space<vmem>>, vector<256x512xbf16>
    %cst_74 = arith.constant dense<0.000000e+00> : vector<16x512xf32>
    %188 = tpu.matmul %186, %187, %cst_74 {dimension_numbers = #tpu.dot_dimension_numbers<[1], [0], [0], [1], [0, 0, 1, 1], [], []>} : vector<16x256xbf16>, vector<256x512xbf16>, vector<16x512xf32> -> vector<16x512xf32>
    %189 = vector.extract_strided_slice %188 {offsets = [0, 0], sizes = [8, 512], strides = [1, 1]} : vector<16x512xf32> to vector<8x512xf32>
    %190 = vector.extract_strided_slice %188 {offsets = [8, 0], sizes = [8, 512], strides = [1, 1]} : vector<16x512xf32> to vector<8x512xf32>
    %c8_i32_75 = arith.constant 8 : i32
    %191 = arith.muli %c2_i32, %c8_i32_75 : i32
    %192 = tpu.assume_multiple %191, 8 : i32
    %193 = arith.index_cast %192 : i32 to index
    %c0_76 = arith.constant 0 : index
    %194 = vector.load %arg11[%193, %c0_76] : memref<64x512xf32, #tpu.memory_space<vmem>>, vector<8x512xf32>
    %195 = arith.addf %194, %189 : vector<8x512xf32>
    %196 = vector.extract_strided_slice %195 {offsets = [0, 0], sizes = [8, 128], strides = [1, 1]} : vector<8x512xf32> to vector<8x128xf32>
    %cst_77 = arith.constant 5.000000e-01 : f32
    %197 = vector.broadcast %cst_77 : f32 to vector<8x128xf32>
    %198 = arith.mulf %197, %196 : vector<8x128xf32>
    %199 = math.tanh %198 : vector<8x128xf32>
    %cst_78 = arith.constant 5.000000e-01 : f32
    %200 = vector.broadcast %cst_78 : f32 to vector<8x128xf32>
    %201 = arith.mulf %200, %199 : vector<8x128xf32>
    %cst_79 = arith.constant 5.000000e-01 : f32
    %202 = vector.broadcast %cst_79 : f32 to vector<8x128xf32>
    %203 = arith.addf %201, %202 : vector<8x128xf32>
    %204 = vector.extract_strided_slice %195 {offsets = [0, 128], sizes = [8, 128], strides = [1, 1]} : vector<8x512xf32> to vector<8x128xf32>
    %cst_80 = arith.constant 5.000000e-01 : f32
    %205 = vector.broadcast %cst_80 : f32 to vector<8x128xf32>
    %206 = arith.mulf %205, %204 : vector<8x128xf32>
    %207 = math.tanh %206 : vector<8x128xf32>
    %cst_81 = arith.constant 5.000000e-01 : f32
    %208 = vector.broadcast %cst_81 : f32 to vector<8x128xf32>
    %209 = arith.mulf %208, %207 : vector<8x128xf32>
    %cst_82 = arith.constant 5.000000e-01 : f32
    %210 = vector.broadcast %cst_82 : f32 to vector<8x128xf32>
    %211 = arith.addf %209, %210 : vector<8x128xf32>
    %212 = vector.extract_strided_slice %195 {offsets = [0, 256], sizes = [8, 128], strides = [1, 1]} : vector<8x512xf32> to vector<8x128xf32>
    %213 = math.tanh %212 : vector<8x128xf32>
    %214 = vector.extract_strided_slice %195 {offsets = [0, 384], sizes = [8, 128], strides = [1, 1]} : vector<8x512xf32> to vector<8x128xf32>
    %cst_83 = arith.constant 5.000000e-01 : f32
    %215 = vector.broadcast %cst_83 : f32 to vector<8x128xf32>
    %216 = arith.mulf %215, %214 : vector<8x128xf32>
    %217 = math.tanh %216 : vector<8x128xf32>
    %cst_84 = arith.constant 5.000000e-01 : f32
    %218 = vector.broadcast %cst_84 : f32 to vector<8x128xf32>
    %219 = arith.mulf %218, %217 : vector<8x128xf32>
    %cst_85 = arith.constant 5.000000e-01 : f32
    %220 = vector.broadcast %cst_85 : f32 to vector<8x128xf32>
    %221 = arith.addf %219, %220 : vector<8x128xf32>
    %222 = arith.mulf %211, %143 : vector<8x128xf32>
    %223 = arith.mulf %203, %213 : vector<8x128xf32>
    %224 = arith.addf %222, %223 : vector<8x128xf32>
    %225 = math.tanh %224 : vector<8x128xf32>
    %226 = arith.mulf %221, %225 : vector<8x128xf32>
    %227 = arith.truncf %226 : vector<8x128xf32> to vector<8x128xbf16>
    %c0_86 = arith.constant 0 : index
    %c0_87 = arith.constant 0 : index
    %228 = vector.load %arg6[%c0_86, %c0_87] : memref<128x512xbf16, #tpu.memory_space<vmem>>, vector<128x512xbf16>
    %cst_88 = arith.constant dense<0.000000e+00> : vector<8x512xf32>
    %229 = tpu.matmul %227, %228, %cst_88 {dimension_numbers = #tpu.dot_dimension_numbers<[1], [0], [0], [1], [0, 0, 1, 1], [], []>} : vector<8x128xbf16>, vector<128x512xbf16>, vector<8x512xf32> -> vector<8x512xf32>
    %230 = arith.addf %229, %190 : vector<8x512xf32>
    %231 = arith.addf %230, %10 : vector<8x512xf32>
    %232 = vector.extract_strided_slice %231 {offsets = [0, 0], sizes = [8, 128], strides = [1, 1]} : vector<8x512xf32> to vector<8x128xf32>
    %cst_89 = arith.constant 5.000000e-01 : f32
    %233 = vector.broadcast %cst_89 : f32 to vector<8x128xf32>
    %234 = arith.mulf %233, %232 : vector<8x128xf32>
    %235 = math.tanh %234 : vector<8x128xf32>
    %cst_90 = arith.constant 5.000000e-01 : f32
    %236 = vector.broadcast %cst_90 : f32 to vector<8x128xf32>
    %237 = arith.mulf %236, %235 : vector<8x128xf32>
    %cst_91 = arith.constant 5.000000e-01 : f32
    %238 = vector.broadcast %cst_91 : f32 to vector<8x128xf32>
    %239 = arith.addf %237, %238 : vector<8x128xf32>
    %240 = vector.extract_strided_slice %231 {offsets = [0, 128], sizes = [8, 128], strides = [1, 1]} : vector<8x512xf32> to vector<8x128xf32>
    %cst_92 = arith.constant 5.000000e-01 : f32
    %241 = vector.broadcast %cst_92 : f32 to vector<8x128xf32>
    %242 = arith.mulf %241, %240 : vector<8x128xf32>
    %243 = math.tanh %242 : vector<8x128xf32>
    %cst_93 = arith.constant 5.000000e-01 : f32
    %244 = vector.broadcast %cst_93 : f32 to vector<8x128xf32>
    %245 = arith.mulf %244, %243 : vector<8x128xf32>
    %cst_94 = arith.constant 5.000000e-01 : f32
    %246 = vector.broadcast %cst_94 : f32 to vector<8x128xf32>
    %247 = arith.addf %245, %246 : vector<8x128xf32>
    %248 = vector.extract_strided_slice %231 {offsets = [0, 256], sizes = [8, 128], strides = [1, 1]} : vector<8x512xf32> to vector<8x128xf32>
    %249 = math.tanh %248 : vector<8x128xf32>
    %250 = vector.extract_strided_slice %231 {offsets = [0, 384], sizes = [8, 128], strides = [1, 1]} : vector<8x512xf32> to vector<8x128xf32>
    %cst_95 = arith.constant 5.000000e-01 : f32
    %251 = vector.broadcast %cst_95 : f32 to vector<8x128xf32>
    %252 = arith.mulf %251, %250 : vector<8x128xf32>
    %253 = math.tanh %252 : vector<8x128xf32>
    %cst_96 = arith.constant 5.000000e-01 : f32
    %254 = vector.broadcast %cst_96 : f32 to vector<8x128xf32>
    %255 = arith.mulf %254, %253 : vector<8x128xf32>
    %cst_97 = arith.constant 5.000000e-01 : f32
    %256 = vector.broadcast %cst_97 : f32 to vector<8x128xf32>
    %257 = arith.addf %255, %256 : vector<8x128xf32>
    %258 = arith.mulf %247, %179 : vector<8x128xf32>
    %259 = arith.mulf %239, %249 : vector<8x128xf32>
    %260 = arith.addf %258, %259 : vector<8x128xf32>
    %261 = math.tanh %260 : vector<8x128xf32>
    %262 = arith.mulf %257, %261 : vector<8x128xf32>
    %c3_i32 = arith.constant 3 : i32
    %263 = arith.truncf %226 : vector<8x128xf32> to vector<8x128xbf16>
    %264 = arith.truncf %262 : vector<8x128xf32> to vector<8x128xbf16>
    %265 = tpu.concatenate %263, %11 in 1 : vector<8x128xbf16>, vector<8x128xbf16> -> vector<8x256xbf16>
    %266 = tpu.concatenate %11, %264 in 1 : vector<8x128xbf16>, vector<8x128xbf16> -> vector<8x256xbf16>
    %267 = tpu.concatenate %265, %266 in 0 : vector<8x256xbf16>, vector<8x256xbf16> -> vector<16x256xbf16>
    %c0_98 = arith.constant 0 : index
    %c0_99 = arith.constant 0 : index
    %268 = vector.load %arg5[%c0_98, %c0_99] : memref<256x512xbf16, #tpu.memory_space<vmem>>, vector<256x512xbf16>
    %cst_100 = arith.constant dense<0.000000e+00> : vector<16x512xf32>
    %269 = tpu.matmul %267, %268, %cst_100 {dimension_numbers = #tpu.dot_dimension_numbers<[1], [0], [0], [1], [0, 0, 1, 1], [], []>} : vector<16x256xbf16>, vector<256x512xbf16>, vector<16x512xf32> -> vector<16x512xf32>
    %270 = vector.extract_strided_slice %269 {offsets = [0, 0], sizes = [8, 512], strides = [1, 1]} : vector<16x512xf32> to vector<8x512xf32>
    %271 = vector.extract_strided_slice %269 {offsets = [8, 0], sizes = [8, 512], strides = [1, 1]} : vector<16x512xf32> to vector<8x512xf32>
    %c8_i32_101 = arith.constant 8 : i32
    %272 = arith.muli %c3_i32, %c8_i32_101 : i32
    %273 = tpu.assume_multiple %272, 8 : i32
    %274 = arith.index_cast %273 : i32 to index
    %c0_102 = arith.constant 0 : index
    %275 = vector.load %arg11[%274, %c0_102] : memref<64x512xf32, #tpu.memory_space<vmem>>, vector<8x512xf32>
    %276 = arith.addf %275, %270 : vector<8x512xf32>
    %277 = vector.extract_strided_slice %276 {offsets = [0, 0], sizes = [8, 128], strides = [1, 1]} : vector<8x512xf32> to vector<8x128xf32>
    %cst_103 = arith.constant 5.000000e-01 : f32
    %278 = vector.broadcast %cst_103 : f32 to vector<8x128xf32>
    %279 = arith.mulf %278, %277 : vector<8x128xf32>
    %280 = math.tanh %279 : vector<8x128xf32>
    %cst_104 = arith.constant 5.000000e-01 : f32
    %281 = vector.broadcast %cst_104 : f32 to vector<8x128xf32>
    %282 = arith.mulf %281, %280 : vector<8x128xf32>
    %cst_105 = arith.constant 5.000000e-01 : f32
    %283 = vector.broadcast %cst_105 : f32 to vector<8x128xf32>
    %284 = arith.addf %282, %283 : vector<8x128xf32>
    %285 = vector.extract_strided_slice %276 {offsets = [0, 128], sizes = [8, 128], strides = [1, 1]} : vector<8x512xf32> to vector<8x128xf32>
    %cst_106 = arith.constant 5.000000e-01 : f32
    %286 = vector.broadcast %cst_106 : f32 to vector<8x128xf32>
    %287 = arith.mulf %286, %285 : vector<8x128xf32>
    %288 = math.tanh %287 : vector<8x128xf32>
    %cst_107 = arith.constant 5.000000e-01 : f32
    %289 = vector.broadcast %cst_107 : f32 to vector<8x128xf32>
    %290 = arith.mulf %289, %288 : vector<8x128xf32>
    %cst_108 = arith.constant 5.000000e-01 : f32
    %291 = vector.broadcast %cst_108 : f32 to vector<8x128xf32>
    %292 = arith.addf %290, %291 : vector<8x128xf32>
    %293 = vector.extract_strided_slice %276 {offsets = [0, 256], sizes = [8, 128], strides = [1, 1]} : vector<8x512xf32> to vector<8x128xf32>
    %294 = math.tanh %293 : vector<8x128xf32>
    %295 = vector.extract_strided_slice %276 {offsets = [0, 384], sizes = [8, 128], strides = [1, 1]} : vector<8x512xf32> to vector<8x128xf32>
    %cst_109 = arith.constant 5.000000e-01 : f32
    %296 = vector.broadcast %cst_109 : f32 to vector<8x128xf32>
    %297 = arith.mulf %296, %295 : vector<8x128xf32>
    %298 = math.tanh %297 : vector<8x128xf32>
    %cst_110 = arith.constant 5.000000e-01 : f32
    %299 = vector.broadcast %cst_110 : f32 to vector<8x128xf32>
    %300 = arith.mulf %299, %298 : vector<8x128xf32>
    %cst_111 = arith.constant 5.000000e-01 : f32
    %301 = vector.broadcast %cst_111 : f32 to vector<8x128xf32>
    %302 = arith.addf %300, %301 : vector<8x128xf32>
    %303 = arith.mulf %292, %224 : vector<8x128xf32>
    %304 = arith.mulf %284, %294 : vector<8x128xf32>
    %305 = arith.addf %303, %304 : vector<8x128xf32>
    %306 = math.tanh %305 : vector<8x128xf32>
    %307 = arith.mulf %302, %306 : vector<8x128xf32>
    %308 = arith.truncf %307 : vector<8x128xf32> to vector<8x128xbf16>
    %c0_112 = arith.constant 0 : index
    %c0_113 = arith.constant 0 : index
    %309 = vector.load %arg6[%c0_112, %c0_113] : memref<128x512xbf16, #tpu.memory_space<vmem>>, vector<128x512xbf16>
    %cst_114 = arith.constant dense<0.000000e+00> : vector<8x512xf32>
    %310 = tpu.matmul %308, %309, %cst_114 {dimension_numbers = #tpu.dot_dimension_numbers<[1], [0], [0], [1], [0, 0, 1, 1], [], []>} : vector<8x128xbf16>, vector<128x512xbf16>, vector<8x512xf32> -> vector<8x512xf32>
    %311 = arith.addf %310, %271 : vector<8x512xf32>
    %312 = arith.addf %311, %10 : vector<8x512xf32>
    %313 = vector.extract_strided_slice %312 {offsets = [0, 0], sizes = [8, 128], strides = [1, 1]} : vector<8x512xf32> to vector<8x128xf32>
    %cst_115 = arith.constant 5.000000e-01 : f32
    %314 = vector.broadcast %cst_115 : f32 to vector<8x128xf32>
    %315 = arith.mulf %314, %313 : vector<8x128xf32>
    %316 = math.tanh %315 : vector<8x128xf32>
    %cst_116 = arith.constant 5.000000e-01 : f32
    %317 = vector.broadcast %cst_116 : f32 to vector<8x128xf32>
    %318 = arith.mulf %317, %316 : vector<8x128xf32>
    %cst_117 = arith.constant 5.000000e-01 : f32
    %319 = vector.broadcast %cst_117 : f32 to vector<8x128xf32>
    %320 = arith.addf %318, %319 : vector<8x128xf32>
    %321 = vector.extract_strided_slice %312 {offsets = [0, 128], sizes = [8, 128], strides = [1, 1]} : vector<8x512xf32> to vector<8x128xf32>
    %cst_118 = arith.constant 5.000000e-01 : f32
    %322 = vector.broadcast %cst_118 : f32 to vector<8x128xf32>
    %323 = arith.mulf %322, %321 : vector<8x128xf32>
    %324 = math.tanh %323 : vector<8x128xf32>
    %cst_119 = arith.constant 5.000000e-01 : f32
    %325 = vector.broadcast %cst_119 : f32 to vector<8x128xf32>
    %326 = arith.mulf %325, %324 : vector<8x128xf32>
    %cst_120 = arith.constant 5.000000e-01 : f32
    %327 = vector.broadcast %cst_120 : f32 to vector<8x128xf32>
    %328 = arith.addf %326, %327 : vector<8x128xf32>
    %329 = vector.extract_strided_slice %312 {offsets = [0, 256], sizes = [8, 128], strides = [1, 1]} : vector<8x512xf32> to vector<8x128xf32>
    %330 = math.tanh %329 : vector<8x128xf32>
    %331 = vector.extract_strided_slice %312 {offsets = [0, 384], sizes = [8, 128], strides = [1, 1]} : vector<8x512xf32> to vector<8x128xf32>
    %cst_121 = arith.constant 5.000000e-01 : f32
    %332 = vector.broadcast %cst_121 : f32 to vector<8x128xf32>
    %333 = arith.mulf %332, %331 : vector<8x128xf32>
    %334 = math.tanh %333 : vector<8x128xf32>
    %cst_122 = arith.constant 5.000000e-01 : f32
    %335 = vector.broadcast %cst_122 : f32 to vector<8x128xf32>
    %336 = arith.mulf %335, %334 : vector<8x128xf32>
    %cst_123 = arith.constant 5.000000e-01 : f32
    %337 = vector.broadcast %cst_123 : f32 to vector<8x128xf32>
    %338 = arith.addf %336, %337 : vector<8x128xf32>
    %339 = arith.mulf %328, %260 : vector<8x128xf32>
    %340 = arith.mulf %320, %330 : vector<8x128xf32>
    %341 = arith.addf %339, %340 : vector<8x128xf32>
    %342 = math.tanh %341 : vector<8x128xf32>
    %343 = arith.mulf %338, %342 : vector<8x128xf32>
    %c4_i32 = arith.constant 4 : i32
    %344 = arith.truncf %307 : vector<8x128xf32> to vector<8x128xbf16>
    %345 = arith.truncf %343 : vector<8x128xf32> to vector<8x128xbf16>
    %346 = tpu.concatenate %344, %11 in 1 : vector<8x128xbf16>, vector<8x128xbf16> -> vector<8x256xbf16>
    %347 = tpu.concatenate %11, %345 in 1 : vector<8x128xbf16>, vector<8x128xbf16> -> vector<8x256xbf16>
    %348 = tpu.concatenate %346, %347 in 0 : vector<8x256xbf16>, vector<8x256xbf16> -> vector<16x256xbf16>
    %c0_124 = arith.constant 0 : index
    %c0_125 = arith.constant 0 : index
    %349 = vector.load %arg5[%c0_124, %c0_125] : memref<256x512xbf16, #tpu.memory_space<vmem>>, vector<256x512xbf16>
    %cst_126 = arith.constant dense<0.000000e+00> : vector<16x512xf32>
    %350 = tpu.matmul %348, %349, %cst_126 {dimension_numbers = #tpu.dot_dimension_numbers<[1], [0], [0], [1], [0, 0, 1, 1], [], []>} : vector<16x256xbf16>, vector<256x512xbf16>, vector<16x512xf32> -> vector<16x512xf32>
    %351 = vector.extract_strided_slice %350 {offsets = [0, 0], sizes = [8, 512], strides = [1, 1]} : vector<16x512xf32> to vector<8x512xf32>
    %352 = vector.extract_strided_slice %350 {offsets = [8, 0], sizes = [8, 512], strides = [1, 1]} : vector<16x512xf32> to vector<8x512xf32>
    %c8_i32_127 = arith.constant 8 : i32
    %353 = arith.muli %c4_i32, %c8_i32_127 : i32
    %354 = tpu.assume_multiple %353, 8 : i32
    %355 = arith.index_cast %354 : i32 to index
    %c0_128 = arith.constant 0 : index
    %356 = vector.load %arg11[%355, %c0_128] : memref<64x512xf32, #tpu.memory_space<vmem>>, vector<8x512xf32>
    %357 = arith.addf %356, %351 : vector<8x512xf32>
    %358 = vector.extract_strided_slice %357 {offsets = [0, 0], sizes = [8, 128], strides = [1, 1]} : vector<8x512xf32> to vector<8x128xf32>
    %cst_129 = arith.constant 5.000000e-01 : f32
    %359 = vector.broadcast %cst_129 : f32 to vector<8x128xf32>
    %360 = arith.mulf %359, %358 : vector<8x128xf32>
    %361 = math.tanh %360 : vector<8x128xf32>
    %cst_130 = arith.constant 5.000000e-01 : f32
    %362 = vector.broadcast %cst_130 : f32 to vector<8x128xf32>
    %363 = arith.mulf %362, %361 : vector<8x128xf32>
    %cst_131 = arith.constant 5.000000e-01 : f32
    %364 = vector.broadcast %cst_131 : f32 to vector<8x128xf32>
    %365 = arith.addf %363, %364 : vector<8x128xf32>
    %366 = vector.extract_strided_slice %357 {offsets = [0, 128], sizes = [8, 128], strides = [1, 1]} : vector<8x512xf32> to vector<8x128xf32>
    %cst_132 = arith.constant 5.000000e-01 : f32
    %367 = vector.broadcast %cst_132 : f32 to vector<8x128xf32>
    %368 = arith.mulf %367, %366 : vector<8x128xf32>
    %369 = math.tanh %368 : vector<8x128xf32>
    %cst_133 = arith.constant 5.000000e-01 : f32
    %370 = vector.broadcast %cst_133 : f32 to vector<8x128xf32>
    %371 = arith.mulf %370, %369 : vector<8x128xf32>
    %cst_134 = arith.constant 5.000000e-01 : f32
    %372 = vector.broadcast %cst_134 : f32 to vector<8x128xf32>
    %373 = arith.addf %371, %372 : vector<8x128xf32>
    %374 = vector.extract_strided_slice %357 {offsets = [0, 256], sizes = [8, 128], strides = [1, 1]} : vector<8x512xf32> to vector<8x128xf32>
    %375 = math.tanh %374 : vector<8x128xf32>
    %376 = vector.extract_strided_slice %357 {offsets = [0, 384], sizes = [8, 128], strides = [1, 1]} : vector<8x512xf32> to vector<8x128xf32>
    %cst_135 = arith.constant 5.000000e-01 : f32
    %377 = vector.broadcast %cst_135 : f32 to vector<8x128xf32>
    %378 = arith.mulf %377, %376 : vector<8x128xf32>
    %379 = math.tanh %378 : vector<8x128xf32>
    %cst_136 = arith.constant 5.000000e-01 : f32
    %380 = vector.broadcast %cst_136 : f32 to vector<8x128xf32>
    %381 = arith.mulf %380, %379 : vector<8x128xf32>
    %cst_137 = arith.constant 5.000000e-01 : f32
    %382 = vector.broadcast %cst_137 : f32 to vector<8x128xf32>
    %383 = arith.addf %381, %382 : vector<8x128xf32>
    %384 = arith.mulf %373, %305 : vector<8x128xf32>
    %385 = arith.mulf %365, %375 : vector<8x128xf32>
    %386 = arith.addf %384, %385 : vector<8x128xf32>
    %387 = math.tanh %386 : vector<8x128xf32>
    %388 = arith.mulf %383, %387 : vector<8x128xf32>
    %389 = arith.truncf %388 : vector<8x128xf32> to vector<8x128xbf16>
    %c0_138 = arith.constant 0 : index
    %c0_139 = arith.constant 0 : index
    %390 = vector.load %arg6[%c0_138, %c0_139] : memref<128x512xbf16, #tpu.memory_space<vmem>>, vector<128x512xbf16>
    %cst_140 = arith.constant dense<0.000000e+00> : vector<8x512xf32>
    %391 = tpu.matmul %389, %390, %cst_140 {dimension_numbers = #tpu.dot_dimension_numbers<[1], [0], [0], [1], [0, 0, 1, 1], [], []>} : vector<8x128xbf16>, vector<128x512xbf16>, vector<8x512xf32> -> vector<8x512xf32>
    %392 = arith.addf %391, %352 : vector<8x512xf32>
    %393 = arith.addf %392, %10 : vector<8x512xf32>
    %394 = vector.extract_strided_slice %393 {offsets = [0, 0], sizes = [8, 128], strides = [1, 1]} : vector<8x512xf32> to vector<8x128xf32>
    %cst_141 = arith.constant 5.000000e-01 : f32
    %395 = vector.broadcast %cst_141 : f32 to vector<8x128xf32>
    %396 = arith.mulf %395, %394 : vector<8x128xf32>
    %397 = math.tanh %396 : vector<8x128xf32>
    %cst_142 = arith.constant 5.000000e-01 : f32
    %398 = vector.broadcast %cst_142 : f32 to vector<8x128xf32>
    %399 = arith.mulf %398, %397 : vector<8x128xf32>
    %cst_143 = arith.constant 5.000000e-01 : f32
    %400 = vector.broadcast %cst_143 : f32 to vector<8x128xf32>
    %401 = arith.addf %399, %400 : vector<8x128xf32>
    %402 = vector.extract_strided_slice %393 {offsets = [0, 128], sizes = [8, 128], strides = [1, 1]} : vector<8x512xf32> to vector<8x128xf32>
    %cst_144 = arith.constant 5.000000e-01 : f32
    %403 = vector.broadcast %cst_144 : f32 to vector<8x128xf32>
    %404 = arith.mulf %403, %402 : vector<8x128xf32>
    %405 = math.tanh %404 : vector<8x128xf32>
    %cst_145 = arith.constant 5.000000e-01 : f32
    %406 = vector.broadcast %cst_145 : f32 to vector<8x128xf32>
    %407 = arith.mulf %406, %405 : vector<8x128xf32>
    %cst_146 = arith.constant 5.000000e-01 : f32
    %408 = vector.broadcast %cst_146 : f32 to vector<8x128xf32>
    %409 = arith.addf %407, %408 : vector<8x128xf32>
    %410 = vector.extract_strided_slice %393 {offsets = [0, 256], sizes = [8, 128], strides = [1, 1]} : vector<8x512xf32> to vector<8x128xf32>
    %411 = math.tanh %410 : vector<8x128xf32>
    %412 = vector.extract_strided_slice %393 {offsets = [0, 384], sizes = [8, 128], strides = [1, 1]} : vector<8x512xf32> to vector<8x128xf32>
    %cst_147 = arith.constant 5.000000e-01 : f32
    %413 = vector.broadcast %cst_147 : f32 to vector<8x128xf32>
    %414 = arith.mulf %413, %412 : vector<8x128xf32>
    %415 = math.tanh %414 : vector<8x128xf32>
    %cst_148 = arith.constant 5.000000e-01 : f32
    %416 = vector.broadcast %cst_148 : f32 to vector<8x128xf32>
    %417 = arith.mulf %416, %415 : vector<8x128xf32>
    %cst_149 = arith.constant 5.000000e-01 : f32
    %418 = vector.broadcast %cst_149 : f32 to vector<8x128xf32>
    %419 = arith.addf %417, %418 : vector<8x128xf32>
    %420 = arith.mulf %409, %341 : vector<8x128xf32>
    %421 = arith.mulf %401, %411 : vector<8x128xf32>
    %422 = arith.addf %420, %421 : vector<8x128xf32>
    %423 = math.tanh %422 : vector<8x128xf32>
    %424 = arith.mulf %419, %423 : vector<8x128xf32>
    %c5_i32 = arith.constant 5 : i32
    %425 = arith.truncf %388 : vector<8x128xf32> to vector<8x128xbf16>
    %426 = arith.truncf %424 : vector<8x128xf32> to vector<8x128xbf16>
    %427 = tpu.concatenate %425, %11 in 1 : vector<8x128xbf16>, vector<8x128xbf16> -> vector<8x256xbf16>
    %428 = tpu.concatenate %11, %426 in 1 : vector<8x128xbf16>, vector<8x128xbf16> -> vector<8x256xbf16>
    %429 = tpu.concatenate %427, %428 in 0 : vector<8x256xbf16>, vector<8x256xbf16> -> vector<16x256xbf16>
    %c0_150 = arith.constant 0 : index
    %c0_151 = arith.constant 0 : index
    %430 = vector.load %arg5[%c0_150, %c0_151] : memref<256x512xbf16, #tpu.memory_space<vmem>>, vector<256x512xbf16>
    %cst_152 = arith.constant dense<0.000000e+00> : vector<16x512xf32>
    %431 = tpu.matmul %429, %430, %cst_152 {dimension_numbers = #tpu.dot_dimension_numbers<[1], [0], [0], [1], [0, 0, 1, 1], [], []>} : vector<16x256xbf16>, vector<256x512xbf16>, vector<16x512xf32> -> vector<16x512xf32>
    %432 = vector.extract_strided_slice %431 {offsets = [0, 0], sizes = [8, 512], strides = [1, 1]} : vector<16x512xf32> to vector<8x512xf32>
    %433 = vector.extract_strided_slice %431 {offsets = [8, 0], sizes = [8, 512], strides = [1, 1]} : vector<16x512xf32> to vector<8x512xf32>
    %c8_i32_153 = arith.constant 8 : i32
    %434 = arith.muli %c5_i32, %c8_i32_153 : i32
    %435 = tpu.assume_multiple %434, 8 : i32
    %436 = arith.index_cast %435 : i32 to index
    %c0_154 = arith.constant 0 : index
    %437 = vector.load %arg11[%436, %c0_154] : memref<64x512xf32, #tpu.memory_space<vmem>>, vector<8x512xf32>
    %438 = arith.addf %437, %432 : vector<8x512xf32>
    %439 = vector.extract_strided_slice %438 {offsets = [0, 0], sizes = [8, 128], strides = [1, 1]} : vector<8x512xf32> to vector<8x128xf32>
    %cst_155 = arith.constant 5.000000e-01 : f32
    %440 = vector.broadcast %cst_155 : f32 to vector<8x128xf32>
    %441 = arith.mulf %440, %439 : vector<8x128xf32>
    %442 = math.tanh %441 : vector<8x128xf32>
    %cst_156 = arith.constant 5.000000e-01 : f32
    %443 = vector.broadcast %cst_156 : f32 to vector<8x128xf32>
    %444 = arith.mulf %443, %442 : vector<8x128xf32>
    %cst_157 = arith.constant 5.000000e-01 : f32
    %445 = vector.broadcast %cst_157 : f32 to vector<8x128xf32>
    %446 = arith.addf %444, %445 : vector<8x128xf32>
    %447 = vector.extract_strided_slice %438 {offsets = [0, 128], sizes = [8, 128], strides = [1, 1]} : vector<8x512xf32> to vector<8x128xf32>
    %cst_158 = arith.constant 5.000000e-01 : f32
    %448 = vector.broadcast %cst_158 : f32 to vector<8x128xf32>
    %449 = arith.mulf %448, %447 : vector<8x128xf32>
    %450 = math.tanh %449 : vector<8x128xf32>
    %cst_159 = arith.constant 5.000000e-01 : f32
    %451 = vector.broadcast %cst_159 : f32 to vector<8x128xf32>
    %452 = arith.mulf %451, %450 : vector<8x128xf32>
    %cst_160 = arith.constant 5.000000e-01 : f32
    %453 = vector.broadcast %cst_160 : f32 to vector<8x128xf32>
    %454 = arith.addf %452, %453 : vector<8x128xf32>
    %455 = vector.extract_strided_slice %438 {offsets = [0, 256], sizes = [8, 128], strides = [1, 1]} : vector<8x512xf32> to vector<8x128xf32>
    %456 = math.tanh %455 : vector<8x128xf32>
    %457 = vector.extract_strided_slice %438 {offsets = [0, 384], sizes = [8, 128], strides = [1, 1]} : vector<8x512xf32> to vector<8x128xf32>
    %cst_161 = arith.constant 5.000000e-01 : f32
    %458 = vector.broadcast %cst_161 : f32 to vector<8x128xf32>
    %459 = arith.mulf %458, %457 : vector<8x128xf32>
    %460 = math.tanh %459 : vector<8x128xf32>
    %cst_162 = arith.constant 5.000000e-01 : f32
    %461 = vector.broadcast %cst_162 : f32 to vector<8x128xf32>
    %462 = arith.mulf %461, %460 : vector<8x128xf32>
    %cst_163 = arith.constant 5.000000e-01 : f32
    %463 = vector.broadcast %cst_163 : f32 to vector<8x128xf32>
    %464 = arith.addf %462, %463 : vector<8x128xf32>
    %465 = arith.mulf %454, %386 : vector<8x128xf32>
    %466 = arith.mulf %446, %456 : vector<8x128xf32>
    %467 = arith.addf %465, %466 : vector<8x128xf32>
    %468 = math.tanh %467 : vector<8x128xf32>
    %469 = arith.mulf %464, %468 : vector<8x128xf32>
    %470 = arith.truncf %469 : vector<8x128xf32> to vector<8x128xbf16>
    %c0_164 = arith.constant 0 : index
    %c0_165 = arith.constant 0 : index
    %471 = vector.load %arg6[%c0_164, %c0_165] : memref<128x512xbf16, #tpu.memory_space<vmem>>, vector<128x512xbf16>
    %cst_166 = arith.constant dense<0.000000e+00> : vector<8x512xf32>
    %472 = tpu.matmul %470, %471, %cst_166 {dimension_numbers = #tpu.dot_dimension_numbers<[1], [0], [0], [1], [0, 0, 1, 1], [], []>} : vector<8x128xbf16>, vector<128x512xbf16>, vector<8x512xf32> -> vector<8x512xf32>
    %473 = arith.addf %472, %433 : vector<8x512xf32>
    %474 = arith.addf %473, %10 : vector<8x512xf32>
    %475 = vector.extract_strided_slice %474 {offsets = [0, 0], sizes = [8, 128], strides = [1, 1]} : vector<8x512xf32> to vector<8x128xf32>
    %cst_167 = arith.constant 5.000000e-01 : f32
    %476 = vector.broadcast %cst_167 : f32 to vector<8x128xf32>
    %477 = arith.mulf %476, %475 : vector<8x128xf32>
    %478 = math.tanh %477 : vector<8x128xf32>
    %cst_168 = arith.constant 5.000000e-01 : f32
    %479 = vector.broadcast %cst_168 : f32 to vector<8x128xf32>
    %480 = arith.mulf %479, %478 : vector<8x128xf32>
    %cst_169 = arith.constant 5.000000e-01 : f32
    %481 = vector.broadcast %cst_169 : f32 to vector<8x128xf32>
    %482 = arith.addf %480, %481 : vector<8x128xf32>
    %483 = vector.extract_strided_slice %474 {offsets = [0, 128], sizes = [8, 128], strides = [1, 1]} : vector<8x512xf32> to vector<8x128xf32>
    %cst_170 = arith.constant 5.000000e-01 : f32
    %484 = vector.broadcast %cst_170 : f32 to vector<8x128xf32>
    %485 = arith.mulf %484, %483 : vector<8x128xf32>
    %486 = math.tanh %485 : vector<8x128xf32>
    %cst_171 = arith.constant 5.000000e-01 : f32
    %487 = vector.broadcast %cst_171 : f32 to vector<8x128xf32>
    %488 = arith.mulf %487, %486 : vector<8x128xf32>
    %cst_172 = arith.constant 5.000000e-01 : f32
    %489 = vector.broadcast %cst_172 : f32 to vector<8x128xf32>
    %490 = arith.addf %488, %489 : vector<8x128xf32>
    %491 = vector.extract_strided_slice %474 {offsets = [0, 256], sizes = [8, 128], strides = [1, 1]} : vector<8x512xf32> to vector<8x128xf32>
    %492 = math.tanh %491 : vector<8x128xf32>
    %493 = vector.extract_strided_slice %474 {offsets = [0, 384], sizes = [8, 128], strides = [1, 1]} : vector<8x512xf32> to vector<8x128xf32>
    %cst_173 = arith.constant 5.000000e-01 : f32
    %494 = vector.broadcast %cst_173 : f32 to vector<8x128xf32>
    %495 = arith.mulf %494, %493 : vector<8x128xf32>
    %496 = math.tanh %495 : vector<8x128xf32>
    %cst_174 = arith.constant 5.000000e-01 : f32
    %497 = vector.broadcast %cst_174 : f32 to vector<8x128xf32>
    %498 = arith.mulf %497, %496 : vector<8x128xf32>
    %cst_175 = arith.constant 5.000000e-01 : f32
    %499 = vector.broadcast %cst_175 : f32 to vector<8x128xf32>
    %500 = arith.addf %498, %499 : vector<8x128xf32>
    %501 = arith.mulf %490, %422 : vector<8x128xf32>
    %502 = arith.mulf %482, %492 : vector<8x128xf32>
    %503 = arith.addf %501, %502 : vector<8x128xf32>
    %504 = math.tanh %503 : vector<8x128xf32>
    %505 = arith.mulf %500, %504 : vector<8x128xf32>
    %c6_i32 = arith.constant 6 : i32
    %506 = arith.truncf %469 : vector<8x128xf32> to vector<8x128xbf16>
    %507 = arith.truncf %505 : vector<8x128xf32> to vector<8x128xbf16>
    %508 = tpu.concatenate %506, %11 in 1 : vector<8x128xbf16>, vector<8x128xbf16> -> vector<8x256xbf16>
    %509 = tpu.concatenate %11, %507 in 1 : vector<8x128xbf16>, vector<8x128xbf16> -> vector<8x256xbf16>
    %510 = tpu.concatenate %508, %509 in 0 : vector<8x256xbf16>, vector<8x256xbf16> -> vector<16x256xbf16>
    %c0_176 = arith.constant 0 : index
    %c0_177 = arith.constant 0 : index
    %511 = vector.load %arg5[%c0_176, %c0_177] : memref<256x512xbf16, #tpu.memory_space<vmem>>, vector<256x512xbf16>
    %cst_178 = arith.constant dense<0.000000e+00> : vector<16x512xf32>
    %512 = tpu.matmul %510, %511, %cst_178 {dimension_numbers = #tpu.dot_dimension_numbers<[1], [0], [0], [1], [0, 0, 1, 1], [], []>} : vector<16x256xbf16>, vector<256x512xbf16>, vector<16x512xf32> -> vector<16x512xf32>
    %513 = vector.extract_strided_slice %512 {offsets = [0, 0], sizes = [8, 512], strides = [1, 1]} : vector<16x512xf32> to vector<8x512xf32>
    %514 = vector.extract_strided_slice %512 {offsets = [8, 0], sizes = [8, 512], strides = [1, 1]} : vector<16x512xf32> to vector<8x512xf32>
    %c8_i32_179 = arith.constant 8 : i32
    %515 = arith.muli %c6_i32, %c8_i32_179 : i32
    %516 = tpu.assume_multiple %515, 8 : i32
    %517 = arith.index_cast %516 : i32 to index
    %c0_180 = arith.constant 0 : index
    %518 = vector.load %arg11[%517, %c0_180] : memref<64x512xf32, #tpu.memory_space<vmem>>, vector<8x512xf32>
    %519 = arith.addf %518, %513 : vector<8x512xf32>
    %520 = vector.extract_strided_slice %519 {offsets = [0, 0], sizes = [8, 128], strides = [1, 1]} : vector<8x512xf32> to vector<8x128xf32>
    %cst_181 = arith.constant 5.000000e-01 : f32
    %521 = vector.broadcast %cst_181 : f32 to vector<8x128xf32>
    %522 = arith.mulf %521, %520 : vector<8x128xf32>
    %523 = math.tanh %522 : vector<8x128xf32>
    %cst_182 = arith.constant 5.000000e-01 : f32
    %524 = vector.broadcast %cst_182 : f32 to vector<8x128xf32>
    %525 = arith.mulf %524, %523 : vector<8x128xf32>
    %cst_183 = arith.constant 5.000000e-01 : f32
    %526 = vector.broadcast %cst_183 : f32 to vector<8x128xf32>
    %527 = arith.addf %525, %526 : vector<8x128xf32>
    %528 = vector.extract_strided_slice %519 {offsets = [0, 128], sizes = [8, 128], strides = [1, 1]} : vector<8x512xf32> to vector<8x128xf32>
    %cst_184 = arith.constant 5.000000e-01 : f32
    %529 = vector.broadcast %cst_184 : f32 to vector<8x128xf32>
    %530 = arith.mulf %529, %528 : vector<8x128xf32>
    %531 = math.tanh %530 : vector<8x128xf32>
    %cst_185 = arith.constant 5.000000e-01 : f32
    %532 = vector.broadcast %cst_185 : f32 to vector<8x128xf32>
    %533 = arith.mulf %532, %531 : vector<8x128xf32>
    %cst_186 = arith.constant 5.000000e-01 : f32
    %534 = vector.broadcast %cst_186 : f32 to vector<8x128xf32>
    %535 = arith.addf %533, %534 : vector<8x128xf32>
    %536 = vector.extract_strided_slice %519 {offsets = [0, 256], sizes = [8, 128], strides = [1, 1]} : vector<8x512xf32> to vector<8x128xf32>
    %537 = math.tanh %536 : vector<8x128xf32>
    %538 = vector.extract_strided_slice %519 {offsets = [0, 384], sizes = [8, 128], strides = [1, 1]} : vector<8x512xf32> to vector<8x128xf32>
    %cst_187 = arith.constant 5.000000e-01 : f32
    %539 = vector.broadcast %cst_187 : f32 to vector<8x128xf32>
    %540 = arith.mulf %539, %538 : vector<8x128xf32>
    %541 = math.tanh %540 : vector<8x128xf32>
    %cst_188 = arith.constant 5.000000e-01 : f32
    %542 = vector.broadcast %cst_188 : f32 to vector<8x128xf32>
    %543 = arith.mulf %542, %541 : vector<8x128xf32>
    %cst_189 = arith.constant 5.000000e-01 : f32
    %544 = vector.broadcast %cst_189 : f32 to vector<8x128xf32>
    %545 = arith.addf %543, %544 : vector<8x128xf32>
    %546 = arith.mulf %535, %467 : vector<8x128xf32>
    %547 = arith.mulf %527, %537 : vector<8x128xf32>
    %548 = arith.addf %546, %547 : vector<8x128xf32>
    %549 = math.tanh %548 : vector<8x128xf32>
    %550 = arith.mulf %545, %549 : vector<8x128xf32>
    %551 = arith.truncf %550 : vector<8x128xf32> to vector<8x128xbf16>
    %c0_190 = arith.constant 0 : index
    %c0_191 = arith.constant 0 : index
    %552 = vector.load %arg6[%c0_190, %c0_191] : memref<128x512xbf16, #tpu.memory_space<vmem>>, vector<128x512xbf16>
    %cst_192 = arith.constant dense<0.000000e+00> : vector<8x512xf32>
    %553 = tpu.matmul %551, %552, %cst_192 {dimension_numbers = #tpu.dot_dimension_numbers<[1], [0], [0], [1], [0, 0, 1, 1], [], []>} : vector<8x128xbf16>, vector<128x512xbf16>, vector<8x512xf32> -> vector<8x512xf32>
    %554 = arith.addf %553, %514 : vector<8x512xf32>
    %555 = arith.addf %554, %10 : vector<8x512xf32>
    %556 = vector.extract_strided_slice %555 {offsets = [0, 0], sizes = [8, 128], strides = [1, 1]} : vector<8x512xf32> to vector<8x128xf32>
    %cst_193 = arith.constant 5.000000e-01 : f32
    %557 = vector.broadcast %cst_193 : f32 to vector<8x128xf32>
    %558 = arith.mulf %557, %556 : vector<8x128xf32>
    %559 = math.tanh %558 : vector<8x128xf32>
    %cst_194 = arith.constant 5.000000e-01 : f32
    %560 = vector.broadcast %cst_194 : f32 to vector<8x128xf32>
    %561 = arith.mulf %560, %559 : vector<8x128xf32>
    %cst_195 = arith.constant 5.000000e-01 : f32
    %562 = vector.broadcast %cst_195 : f32 to vector<8x128xf32>
    %563 = arith.addf %561, %562 : vector<8x128xf32>
    %564 = vector.extract_strided_slice %555 {offsets = [0, 128], sizes = [8, 128], strides = [1, 1]} : vector<8x512xf32> to vector<8x128xf32>
    %cst_196 = arith.constant 5.000000e-01 : f32
    %565 = vector.broadcast %cst_196 : f32 to vector<8x128xf32>
    %566 = arith.mulf %565, %564 : vector<8x128xf32>
    %567 = math.tanh %566 : vector<8x128xf32>
    %cst_197 = arith.constant 5.000000e-01 : f32
    %568 = vector.broadcast %cst_197 : f32 to vector<8x128xf32>
    %569 = arith.mulf %568, %567 : vector<8x128xf32>
    %cst_198 = arith.constant 5.000000e-01 : f32
    %570 = vector.broadcast %cst_198 : f32 to vector<8x128xf32>
    %571 = arith.addf %569, %570 : vector<8x128xf32>
    %572 = vector.extract_strided_slice %555 {offsets = [0, 256], sizes = [8, 128], strides = [1, 1]} : vector<8x512xf32> to vector<8x128xf32>
    %573 = math.tanh %572 : vector<8x128xf32>
    %574 = vector.extract_strided_slice %555 {offsets = [0, 384], sizes = [8, 128], strides = [1, 1]} : vector<8x512xf32> to vector<8x128xf32>
    %cst_199 = arith.constant 5.000000e-01 : f32
    %575 = vector.broadcast %cst_199 : f32 to vector<8x128xf32>
    %576 = arith.mulf %575, %574 : vector<8x128xf32>
    %577 = math.tanh %576 : vector<8x128xf32>
    %cst_200 = arith.constant 5.000000e-01 : f32
    %578 = vector.broadcast %cst_200 : f32 to vector<8x128xf32>
    %579 = arith.mulf %578, %577 : vector<8x128xf32>
    %cst_201 = arith.constant 5.000000e-01 : f32
    %580 = vector.broadcast %cst_201 : f32 to vector<8x128xf32>
    %581 = arith.addf %579, %580 : vector<8x128xf32>
    %582 = arith.mulf %571, %503 : vector<8x128xf32>
    %583 = arith.mulf %563, %573 : vector<8x128xf32>
    %584 = arith.addf %582, %583 : vector<8x128xf32>
    %585 = math.tanh %584 : vector<8x128xf32>
    %586 = arith.mulf %581, %585 : vector<8x128xf32>
    %c7_i32 = arith.constant 7 : i32
    %587 = arith.truncf %550 : vector<8x128xf32> to vector<8x128xbf16>
    %588 = arith.truncf %586 : vector<8x128xf32> to vector<8x128xbf16>
    %589 = tpu.concatenate %587, %11 in 1 : vector<8x128xbf16>, vector<8x128xbf16> -> vector<8x256xbf16>
    %590 = tpu.concatenate %11, %588 in 1 : vector<8x128xbf16>, vector<8x128xbf16> -> vector<8x256xbf16>
    %591 = tpu.concatenate %589, %590 in 0 : vector<8x256xbf16>, vector<8x256xbf16> -> vector<16x256xbf16>
    %c0_202 = arith.constant 0 : index
    %c0_203 = arith.constant 0 : index
    %592 = vector.load %arg5[%c0_202, %c0_203] : memref<256x512xbf16, #tpu.memory_space<vmem>>, vector<256x512xbf16>
    %cst_204 = arith.constant dense<0.000000e+00> : vector<16x512xf32>
    %593 = tpu.matmul %591, %592, %cst_204 {dimension_numbers = #tpu.dot_dimension_numbers<[1], [0], [0], [1], [0, 0, 1, 1], [], []>} : vector<16x256xbf16>, vector<256x512xbf16>, vector<16x512xf32> -> vector<16x512xf32>
    %594 = vector.extract_strided_slice %593 {offsets = [0, 0], sizes = [8, 512], strides = [1, 1]} : vector<16x512xf32> to vector<8x512xf32>
    %595 = vector.extract_strided_slice %593 {offsets = [8, 0], sizes = [8, 512], strides = [1, 1]} : vector<16x512xf32> to vector<8x512xf32>
    %c8_i32_205 = arith.constant 8 : i32
    %596 = arith.muli %c7_i32, %c8_i32_205 : i32
    %597 = tpu.assume_multiple %596, 8 : i32
    %598 = arith.index_cast %597 : i32 to index
    %c0_206 = arith.constant 0 : index
    %599 = vector.load %arg11[%598, %c0_206] : memref<64x512xf32, #tpu.memory_space<vmem>>, vector<8x512xf32>
    %600 = arith.addf %599, %594 : vector<8x512xf32>
    %601 = vector.extract_strided_slice %600 {offsets = [0, 0], sizes = [8, 128], strides = [1, 1]} : vector<8x512xf32> to vector<8x128xf32>
    %cst_207 = arith.constant 5.000000e-01 : f32
    %602 = vector.broadcast %cst_207 : f32 to vector<8x128xf32>
    %603 = arith.mulf %602, %601 : vector<8x128xf32>
    %604 = math.tanh %603 : vector<8x128xf32>
    %cst_208 = arith.constant 5.000000e-01 : f32
    %605 = vector.broadcast %cst_208 : f32 to vector<8x128xf32>
    %606 = arith.mulf %605, %604 : vector<8x128xf32>
    %cst_209 = arith.constant 5.000000e-01 : f32
    %607 = vector.broadcast %cst_209 : f32 to vector<8x128xf32>
    %608 = arith.addf %606, %607 : vector<8x128xf32>
    %609 = vector.extract_strided_slice %600 {offsets = [0, 128], sizes = [8, 128], strides = [1, 1]} : vector<8x512xf32> to vector<8x128xf32>
    %cst_210 = arith.constant 5.000000e-01 : f32
    %610 = vector.broadcast %cst_210 : f32 to vector<8x128xf32>
    %611 = arith.mulf %610, %609 : vector<8x128xf32>
    %612 = math.tanh %611 : vector<8x128xf32>
    %cst_211 = arith.constant 5.000000e-01 : f32
    %613 = vector.broadcast %cst_211 : f32 to vector<8x128xf32>
    %614 = arith.mulf %613, %612 : vector<8x128xf32>
    %cst_212 = arith.constant 5.000000e-01 : f32
    %615 = vector.broadcast %cst_212 : f32 to vector<8x128xf32>
    %616 = arith.addf %614, %615 : vector<8x128xf32>
    %617 = vector.extract_strided_slice %600 {offsets = [0, 256], sizes = [8, 128], strides = [1, 1]} : vector<8x512xf32> to vector<8x128xf32>
    %618 = math.tanh %617 : vector<8x128xf32>
    %619 = vector.extract_strided_slice %600 {offsets = [0, 384], sizes = [8, 128], strides = [1, 1]} : vector<8x512xf32> to vector<8x128xf32>
    %cst_213 = arith.constant 5.000000e-01 : f32
    %620 = vector.broadcast %cst_213 : f32 to vector<8x128xf32>
    %621 = arith.mulf %620, %619 : vector<8x128xf32>
    %622 = math.tanh %621 : vector<8x128xf32>
    %cst_214 = arith.constant 5.000000e-01 : f32
    %623 = vector.broadcast %cst_214 : f32 to vector<8x128xf32>
    %624 = arith.mulf %623, %622 : vector<8x128xf32>
    %cst_215 = arith.constant 5.000000e-01 : f32
    %625 = vector.broadcast %cst_215 : f32 to vector<8x128xf32>
    %626 = arith.addf %624, %625 : vector<8x128xf32>
    %627 = arith.mulf %616, %548 : vector<8x128xf32>
    %628 = arith.mulf %608, %618 : vector<8x128xf32>
    %629 = arith.addf %627, %628 : vector<8x128xf32>
    %630 = math.tanh %629 : vector<8x128xf32>
    %631 = arith.mulf %626, %630 : vector<8x128xf32>
    %632 = arith.truncf %631 : vector<8x128xf32> to vector<8x128xbf16>
    %c0_216 = arith.constant 0 : index
    %c0_217 = arith.constant 0 : index
    %633 = vector.load %arg6[%c0_216, %c0_217] : memref<128x512xbf16, #tpu.memory_space<vmem>>, vector<128x512xbf16>
    %cst_218 = arith.constant dense<0.000000e+00> : vector<8x512xf32>
    %634 = tpu.matmul %632, %633, %cst_218 {dimension_numbers = #tpu.dot_dimension_numbers<[1], [0], [0], [1], [0, 0, 1, 1], [], []>} : vector<8x128xbf16>, vector<128x512xbf16>, vector<8x512xf32> -> vector<8x512xf32>
    %635 = arith.addf %634, %595 : vector<8x512xf32>
    %636 = arith.addf %635, %10 : vector<8x512xf32>
    %637 = vector.extract_strided_slice %636 {offsets = [0, 0], sizes = [8, 128], strides = [1, 1]} : vector<8x512xf32> to vector<8x128xf32>
    %cst_219 = arith.constant 5.000000e-01 : f32
    %638 = vector.broadcast %cst_219 : f32 to vector<8x128xf32>
    %639 = arith.mulf %638, %637 : vector<8x128xf32>
    %640 = math.tanh %639 : vector<8x128xf32>
    %cst_220 = arith.constant 5.000000e-01 : f32
    %641 = vector.broadcast %cst_220 : f32 to vector<8x128xf32>
    %642 = arith.mulf %641, %640 : vector<8x128xf32>
    %cst_221 = arith.constant 5.000000e-01 : f32
    %643 = vector.broadcast %cst_221 : f32 to vector<8x128xf32>
    %644 = arith.addf %642, %643 : vector<8x128xf32>
    %645 = vector.extract_strided_slice %636 {offsets = [0, 128], sizes = [8, 128], strides = [1, 1]} : vector<8x512xf32> to vector<8x128xf32>
    %cst_222 = arith.constant 5.000000e-01 : f32
    %646 = vector.broadcast %cst_222 : f32 to vector<8x128xf32>
    %647 = arith.mulf %646, %645 : vector<8x128xf32>
    %648 = math.tanh %647 : vector<8x128xf32>
    %cst_223 = arith.constant 5.000000e-01 : f32
    %649 = vector.broadcast %cst_223 : f32 to vector<8x128xf32>
    %650 = arith.mulf %649, %648 : vector<8x128xf32>
    %cst_224 = arith.constant 5.000000e-01 : f32
    %651 = vector.broadcast %cst_224 : f32 to vector<8x128xf32>
    %652 = arith.addf %650, %651 : vector<8x128xf32>
    %653 = vector.extract_strided_slice %636 {offsets = [0, 256], sizes = [8, 128], strides = [1, 1]} : vector<8x512xf32> to vector<8x128xf32>
    %654 = math.tanh %653 : vector<8x128xf32>
    %655 = vector.extract_strided_slice %636 {offsets = [0, 384], sizes = [8, 128], strides = [1, 1]} : vector<8x512xf32> to vector<8x128xf32>
    %cst_225 = arith.constant 5.000000e-01 : f32
    %656 = vector.broadcast %cst_225 : f32 to vector<8x128xf32>
    %657 = arith.mulf %656, %655 : vector<8x128xf32>
    %658 = math.tanh %657 : vector<8x128xf32>
    %cst_226 = arith.constant 5.000000e-01 : f32
    %659 = vector.broadcast %cst_226 : f32 to vector<8x128xf32>
    %660 = arith.mulf %659, %658 : vector<8x128xf32>
    %cst_227 = arith.constant 5.000000e-01 : f32
    %661 = vector.broadcast %cst_227 : f32 to vector<8x128xf32>
    %662 = arith.addf %660, %661 : vector<8x128xf32>
    %663 = arith.mulf %652, %584 : vector<8x128xf32>
    %664 = arith.mulf %644, %654 : vector<8x128xf32>
    %665 = arith.addf %663, %664 : vector<8x128xf32>
    %666 = math.tanh %665 : vector<8x128xf32>
    %667 = arith.mulf %662, %666 : vector<8x128xf32>
    %c8_i32_228 = arith.constant 8 : i32
    %668 = arith.truncf %667 : vector<8x128xf32> to vector<8x128xbf16>
    %c0_229 = arith.constant 0 : index
    %c0_230 = arith.constant 0 : index
    %669 = vector.load %arg8[%c0_229, %c0_230] : memref<128x128xbf16, #tpu.memory_space<vmem>>, vector<128x128xbf16>
    %cst_231 = arith.constant dense<0.000000e+00> : vector<8x128xf32>
    %670 = tpu.matmul %668, %669, %cst_231 {dimension_numbers = #tpu.dot_dimension_numbers<[1], [0], [0], [1], [0, 0, 1, 1], [], []>} : vector<8x128xbf16>, vector<128x128xbf16>, vector<8x128xf32> -> vector<8x128xf32>
    %c0_232 = arith.constant 0 : index
    %c0_233 = arith.constant 0 : index
    %671 = vector.load %arg9[%c0_232, %c0_233] : memref<1x128xf32, #tpu.memory_space<vmem>>, vector<1x128xf32>
    %672 = vector.broadcast %671 : vector<1x128xf32> to vector<8x128xf32>
    %673 = arith.addf %670, %672 : vector<8x128xf32>
    %cst_234 = arith.constant dense<0xFF800000> : vector<8xf32>
    %674 = vector.multi_reduction <maximumf>, %673, %cst_234 [1] : vector<8x128xf32> to vector<8xf32>
    %675 = vector.shape_cast %674 : vector<8xf32> to vector<8x1xf32>
    %676 = vector.broadcast %675 : vector<8x1xf32> to vector<8x128xf32>
    %677 = arith.subf %673, %676 : vector<8x128xf32>
    %678 = math.exp %677 : vector<8x128xf32>
    %cst_235 = arith.constant dense<0.000000e+00> : vector<8xf32>
    %679 = vector.multi_reduction <add>, %678, %cst_235 [1] : vector<8x128xf32> to vector<8xf32>
    %680 = vector.shape_cast %679 : vector<8xf32> to vector<8x1xf32>
    %681 = math.log %680 : vector<8x1xf32>
    %682 = vector.broadcast %681 : vector<8x1xf32> to vector<8x128xf32>
    %683 = arith.subf %677, %682 : vector<8x128xf32>
    %c0_236 = arith.constant 0 : index
    %c0_237 = arith.constant 0 : index
    %684 = vector.load %arg10[%c0_236, %c0_237] : memref<8x128xf32, #tpu.memory_space<vmem>>, vector<8x128xf32>
    tpu.vector_store %arg10[%c0_236, %c0_237], %683 {strides = array<i32>} : memref<8x128xf32, #tpu.memory_space<vmem>>, vector<8x128xf32>,
    return
  }
}

</mosaic_0001>

<llo_original>
// kernel: cnn_lstm_forward.1
$region0: #{cnn_lstm_forward.1}
  #allocation0 [shape = 'u32[]', space=smem, size = 0x4, offset = 0x4, fixed_abs, tag = 'smem constant byte address 0x4 - core index']
  #allocation1 [shape = 'u32[144,128]{1,0:T(1,128)}', space=vmem, size = 0x12000, scoped, tag = 'internal scratch']
  #allocation2 [shape = 'f32[64,512]{1,0:T(8,128)}', space=vmem, size = 0x20000, scoped, tag = 'scratch operand']
  %s0 = inlined_call_operand.vmem [shape: f32[64,18], index: 0, kind: input, shape index: {}]
  %s1 = inlined_call_operand.vmem [shape: f32[2,8,128], index: 1, kind: input, shape index: {}, may-alias: {1,2}]
  %s2 = inlined_call_operand.vmem [shape: f32[2,8,128], index: 2, kind: input, shape index: {}, may-alias: {1,2}]
  %s3 = inlined_call_operand.hbm [shape: bf16[18,512], index: 3, kind: input, shape index: {}]
  %s4 = inlined_call_operand.vmem [shape: f32[1,512], index: 4, kind: input, shape index: {}]
  %s5 = inlined_call_operand.hbm [shape: bf16[256,512], index: 5, kind: input, shape index: {}]
  %s6 = inlined_call_operand.vmem [shape: bf16[128,512], index: 6, kind: input, shape index: {}]
  %s7 = inlined_call_operand.vmem [shape: f32[1,512], index: 7, kind: input, shape index: {}]
  %s8 = inlined_call_operand.hbm [shape: bf16[128,128], index: 8, kind: input, shape index: {}]
  %s9 = inlined_call_operand.vmem [shape: f32[1,128], index: 9, kind: input, shape index: {}]
  %s10 = inlined_call_operand.vmem [shape: f32[8,128], index: 10, kind: output, shape index: {}]
  %s11 = sld [smem:[#allocation0]]
  $region62: #{cnn_lstm_forward.1} parent=0
    _
  %s13 = ssub.s32 1, %s11
  %s14 = scalar_select 0, %s13, %s11
  $region1: #{cnn_lstm_forward.1} parent=0
    #allocation3 [shape = 'u8[24576]{0}', space=vmem, size = 0x6000, scoped, tag = 'input window, operand 3, single buffered']
    #allocation4 [shape = 's32[1]{0}', space=sflag, size = 0x4, scoped, tag = 'scoped memory for cnn_lstm_forward.1']
    #allocation5 [shape = 'u8[262144]{0}', space=vmem, size = 0x40000, scoped, tag = 'input window, operand 5, single buffered']
    #allocation6 [shape = 's32[1]{0}', space=sflag, size = 0x4, scoped, tag = 'scoped memory for cnn_lstm_forward.1']
    #allocation7 [shape = 'u8[32768]{0}', space=vmem, size = 0x8000, scoped, tag = 'input window, operand 8, single buffered']
    %15 = vsyncpa [#allocation4], 0
    %16 = vsyncpa [#allocation6], 0
    // Predicated region
    $region2: #{cnn_lstm_forward.1} parent=1 // pred_check
      _
    $region3: #{cnn_lstm_forward.1} parent=1 // pred_check_branch
      %18 = sbr.rel (0) target = $region5
    $region4: #{cnn_lstm_forward.1} parent=1 // pred_region
      _
    $region5: #{cnn_lstm_forward.1} parent=1 // pred_fallthru
      _
    // Predicated region
    $region6: #{cnn_lstm_forward.1} parent=1 // pred_check
      _
    $region7: #{cnn_lstm_forward.1} parent=1 // pred_check_branch
      %20 = sbr.rel (0) target = $region9
    $region8: #{cnn_lstm_forward.1} parent=1 // pred_region
      _
    $region9: #{cnn_lstm_forward.1} parent=1 // pred_fallthru
      _
    // Predicated region
    $region10: #{cnn_lstm_forward.1} parent=1 // pred_check
      _
    $region11: #{cnn_lstm_forward.1} parent=1 // pred_check_branch
      %22 = sbr.rel (0) target = $region13
    $region12: #{cnn_lstm_forward.1} parent=1 // pred_region
      _
    $region13: #{cnn_lstm_forward.1} parent=1 // pred_fallthru
      _
    // Predicated region
    $region14: #{cnn_lstm_forward.1} parent=1 // pred_check
      _
    $region15: #{cnn_lstm_forward.1} parent=1 // pred_check_branch
      %24 = sbr.rel (0) target = $region17
    $region16: #{cnn_lstm_forward.1} parent=1 // pred_region
      %s26 = ssub.s32 768, 768
      %27 = vsyncadd [#allocation4], %s26
      %s28 = sshll.u32 [#allocation3], 4
      %s29 = int_to_ptr.vmem [resolvable:$true] %s28
      %34 = dma.hbm_to_vmem [thread:$0]  %s3, 768, %s29, [#allocation4], 256, 256, 16
    $region17: #{cnn_lstm_forward.1} parent=1 // pred_fallthru
      _
    // Predicated region
    $region18: #{cnn_lstm_forward.1} parent=1 // pred_check
      _
    $region19: #{cnn_lstm_forward.1} parent=1 // pred_check_branch
      %36 = sbr.rel (0) target = $region21
    $region20: #{cnn_lstm_forward.1} parent=1 // pred_region
      _
    $region21: #{cnn_lstm_forward.1} parent=1 // pred_fallthru
      _
    // Predicated region
    $region22: #{cnn_lstm_forward.1} parent=1 // pred_check
      _
    $region23: #{cnn_lstm_forward.1} parent=1 // pred_check_branch
      %38 = sbr.rel (0) target = $region25
    $region24: #{cnn_lstm_forward.1} parent=1 // pred_region
      %s40 = ssub.s32 8192, 8192
      %41 = vsyncadd [#allocation6], %s40
      %s42 = sshll.u32 [#allocation5], 4
      %s43 = int_to_ptr.vmem [resolvable:$true] %s42
      %48 = dma.hbm_to_vmem [thread:$0]  %s5, 8192, %s43, [#allocation6], 256, 256, 16
    $region25: #{cnn_lstm_forward.1} parent=1 // pred_fallthru
      _
    // Predicated region
    $region26: #{cnn_lstm_forward.1} parent=1 // pred_check
      _
    $region27: #{cnn_lstm_forward.1} parent=1 // pred_check_branch
      %50 = sbr.rel (0) target = $region29
    $region28: #{cnn_lstm_forward.1} parent=1 // pred_region
      _
    $region29: #{cnn_lstm_forward.1} parent=1 // pred_fallthru
      _
    // Predicated region
    $region30: #{cnn_lstm_forward.1} parent=1 // pred_check
      _
    $region31: #{cnn_lstm_forward.1} parent=1 // pred_check_branch
      %52 = sbr.rel (0) target = $region33
    $region32: #{cnn_lstm_forward.1} parent=1 // pred_region
      _
    $region33: #{cnn_lstm_forward.1} parent=1 // pred_fallthru
      _
    // Predicated region
    $region34: #{cnn_lstm_forward.1} parent=1 // pred_check
      _
    $region35: #{cnn_lstm_forward.1} parent=1 // pred_check_branch
      %54 = sbr.rel (0) target = $region37
    $region36: #{cnn_lstm_forward.1} parent=1 // pred_region
      %s56 = ssub.s32 1024, 1024
      %57 = vsyncadd [#allocation6], %s56
      %s58 = sshll.u32 [#allocation7], 4
      %s59 = int_to_ptr.vmem [resolvable:$true] %s58
      %64 = dma.hbm_to_vmem [thread:$0]  %s8, 1024, %s59, [#allocation6], 64, 64, 4
    $region37: #{cnn_lstm_forward.1} parent=1 // pred_fallthru
      _
    // Predicated region
    $region38: #{cnn_lstm_forward.1} parent=1 // pred_check
      _
    $region39: #{cnn_lstm_forward.1} parent=1 // pred_check_branch
      %66 = sbr.rel (0) target = $region41
    $region40: #{cnn_lstm_forward.1} parent=1 // pred_region
      _
    $region41: #{cnn_lstm_forward.1} parent=1 // pred_fallthru
      _
    // Predicated region
    $region42: #{cnn_lstm_forward.1} parent=1 // pred_check
      _
    $region43: #{cnn_lstm_forward.1} parent=1 // pred_check_branch
      %68 = sbr.rel (0) target = $region45
    $region44: #{cnn_lstm_forward.1} parent=1 // pred_region
      %69 = dma.done [#allocation4], 768
    $region45: #{cnn_lstm_forward.1} parent=1 // pred_fallthru
      _
    // Predicated region
    $region46: #{cnn_lstm_forward.1} parent=1 // pred_check
      _
    $region47: #{cnn_lstm_forward.1} parent=1 // pred_check_branch
      %71 = sbr.rel (0) target = $region49
    $region48: #{cnn_lstm_forward.1} parent=1 // pred_region
      %72 = dma.done [#allocation6], 8192
    $region49: #{cnn_lstm_forward.1} parent=1 // pred_fallthru
      _
    // Predicated region
    $region50: #{cnn_lstm_forward.1} parent=1 // pred_check
      _
    $region51: #{cnn_lstm_forward.1} parent=1 // pred_check_branch
      %74 = sbr.rel (0) target = $region53
    $region52: #{cnn_lstm_forward.1} parent=1 // pred_region
      %75 = dma.done [#allocation6], 1024
    $region53: #{cnn_lstm_forward.1} parent=1 // pred_fallthru
      _
    %v77 = vld [vmem:[%s0] sm:$0xff]
    %v78 = vld [vmem:[%s0 + $0x8] sm:$0xff]
    %v79 = vld [vmem:[%s0 + $0x10] sm:$0xff]
    %v80 = vld [vmem:[%s0 + $0x18] sm:$0xff]
    %v81 = vld [vmem:[%s0 + $0x20] sm:$0xff]
    %v82 = vld [vmem:[%s0 + $0x28] sm:$0xff]
    %v83 = vld [vmem:[%s0 + $0x30] sm:$0xff]
    %v84 = vld [vmem:[%s0 + $0x38] sm:$0xff]
    %v85 = vpack.c.bf16 %v78, %v77
    %v86 = vpack.c.bf16 %v80, %v79
    %v87 = vpack.c.bf16 %v82, %v81
    %v88 = vpack.c.bf16 %v84, %v83
    %v89 = vld [vmem:[#allocation3] sm:$0xff]
    %v90 = vld [vmem:[#allocation3 + $0x8] sm:$0xff]
    %v91 = vld [vmem:[#allocation3 + $0x10] sm:$0xff]
    %v92 = vld [vmem:[#allocation3 + $0x18] sm:$0xff]
    %v93 = vld [vmem:[#allocation3 + $0x20] sm:$0x11]
    %v94 = vld [vmem:[#allocation3 + $0x28] sm:$0x11]
    %v95 = vld [vmem:[%s4] sm:$0xf]
    %v97 = vlaneseq
    %v98 = vshrl.u32 %v97, 7
    %v99 = vsub.s32 0, %v98
    %v100 = vrot.slane %v95, %v99
    %v101 = vlaneseq
    %v102 = vshrl.u32 %v101, 7
    %v103 = vsub.s32 1, %v102
    %v104 = vrot.slane %v95, %v103
    %v105 = vlaneseq
    %v106 = vshrl.u32 %v105, 7
    %v107 = vsub.s32 2, %v106
    %v108 = vrot.slane %v95, %v107
    %v109 = vlaneseq
    %v110 = vshrl.u32 %v109, 7
    %v111 = vsub.s32 3, %v110
    %v112 = vrot.slane %v95, %v111
    %v123 = vunpack.c.l.b16 %v89
    %v124 = vunpack.c.h.b16 %v89
    %v125 = vunpack.c.l.b16 %v90
    %v126 = vunpack.c.h.b16 %v90
    %v127 = vunpack.c.l.b16 %v91
    %v128 = vunpack.c.h.b16 %v91
    %v129 = vunpack.c.l.b16 %v92
    %v130 = vunpack.c.h.b16 %v92
    %v131 = vunpack.c.l.b16 %v93
    %v132 = vunpack.c.h.b16 %v93
    %v133 = vunpack.c.l.b16 %v94
    %v134 = vunpack.c.h.b16 %v94
    %v135 = vpack.c.b16 %v127, %v123
    %v136 = vpack.c.b16 %v128, %v124
    %v137 = vpack.c.b16 %v129, %v125
    %v138 = vpack.c.b16 %v130, %v126
    %v139 = vpack.c.b16 %v131, %v131
    %v140 = vpack.c.b16 %v132, %v132
    %v141 = vpack.c.b16 %v133, %v133
    %v142 = vpack.c.b16 %v134, %v134
    %vm147 = vcmask 146432
    %v149 = vsel %vm147, %v85, 0
    %v152 = vsel %vm147, %v86, 0
    %v155 = vsel %vm147, %v87, 0
    %v158 = vsel %vm147, %v88, 0
    %vm160 = vcmask 1040384
    %v162 = vsel %vm160, %v139, 0
    %v165 = vsel %vm160, %v140, 0
    %v168 = vsel %vm160, %v141, 0
    %v171 = vsel %vm160, %v142, 0
    %173 = vmatprep.subr.bf16.mxu0 0
    %174 = vmatpush1.bf16.msra.mxu0 0
    %175 = vmatprep.subr.bf16.mxu0 0
    %176 = vmatpush1.bf16.msra.mxu0 0
    %177 = vmatprep.subr.bf16.mxu0 0
    %178 = vmatpush1.bf16.msra.mxu0 0
    %179 = vmatprep.subr.bf16.mxu0 0
    %180 = vmatpush1.bf16.msra.mxu0 0
    %181 = vmatprep.subr.bf16.mxu0 0
    %182 = vmatpush1.bf16.msra.mxu0 0
    %183 = vmatprep.subr.bf16.mxu0 0
    %184 = vmatpush1.bf16.msra.mxu0 0
    %185 = vmatprep.subr.bf16.mxu0 %v165
    %186 = vmatpush1.bf16.msra.mxu0 %v162
    %187 = vmatprep.subr.bf16.mxu0 %v136
    %188 = vmatpush1.bf16.msra.mxu0 %v135
    %189 = vmatprep.subr.bf16.mxu0 0
    %190 = vmatpush2.bf16.msra.mxu0 0
    %191 = vmatprep.subr.bf16.mxu0 0
    %192 = vmatpush2.bf16.msra.mxu0 0
    %193 = vmatprep.subr.bf16.mxu0 0
    %194 = vmatpush2.bf16.msra.mxu0 0
    %195 = vmatprep.subr.bf16.mxu0 0
    %196 = vmatpush2.bf16.msra.mxu0 0
    %197 = vmatprep.subr.bf16.mxu0 0
    %198 = vmatpush2.bf16.msra.mxu0 0
    %199 = vmatprep.subr.bf16.mxu0 0
    %200 = vmatpush2.bf16.msra.mxu0 0
    %201 = vmatprep.subr.bf16.mxu0 0
    %202 = vmatpush2.bf16.msra.mxu0 0
    %203 = vmatprep.subr.bf16.mxu0 0
    %204 = vmatpush2.bf16.msra.mxu0 0
    %205 = vmatprep.mubr.bf16.mxu0 0
    %206 = vmatmul.mubr.bf16.gmra.mxu0 %v149
    %v207 = vpop.f32.mrf.mxu0
    %v208 = vadd.f32 %v100, %v207
    %v209 = vpop.f32.mrf.mxu0
    %v210 = vadd.f32 %v104, %v209
    %v211 = vpop.f32.mrf.mxu0
    %v212 = vadd.f32 %v100, %v211
    %v213 = vpop.f32.mrf.mxu0
    %v214 = vadd.f32 %v104, %v213
    %215 = vmatprep.mubr.bf16.mxu0 0
    %216 = vmatmul.mubr.bf16.gmra.mxu0 %v152
    %v217 = vpop.f32.mrf.mxu0
    %v218 = vadd.f32 %v100, %v217
    %v219 = vpop.f32.mrf.mxu0
    %v220 = vadd.f32 %v104, %v219
    %v221 = vpop.f32.mrf.mxu0
    %v222 = vadd.f32 %v100, %v221
    %v223 = vpop.f32.mrf.mxu0
    %v224 = vadd.f32 %v104, %v223
    %225 = vmatprep.mubr.bf16.mxu0 0
    %226 = vmatmul.mubr.bf16.gmra.mxu0 %v155
    %v227 = vpop.f32.mrf.mxu0
    %v228 = vadd.f32 %v100, %v227
    %v229 = vpop.f32.mrf.mxu0
    %v230 = vadd.f32 %v104, %v229
    %v231 = vpop.f32.mrf.mxu0
    %v232 = vadd.f32 %v100, %v231
    %v233 = vpop.f32.mrf.mxu0
    %v234 = vadd.f32 %v104, %v233
    %235 = vmatprep.mubr.bf16.mxu0 0
    %236 = vmatmul.mubr.bf16.gmra.mxu0 %v158
    %v237 = vpop.f32.mrf.mxu0
    %v238 = vadd.f32 %v100, %v237
    %v239 = vpop.f32.mrf.mxu0
    %v240 = vadd.f32 %v104, %v239
    %v241 = vpop.f32.mrf.mxu0
    %v242 = vadd.f32 %v100, %v241
    %v243 = vpop.f32.mrf.mxu0
    %v244 = vadd.f32 %v104, %v243
    %245 = vdwg.mxu0
    %246 = vmatprep.subr.bf16.mxu0 0
    %247 = vmatpush1.bf16.msra.mxu0 0
    %248 = vmatprep.subr.bf16.mxu0 0
    %249 = vmatpush1.bf16.msra.mxu0 0
    %250 = vmatprep.subr.bf16.mxu0 0
    %251 = vmatpush1.bf16.msra.mxu0 0
    %252 = vmatprep.subr.bf16.mxu0 0
    %253 = vmatpush1.bf16.msra.mxu0 0
    %254 = vmatprep.subr.bf16.mxu0 0
    %255 = vmatpush1.bf16.msra.mxu0 0
    %256 = vmatprep.subr.bf16.mxu0 0
    %257 = vmatpush1.bf16.msra.mxu0 0
    %258 = vmatprep.subr.bf16.mxu0 %v171
    %259 = vmatpush1.bf16.msra.mxu0 %v168
    %260 = vmatprep.subr.bf16.mxu0 %v138
    %261 = vmatpush1.bf16.msra.mxu0 %v137
    %262 = vmatprep.subr.bf16.mxu0 0
    %263 = vmatpush2.bf16.msra.mxu0 0
    %264 = vmatprep.subr.bf16.mxu0 0
    %265 = vmatpush2.bf16.msra.mxu0 0
    %266 = vmatprep.subr.bf16.mxu0 0
    %267 = vmatpush2.bf16.msra.mxu0 0
    %268 = vmatprep.subr.bf16.mxu0 0
    %269 = vmatpush2.bf16.msra.mxu0 0
    %270 = vmatprep.subr.bf16.mxu0 0
    %271 = vmatpush2.bf16.msra.mxu0 0
    %272 = vmatprep.subr.bf16.mxu0 0
    %273 = vmatpush2.bf16.msra.mxu0 0
    %274 = vmatprep.subr.bf16.mxu0 0
    %275 = vmatpush2.bf16.msra.mxu0 0
    %276 = vmatprep.subr.bf16.mxu0 0
    %277 = vmatpush2.bf16.msra.mxu0 0
    %278 = vmatprep.mubr.bf16.mxu0 0
    %279 = vmatmul.mubr.bf16.gmra.mxu0 %v149
    %v280 = vpop.f32.mrf.mxu0
    %v281 = vadd.f32 %v108, %v280
    %v282 = vpop.f32.mrf.mxu0
    %v283 = vadd.f32 %v112, %v282
    %v284 = vpop.f32.mrf.mxu0
    %v285 = vadd.f32 %v108, %v284
    %v286 = vpop.f32.mrf.mxu0
    %v287 = vadd.f32 %v112, %v286
    %288 = vmatprep.mubr.bf16.mxu0 0
    %289 = vmatmul.mubr.bf16.gmra.mxu0 %v152
    %v290 = vpop.f32.mrf.mxu0
    %v291 = vadd.f32 %v108, %v290
    %v292 = vpop.f32.mrf.mxu0
    %v293 = vadd.f32 %v112, %v292
    %v294 = vpop.f32.mrf.mxu0
    %v295 = vadd.f32 %v108, %v294
    %v296 = vpop.f32.mrf.mxu0
    %v297 = vadd.f32 %v112, %v296
    %298 = vmatprep.mubr.bf16.mxu0 0
    %299 = vmatmul.mubr.bf16.gmra.mxu0 %v155
    %v300 = vpop.f32.mrf.mxu0
    %v301 = vadd.f32 %v108, %v300
    %v302 = vpop.f32.mrf.mxu0
    %v303 = vadd.f32 %v112, %v302
    %v304 = vpop.f32.mrf.mxu0
    %v305 = vadd.f32 %v108, %v304
    %v306 = vpop.f32.mrf.mxu0
    %v307 = vadd.f32 %v112, %v306
    %308 = vmatprep.mubr.bf16.mxu0 0
    %309 = vmatmul.mubr.bf16.gmra.mxu0 %v158
    %v310 = vpop.f32.mrf.mxu0
    %v311 = vadd.f32 %v108, %v310
    %v312 = vpop.f32.mrf.mxu0
    %v313 = vadd.f32 %v112, %v312
    %v314 = vpop.f32.mrf.mxu0
    %v315 = vadd.f32 %v108, %v314
    %v316 = vpop.f32.mrf.mxu0
    %v317 = vadd.f32 %v112, %v316
    %318 = vdwg.mxu0
    %319 = vst [vmem:[#allocation2] sm:$0xff] %v208
    %320 = vst [vmem:[#allocation2 + $0x8] sm:$0xff] %v210
    %321 = vst [vmem:[#allocation2 + $0x10] sm:$0xff] %v281
    %322 = vst [vmem:[#allocation2 + $0x18] sm:$0xff] %v283
    %323 = vst [vmem:[#allocation2 + $0x20] sm:$0xff] %v212
    %324 = vst [vmem:[#allocation2 + $0x28] sm:$0xff] %v214
    %325 = vst [vmem:[#allocation2 + $0x30] sm:$0xff] %v285
    %326 = vst [vmem:[#allocation2 + $0x38] sm:$0xff] %v287
    %327 = vst [vmem:[#allocation2 + $0x40] sm:$0xff] %v218
    %328 = vst [vmem:[#allocation2 + $0x48] sm:$0xff] %v220
    %329 = vst [vmem:[#allocation2 + $0x50] sm:$0xff] %v291
    %330 = vst [vmem:[#allocation2 + $0x58] sm:$0xff] %v293
    %331 = vst [vmem:[#allocation2 + $0x60] sm:$0xff] %v222
    %332 = vst [vmem:[#allocation2 + $0x68] sm:$0xff] %v224
    %333 = vst [vmem:[#allocation2 + $0x70] sm:$0xff] %v295
    %334 = vst [vmem:[#allocation2 + $0x78] sm:$0xff] %v297
    %335 = vst [vmem:[#allocation2 + $0x80] sm:$0xff] %v228
    %336 = vst [vmem:[#allocation2 + $0x88] sm:$0xff] %v230
    %337 = vst [vmem:[#allocation2 + $0x90] sm:$0xff] %v301
    %338 = vst [vmem:[#allocation2 + $0x98] sm:$0xff] %v303
    %339 = vst [vmem:[#allocation2 + $0xa0] sm:$0xff] %v232
    %340 = vst [vmem:[#allocation2 + $0xa8] sm:$0xff] %v234
    %341 = vst [vmem:[#allocation2 + $0xb0] sm:$0xff] %v305
    %342 = vst [vmem:[#allocation2 + $0xb8] sm:$0xff] %v307
    %343 = vst [vmem:[#allocation2 + $0xc0] sm:$0xff] %v238
    %344 = vst [vmem:[#allocation2 + $0xc8] sm:$0xff] %v240
    %345 = vst [vmem:[#allocation2 + $0xd0] sm:$0xff] %v311
    %346 = vst [vmem:[#allocation2 + $0xd8] sm:$0xff] %v313
    %347 = vst [vmem:[#allocation2 + $0xe0] sm:$0xff] %v242
    %348 = vst [vmem:[#allocation2 + $0xe8] sm:$0xff] %v244
    %349 = vst [vmem:[#allocation2 + $0xf0] sm:$0xff] %v315
    %350 = vst [vmem:[#allocation2 + $0xf8] sm:$0xff] %v317
    %v351 = vld [vmem:[%s7] sm:$0xf]
    %v353 = vlaneseq
    %v354 = vshrl.u32 %v353, 7
    %v355 = vsub.s32 0, %v354
    %v356 = vrot.slane %v351, %v355
    %v357 = vlaneseq
    %v358 = vshrl.u32 %v357, 7
    %v359 = vsub.s32 1, %v358
    %v360 = vrot.slane %v351, %v359
    %v361 = vlaneseq
    %v362 = vshrl.u32 %v361, 7
    %v363 = vsub.s32 2, %v362
    %v364 = vrot.slane %v351, %v363
    %v365 = vlaneseq
    %v366 = vshrl.u32 %v365, 7
    %v367 = vsub.s32 3, %v366
    %v368 = vrot.slane %v351, %v367
    %v373 = vld [vmem:[%s1] sm:$0xff]
    %v374 = vld [vmem:[%s2] sm:$0xff]
    %s375 = scalar_lea.vmem %s1, 8
    %v376 = vld [vmem:[%s375] sm:$0xff]
    %s377 = scalar_lea.vmem %s2, 8
    %v378 = vld [vmem:[%s377] sm:$0xff]
    %v379 = vpack.c.bf16 %v373, %v373
    %v380 = vpack.c.bf16 %v376, %v376
    %v383 = vrot.slane 0, 4
    %v384 = vrot.slane %v380, 4
    %vm385 = vcmask 1043456
    %v388 = vsel %vm385, %v379, %v383
    %v392 = vsel %vm385, 0, %v384
    %v394 = vld [vmem:[#allocation5] sm:$0xff]
    %v395 = vld [vmem:[#allocation5 + $0x8] sm:$0xff]
    %v396 = vld [vmem:[#allocation5 + $0x10] sm:$0xff]
    %v397 = vld [vmem:[#allocation5 + $0x18] sm:$0xff]
    %v398 = vld [vmem:[#allocation5 + $0x20] sm:$0xff]
    %v399 = vld [vmem:[#allocation5 + $0x28] sm:$0xff]
    %v400 = vld [vmem:[#allocation5 + $0x30] sm:$0xff]
    %v401 = vld [vmem:[#allocation5 + $0x38] sm:$0xff]
    %v402 = vld [vmem:[#allocation5 + $0x40] sm:$0xff]
    %v403 = vld [vmem:[#allocation5 + $0x48] sm:$0xff]
    %v404 = vld [vmem:[#allocation5 + $0x50] sm:$0xff]
    %v405 = vld [vmem:[#allocation5 + $0x58] sm:$0xff]
    %v406 = vld [vmem:[#allocation5 + $0x60] sm:$0xff]
    %v407 = vld [vmem:[#allocation5 + $0x68] sm:$0xff]
    %v408 = vld [vmem:[#allocation5 + $0x70] sm:$0xff]
    %v409 = vld [vmem:[#allocation5 + $0x78] sm:$0xff]
    %v410 = vld [vmem:[#allocation5 + $0x80] sm:$0xff]
    %v411 = vld [vmem:[#allocation5 + $0x88] sm:$0xff]
    %v412 = vld [vmem:[#allocation5 + $0x90] sm:$0xff]
    %v413 = vld [vmem:[#allocation5 + $0x98] sm:$0xff]
    %v414 = vld [vmem:[#allocation5 + $0xa0] sm:$0xff]
    %v415 = vld [vmem:[#allocation5 + $0xa8] sm:$0xff]
    %v416 = vld [vmem:[#allocation5 + $0xb0] sm:$0xff]
    %v417 = vld [vmem:[#allocation5 + $0xb8] sm:$0xff]
    %v418 = vld [vmem:[#allocation5 + $0xc0] sm:$0xff]
    %v419 = vld [vmem:[#allocation5 + $0xc8] sm:$0xff]
    %v420 = vld [vmem:[#allocation5 + $0xd0] sm:$0xff]
    %v421 = vld [vmem:[#allocation5 + $0xd8] sm:$0xff]
    %v422 = vld [vmem:[#allocation5 + $0xe0] sm:$0xff]
    %v423 = vld [vmem:[#allocation5 + $0xe8] sm:$0xff]
    %v424 = vld [vmem:[#allocation5 + $0xf0] sm:$0xff]
    %v425 = vld [vmem:[#allocation5 + $0xf8] sm:$0xff]
    %v426 = vld [vmem:[#allocation5 + $0x100] sm:$0xff]
    %v427 = vld [vmem:[#allocation5 + $0x108] sm:$0xff]
    %v428 = vld [vmem:[#allocation5 + $0x110] sm:$0xff]
    %v429 = vld [vmem:[#allocation5 + $0x118] sm:$0xff]
    %v430 = vld [vmem:[#allocation5 + $0x120] sm:$0xff]
    %v431 = vld [vmem:[#allocation5 + $0x128] sm:$0xff]
    %v432 = vld [vmem:[#allocation5 + $0x130] sm:$0xff]
    %v433 = vld [vmem:[#allocation5 + $0x138] sm:$0xff]
    %v434 = vld [vmem:[#allocation5 + $0x140] sm:$0xff]
    %v435 = vld [vmem:[#allocation5 + $0x148] sm:$0xff]
    %v436 = vld [vmem:[#allocation5 + $0x150] sm:$0xff]
    %v437 = vld [vmem:[#allocation5 + $0x158] sm:$0xff]
    %v438 = vld [vmem:[#allocation5 + $0x160] sm:$0xff]
    %v439 = vld [vmem:[#allocation5 + $0x168] sm:$0xff]
    %v440 = vld [vmem:[#allocation5 + $0x170] sm:$0xff]
    %v441 = vld [vmem:[#allocation5 + $0x178] sm:$0xff]
    %v442 = vld [vmem:[#allocation5 + $0x180] sm:$0xff]
    %v443 = vld [vmem:[#allocation5 + $0x188] sm:$0xff]
    %v444 = vld [vmem:[#allocation5 + $0x190] sm:$0xff]
    %v445 = vld [vmem:[#allocation5 + $0x198] sm:$0xff]
    %v446 = vld [vmem:[#allocation5 + $0x1a0] sm:$0xff]
    %v447 = vld [vmem:[#allocation5 + $0x1a8] sm:$0xff]
    %v448 = vld [vmem:[#allocation5 + $0x1b0] sm:$0xff]
    %v449 = vld [vmem:[#allocation5 + $0x1b8] sm:$0xff]
    %v450 = vld [vmem:[#allocation5 + $0x1c0] sm:$0xff]
    %v451 = vld [vmem:[#allocation5 + $0x1c8] sm:$0xff]
    %v452 = vld [vmem:[#allocation5 + $0x1d0] sm:$0xff]
    %v453 = vld [vmem:[#allocation5 + $0x1d8] sm:$0xff]
    %v454 = vld [vmem:[#allocation5 + $0x1e0] sm:$0xff]
    %v455 = vld [vmem:[#allocation5 + $0x1e8] sm:$0xff]
    %v456 = vld [vmem:[#allocation5 + $0x1f0] sm:$0xff]
    %v457 = vld [vmem:[#allocation5 + $0x1f8] sm:$0xff]
    %v522 = vunpack.c.l.b16 %v394
    %v523 = vunpack.c.h.b16 %v394
    %v524 = vunpack.c.l.b16 %v395
    %v525 = vunpack.c.h.b16 %v395
    %v526 = vunpack.c.l.b16 %v396
    %v527 = vunpack.c.h.b16 %v396
    %v528 = vunpack.c.l.b16 %v397
    %v529 = vunpack.c.h.b16 %v397
    %v530 = vunpack.c.l.b16 %v398
    %v531 = vunpack.c.h.b16 %v398
    %v532 = vunpack.c.l.b16 %v399
    %v533 = vunpack.c.h.b16 %v399
    %v534 = vunpack.c.l.b16 %v400
    %v535 = vunpack.c.h.b16 %v400
    %v536 = vunpack.c.l.b16 %v401
    %v537 = vunpack.c.h.b16 %v401
    %v538 = vunpack.c.l.b16 %v402
    %v539 = vunpack.c.h.b16 %v402
    %v540 = vunpack.c.l.b16 %v403
    %v541 = vunpack.c.h.b16 %v403
    %v542 = vunpack.c.l.b16 %v404
    %v543 = vunpack.c.h.b16 %v404
    %v544 = vunpack.c.l.b16 %v405
    %v545 = vunpack.c.h.b16 %v405
    %v546 = vunpack.c.l.b16 %v406
    %v547 = vunpack.c.h.b16 %v406
    %v548 = vunpack.c.l.b16 %v407
    %v549 = vunpack.c.h.b16 %v407
    %v550 = vunpack.c.l.b16 %v408
    %v551 = vunpack.c.h.b16 %v408
    %v552 = vunpack.c.l.b16 %v409
    %v553 = vunpack.c.h.b16 %v409
    %v554 = vunpack.c.l.b16 %v410
    %v555 = vunpack.c.h.b16 %v410
    %v556 = vunpack.c.l.b16 %v411
    %v557 = vunpack.c.h.b16 %v411
    %v558 = vunpack.c.l.b16 %v412
    %v559 = vunpack.c.h.b16 %v412
    %v560 = vunpack.c.l.b16 %v413
    %v561 = vunpack.c.h.b16 %v413
    %v562 = vunpack.c.l.b16 %v414
    %v563 = vunpack.c.h.b16 %v414
    %v564 = vunpack.c.l.b16 %v415
    %v565 = vunpack.c.h.b16 %v415
    %v566 = vunpack.c.l.b16 %v416
    %v567 = vunpack.c.h.b16 %v416
    %v568 = vunpack.c.l.b16 %v417
    %v569 = vunpack.c.h.b16 %v417
    %v570 = vunpack.c.l.b16 %v418
    %v571 = vunpack.c.h.b16 %v418
    %v572 = vunpack.c.l.b16 %v419
    %v573 = vunpack.c.h.b16 %v419
    %v574 = vunpack.c.l.b16 %v420
    %v575 = vunpack.c.h.b16 %v420
    %v576 = vunpack.c.l.b16 %v421
    %v577 = vunpack.c.h.b16 %v421
    %v578 = vunpack.c.l.b16 %v422
    %v579 = vunpack.c.h.b16 %v422
    %v580 = vunpack.c.l.b16 %v423
    %v581 = vunpack.c.h.b16 %v423
    %v582 = vunpack.c.l.b16 %v424
    %v583 = vunpack.c.h.b16 %v424
    %v584 = vunpack.c.l.b16 %v425
    %v585 = vunpack.c.h.b16 %v425
    %v586 = vunpack.c.l.b16 %v426
    %v587 = vunpack.c.h.b16 %v426
    %v588 = vunpack.c.l.b16 %v427
    %v589 = vunpack.c.h.b16 %v427
    %v590 = vunpack.c.l.b16 %v428
    %v591 = vunpack.c.h.b16 %v428
    %v592 = vunpack.c.l.b16 %v429
    %v593 = vunpack.c.h.b16 %v429
    %v594 = vunpack.c.l.b16 %v430
    %v595 = vunpack.c.h.b16 %v430
    %v596 = vunpack.c.l.b16 %v431
    %v597 = vunpack.c.h.b16 %v431
    %v598 = vunpack.c.l.b16 %v432
    %v599 = vunpack.c.h.b16 %v432
    %v600 = vunpack.c.l.b16 %v433
    %v601 = vunpack.c.h.b16 %v433
    %v602 = vunpack.c.l.b16 %v434
    %v603 = vunpack.c.h.b16 %v434
    %v604 = vunpack.c.l.b16 %v435
    %v605 = vunpack.c.h.b16 %v435
    %v606 = vunpack.c.l.b16 %v436
    %v607 = vunpack.c.h.b16 %v436
    %v608 = vunpack.c.l.b16 %v437
    %v609 = vunpack.c.h.b16 %v437
    %v610 = vunpack.c.l.b16 %v438
    %v611 = vunpack.c.h.b16 %v438
    %v612 = vunpack.c.l.b16 %v439
    %v613 = vunpack.c.h.b16 %v439
    %v614 = vunpack.c.l.b16 %v440
    %v615 = vunpack.c.h.b16 %v440
    %v616 = vunpack.c.l.b16 %v441
    %v617 = vunpack.c.h.b16 %v441
    %v618 = vunpack.c.l.b16 %v442
    %v619 = vunpack.c.h.b16 %v442
    %v620 = vunpack.c.l.b16 %v443
    %v621 = vunpack.c.h.b16 %v443
    %v622 = vunpack.c.l.b16 %v444
    %v623 = vunpack.c.h.b16 %v444
    %v624 = vunpack.c.l.b16 %v445
    %v625 = vunpack.c.h.b16 %v445
    %v626 = vunpack.c.l.b16 %v446
    %v627 = vunpack.c.h.b16 %v446
    %v628 = vunpack.c.l.b16 %v447
    %v629 = vunpack.c.h.b16 %v447
    %v630 = vunpack.c.l.b16 %v448
    %v631 = vunpack.c.h.b16 %v448
    %v632 = vunpack.c.l.b16 %v449
    %v633 = vunpack.c.h.b16 %v449
    %v634 = vunpack.c.l.b16 %v450
    %v635 = vunpack.c.h.b16 %v450
    %v636 = vunpack.c.l.b16 %v451
    %v637 = vunpack.c.h.b16 %v451
    %v638 = vunpack.c.l.b16 %v452
    %v639 = vunpack.c.h.b16 %v452
    %v640 = vunpack.c.l.b16 %v453
    %v641 = vunpack.c.h.b16 %v453
    %v642 = vunpack.c.l.b16 %v454
    %v643 = vunpack.c.h.b16 %v454
    %v644 = vunpack.c.l.b16 %v455
    %v645 = vunpack.c.h.b16 %v455
    %v646 = vunpack.c.l.b16 %v456
    %v647 = vunpack.c.h.b16 %v456
    %v648 = vunpack.c.l.b16 %v457
    %v649 = vunpack.c.h.b16 %v457
    %v650 = vpack.c.b16 %v526, %v522
    %v651 = vpack.c.b16 %v527, %v523
    %v652 = vpack.c.b16 %v528, %v524
    %v653 = vpack.c.b16 %v529, %v525
    %v654 = vpack.c.b16 %v534, %v530
    %v655 = vpack.c.b16 %v535, %v531
    %v656 = vpack.c.b16 %v536, %v532
    %v657 = vpack.c.b16 %v537, %v533
    %v658 = vpack.c.b16 %v542, %v538
    %v659 = vpack.c.b16 %v543, %v539
    %v660 = vpack.c.b16 %v544, %v540
    %v661 = vpack.c.b16 %v545, %v541
    %v662 = vpack.c.b16 %v550, %v546
    %v663 = vpack.c.b16 %v551, %v547
    %v664 = vpack.c.b16 %v552, %v548
    %v665 = vpack.c.b16 %v553, %v549
    %v666 = vpack.c.b16 %v558, %v554
    %v667 = vpack.c.b16 %v559, %v555
    %v668 = vpack.c.b16 %v560, %v556
    %v669 = vpack.c.b16 %v561, %v557
    %v670 = vpack.c.b16 %v566, %v562
    %v671 = vpack.c.b16 %v567, %v563
    %v672 = vpack.c.b16 %v568, %v564
    %v673 = vpack.c.b16 %v569, %v565
    %v674 = vpack.c.b16 %v574, %v570
    %v675 = vpack.c.b16 %v575, %v571
    %v676 = vpack.c.b16 %v576, %v572
    %v677 = vpack.c.b16 %v577, %v573
    %v678 = vpack.c.b16 %v582, %v578
    %v679 = vpack.c.b16 %v583, %v579
    %v680 = vpack.c.b16 %v584, %v580
    %v681 = vpack.c.b16 %v585, %v581
    %v682 = vpack.c.b16 %v590, %v586
    %v683 = vpack.c.b16 %v591, %v587
    %v684 = vpack.c.b16 %v592, %v588
    %v685 = vpack.c.b16 %v593, %v589
    %v686 = vpack.c.b16 %v598, %v594
    %v687 = vpack.c.b16 %v599, %v595
    %v688 = vpack.c.b16 %v600, %v596
    %v689 = vpack.c.b16 %v601, %v597
    %v690 = vpack.c.b16 %v606, %v602
    %v691 = vpack.c.b16 %v607, %v603
    %v692 = vpack.c.b16 %v608, %v604
    %v693 = vpack.c.b16 %v609, %v605
    %v694 = vpack.c.b16 %v614, %v610
    %v695 = vpack.c.b16 %v615, %v611
    %v696 = vpack.c.b16 %v616, %v612
    %v697 = vpack.c.b16 %v617, %v613
    %v698 = vpack.c.b16 %v622, %v618
    %v699 = vpack.c.b16 %v623, %v619
    %v700 = vpack.c.b16 %v624, %v620
    %v701 = vpack.c.b16 %v625, %v621
    %v702 = vpack.c.b16 %v630, %v626
    %v703 = vpack.c.b16 %v631, %v627
    %v704 = vpack.c.b16 %v632, %v628
    %v705 = vpack.c.b16 %v633, %v629
    %v706 = vpack.c.b16 %v638, %v634
    %v707 = vpack.c.b16 %v639, %v635
    %v708 = vpack.c.b16 %v640, %v636
    %v709 = vpack.c.b16 %v641, %v637
    %v710 = vpack.c.b16 %v646, %v642
    %v711 = vpack.c.b16 %v647, %v643
    %v712 = vpack.c.b16 %v648, %v644
    %v713 = vpack.c.b16 %v649, %v645
    %778 = vmatprep.subr.bf16.mxu0 %v679
    %779 = vmatpush1.bf16.msra.mxu0 %v678
    %780 = vmatprep.subr.bf16.mxu0 %v675
    %781 = vmatpush1.bf16.msra.mxu0 %v674
    %782 = vmatprep.subr.bf16.mxu0 %v671
    %783 = vmatpush1.bf16.msra.mxu0 %v670
    %784 = vmatprep.subr.bf16.mxu0 %v667
    %785 = vmatpush1.bf16.msra.mxu0 %v666
    %786 = vmatprep.subr.bf16.mxu0 %v663
    %787 = vmatpush1.bf16.msra.mxu0 %v662
    %788 = vmatprep.subr.bf16.mxu0 %v659
    %789 = vmatpush1.bf16.msra.mxu0 %v658
    %790 = vmatprep.subr.bf16.mxu0 %v655
    %791 = vmatpush1.bf16.msra.mxu0 %v654
    %792 = vmatprep.subr.bf16.mxu0 %v651
    %793 = vmatpush1.bf16.msra.mxu0 %v650
    %794 = vmatprep.subr.bf16.mxu0 %v711
    %795 = vmatpush2.bf16.msra.mxu0 %v710
    %796 = vmatprep.subr.bf16.mxu0 %v707
    %797 = vmatpush2.bf16.msra.mxu0 %v706
    %798 = vmatprep.subr.bf16.mxu0 %v703
    %799 = vmatpush2.bf16.msra.mxu0 %v702
    %800 = vmatprep.subr.bf16.mxu0 %v699
    %801 = vmatpush2.bf16.msra.mxu0 %v698
    %802 = vmatprep.subr.bf16.mxu0 %v695
    %803 = vmatpush2.bf16.msra.mxu0 %v694
    %804 = vmatprep.subr.bf16.mxu0 %v691
    %805 = vmatpush2.bf16.msra.mxu0 %v690
    %806 = vmatprep.subr.bf16.mxu0 %v687
    %807 = vmatpush2.bf16.msra.mxu0 %v686
    %808 = vmatprep.subr.bf16.mxu0 %v683
    %809 = vmatpush2.bf16.msra.mxu0 %v682
    %810 = vmatprep.mubr.bf16.mxu0 %v392
    %811 = vmatmul.mubr.bf16.gmra.mxu0 %v388
    %v812 = vpop.f32.mrf.mxu0
    %v813 = vadd.f32 0.0, %v812
    %v814 = vpop.f32.mrf.mxu0
    %v815 = vadd.f32 0.0, %v814
    %v816 = vpop.f32.mrf.mxu0
    %v817 = vadd.f32 0.0, %v816
    %v818 = vpop.f32.mrf.mxu0
    %v819 = vadd.f32 0.0, %v818
    %820 = vdwg.mxu0
    %821 = vmatprep.subr.bf16.mxu0 %v681
    %822 = vmatpush1.bf16.msra.mxu0 %v680
    %823 = vmatprep.subr.bf16.mxu0 %v677
    %824 = vmatpush1.bf16.msra.mxu0 %v676
    %825 = vmatprep.subr.bf16.mxu0 %v673
    %826 = vmatpush1.bf16.msra.mxu0 %v672
    %827 = vmatprep.subr.bf16.mxu0 %v669
    %828 = vmatpush1.bf16.msra.mxu0 %v668
    %829 = vmatprep.subr.bf16.mxu0 %v665
    %830 = vmatpush1.bf16.msra.mxu0 %v664
    %831 = vmatprep.subr.bf16.mxu0 %v661
    %832 = vmatpush1.bf16.msra.mxu0 %v660
    %833 = vmatprep.subr.bf16.mxu0 %v657
    %834 = vmatpush1.bf16.msra.mxu0 %v656
    %835 = vmatprep.subr.bf16.mxu0 %v653
    %836 = vmatpush1.bf16.msra.mxu0 %v652
    %837 = vmatprep.subr.bf16.mxu0 %v713
    %838 = vmatpush2.bf16.msra.mxu0 %v712
    %839 = vmatprep.subr.bf16.mxu0 %v709
    %840 = vmatpush2.bf16.msra.mxu0 %v708
    %841 = vmatprep.subr.bf16.mxu0 %v705
    %842 = vmatpush2.bf16.msra.mxu0 %v704
    %843 = vmatprep.subr.bf16.mxu0 %v701
    %844 = vmatpush2.bf16.msra.mxu0 %v700
    %845 = vmatprep.subr.bf16.mxu0 %v697
    %846 = vmatpush2.bf16.msra.mxu0 %v696
    %847 = vmatprep.subr.bf16.mxu0 %v693
    %848 = vmatpush2.bf16.msra.mxu0 %v692
    %849 = vmatprep.subr.bf16.mxu0 %v689
    %850 = vmatpush2.bf16.msra.mxu0 %v688
    %851 = vmatprep.subr.bf16.mxu0 %v685
    %852 = vmatpush2.bf16.msra.mxu0 %v684
    %853 = vmatprep.mubr.bf16.mxu0 %v392
    %854 = vmatmul.mubr.bf16.gmra.mxu0 %v388
    %v855 = vpop.f32.mrf.mxu0
    %v856 = vadd.f32 0.0, %v855
    %v857 = vpop.f32.mrf.mxu0
    %v858 = vadd.f32 0.0, %v857
    %v859 = vpop.f32.mrf.mxu0
    %v860 = vadd.f32 0.0, %v859
    %v861 = vpop.f32.mrf.mxu0
    %v862 = vadd.f32 0.0, %v861
    %863 = vdwg.mxu0
    %s864 = smul.u32 0, 4
    %s865 = smul.addr %s864, 8
    %s866 = scalar_lea.vmem [#allocation2], %s865
    %v867 = vld [vmem:[%s866] sm:$0xff]
    %v868 = vld [vmem:[%s866 + $0x8] sm:$0xff]
    %v869 = vld [vmem:[%s866 + $0x10] sm:$0xff]
    %v870 = vld [vmem:[%s866 + $0x18] sm:$0xff]
    %v871 = vadd.f32 %v867, %v813
    %v872 = vadd.f32 %v868, %v815
    %v873 = vadd.f32 %v869, %v856
    %v874 = vadd.f32 %v870, %v858
    %v875 = vmul.f32 %v871, 0.5
    %v876 = vtanh.pop %v875
    %v877 = vmul.f32 %v876, 0.5
    %v878 = vadd.f32 %v877, 0.5
    %v879 = vmul.f32 %v872, 0.5
    %v880 = vtanh.pop %v879
    %v881 = vmul.f32 %v880, 0.5
    %v882 = vadd.f32 %v881, 0.5
    %v883 = vtanh.pop %v873
    %v884 = vmul.f32 %v874, 0.5
    %v885 = vtanh.pop %v884
    %v886 = vmul.f32 %v885, 0.5
    %v887 = vadd.f32 %v886, 0.5
    %v888 = vmul.f32 %v882, %v374
    %v889 = vmul.f32 %v878, %v883
    %v890 = vadd.f32 %v888, %v889
    %v891 = vtanh.pop %v890
    %v892 = vmul.f32 %v887, %v891
    %v893 = vpack.c.bf16 %v892, %v892
    %v894 = vld [vmem:[%s6] sm:$0xff]
    %v895 = vld [vmem:[%s6 + $0x8] sm:$0xff]
    %v896 = vld [vmem:[%s6 + $0x10] sm:$0xff]
    %v897 = vld [vmem:[%s6 + $0x18] sm:$0xff]
    %v898 = vld [vmem:[%s6 + $0x20] sm:$0xff]
    %v899 = vld [vmem:[%s6 + $0x28] sm:$0xff]
    %v900 = vld [vmem:[%s6 + $0x30] sm:$0xff]
    %v901 = vld [vmem:[%s6 + $0x38] sm:$0xff]
    %v902 = vld [vmem:[%s6 + $0x40] sm:$0xff]
    %v903 = vld [vmem:[%s6 + $0x48] sm:$0xff]
    %v904 = vld [vmem:[%s6 + $0x50] sm:$0xff]
    %v905 = vld [vmem:[%s6 + $0x58] sm:$0xff]
    %v906 = vld [vmem:[%s6 + $0x60] sm:$0xff]
    %v907 = vld [vmem:[%s6 + $0x68] sm:$0xff]
    %v908 = vld [vmem:[%s6 + $0x70] sm:$0xff]
    %v909 = vld [vmem:[%s6 + $0x78] sm:$0xff]
    %v910 = vld [vmem:[%s6 + $0x80] sm:$0xff]
    %v911 = vld [vmem:[%s6 + $0x88] sm:$0xff]
    %v912 = vld [vmem:[%s6 + $0x90] sm:$0xff]
    %v913 = vld [vmem:[%s6 + $0x98] sm:$0xff]
    %v914 = vld [vmem:[%s6 + $0xa0] sm:$0xff]
    %v915 = vld [vmem:[%s6 + $0xa8] sm:$0xff]
    %v916 = vld [vmem:[%s6 + $0xb0] sm:$0xff]
    %v917 = vld [vmem:[%s6 + $0xb8] sm:$0xff]
    %v918 = vld [vmem:[%s6 + $0xc0] sm:$0xff]
    %v919 = vld [vmem:[%s6 + $0xc8] sm:$0xff]
    %v920 = vld [vmem:[%s6 + $0xd0] sm:$0xff]
    %v921 = vld [vmem:[%s6 + $0xd8] sm:$0xff]
    %v922 = vld [vmem:[%s6 + $0xe0] sm:$0xff]
    %v923 = vld [vmem:[%s6 + $0xe8] sm:$0xff]
    %v924 = vld [vmem:[%s6 + $0xf0] sm:$0xff]
    %v925 = vld [vmem:[%s6 + $0xf8] sm:$0xff]
    %v958 = vunpack.c.l.b16 %v894
    %v959 = vunpack.c.h.b16 %v894
    %v960 = vunpack.c.l.b16 %v895
    %v961 = vunpack.c.h.b16 %v895
    %v962 = vunpack.c.l.b16 %v896
    %v963 = vunpack.c.h.b16 %v896
    %v964 = vunpack.c.l.b16 %v897
    %v965 = vunpack.c.h.b16 %v897
    %v966 = vunpack.c.l.b16 %v898
    %v967 = vunpack.c.h.b16 %v898
    %v968 = vunpack.c.l.b16 %v899
    %v969 = vunpack.c.h.b16 %v899
    %v970 = vunpack.c.l.b16 %v900
    %v971 = vunpack.c.h.b16 %v900
    %v972 = vunpack.c.l.b16 %v901
    %v973 = vunpack.c.h.b16 %v901
    %v974 = vunpack.c.l.b16 %v902
    %v975 = vunpack.c.h.b16 %v902
    %v976 = vunpack.c.l.b16 %v903
    %v977 = vunpack.c.h.b16 %v903
    %v978 = vunpack.c.l.b16 %v904
    %v979 = vunpack.c.h.b16 %v904
    %v980 = vunpack.c.l.b16 %v905
    %v981 = vunpack.c.h.b16 %v905
    %v982 = vunpack.c.l.b16 %v906
    %v983 = vunpack.c.h.b16 %v906
    %v984 = vunpack.c.l.b16 %v907
    %v985 = vunpack.c.h.b16 %v907
    %v986 = vunpack.c.l.b16 %v908
    %v987 = vunpack.c.h.b16 %v908
    %v988 = vunpack.c.l.b16 %v909
    %v989 = vunpack.c.h.b16 %v909
    %v990 = vunpack.c.l.b16 %v910
    %v991 = vunpack.c.h.b16 %v910
    %v992 = vunpack.c.l.b16 %v911
    %v993 = vunpack.c.h.b16 %v911
    %v994 = vunpack.c.l.b16 %v912
    %v995 = vunpack.c.h.b16 %v912
    %v996 = vunpack.c.l.b16 %v913
    %v997 = vunpack.c.h.b16 %v913
    %v998 = vunpack.c.l.b16 %v914
    %v999 = vunpack.c.h.b16 %v914
    %v1000 = vunpack.c.l.b16 %v915
    %v1001 = vunpack.c.h.b16 %v915
    %v1002 = vunpack.c.l.b16 %v916
    %v1003 = vunpack.c.h.b16 %v916
    %v1004 = vunpack.c.l.b16 %v917
    %v1005 = vunpack.c.h.b16 %v917
    %v1006 = vunpack.c.l.b16 %v918
    %v1007 = vunpack.c.h.b16 %v918
    %v1008 = vunpack.c.l.b16 %v919
    %v1009 = vunpack.c.h.b16 %v919
    %v1010 = vunpack.c.l.b16 %v920
    %v1011 = vunpack.c.h.b16 %v920
    %v1012 = vunpack.c.l.b16 %v921
    %v1013 = vunpack.c.h.b16 %v921
    %v1014 = vunpack.c.l.b16 %v922
    %v1015 = vunpack.c.h.b16 %v922
    %v1016 = vunpack.c.l.b16 %v923
    %v1017 = vunpack.c.h.b16 %v923
    %v1018 = vunpack.c.l.b16 %v924
    %v1019 = vunpack.c.h.b16 %v924
    %v1020 = vunpack.c.l.b16 %v925
    %v1021 = vunpack.c.h.b16 %v925
    %v1022 = vpack.c.b16 %v962, %v958
    %v1023 = vpack.c.b16 %v963, %v959
    %v1024 = vpack.c.b16 %v964, %v960
    %v1025 = vpack.c.b16 %v965, %v961
    %v1026 = vpack.c.b16 %v970, %v966
    %v1027 = vpack.c.b16 %v971, %v967
    %v1028 = vpack.c.b16 %v972, %v968
    %v1029 = vpack.c.b16 %v973, %v969
    %v1030 = vpack.c.b16 %v978, %v974
    %v1031 = vpack.c.b16 %v979, %v975
    %v1032 = vpack.c.b16 %v980, %v976
    %v1033 = vpack.c.b16 %v981, %v977
    %v1034 = vpack.c.b16 %v986, %v982
    %v1035 = vpack.c.b16 %v987, %v983
    %v1036 = vpack.c.b16 %v988, %v984
    %v1037 = vpack.c.b16 %v989, %v985
    %v1038 = vpack.c.b16 %v994, %v990
    %v1039 = vpack.c.b16 %v995, %v991
    %v1040 = vpack.c.b16 %v996, %v992
    %v1041 = vpack.c.b16 %v997, %v993
    %v1042 = vpack.c.b16 %v1002, %v998
    %v1043 = vpack.c.b16 %v1003, %v999
    %v1044 = vpack.c.b16 %v1004, %v1000
    %v1045 = vpack.c.b16 %v1005, %v1001
    %v1046 = vpack.c.b16 %v1010, %v1006
    %v1047 = vpack.c.b16 %v1011, %v1007
    %v1048 = vpack.c.b16 %v1012, %v1008
    %v1049 = vpack.c.b16 %v1013, %v1009
    %v1050 = vpack.c.b16 %v1018, %v1014
    %v1051 = vpack.c.b16 %v1019, %v1015
    %v1052 = vpack.c.b16 %v1020, %v1016
    %v1053 = vpack.c.b16 %v1021, %v1017
    %1086 = vmatprep.subr.bf16.mxu0 %v1051
    %1087 = vmatpush1.bf16.msra.mxu0 %v1050
    %1088 = vmatprep.subr.bf16.mxu0 %v1047
    %1089 = vmatpush1.bf16.msra.mxu0 %v1046
    %1090 = vmatprep.subr.bf16.mxu0 %v1043
    %1091 = vmatpush1.bf16.msra.mxu0 %v1042
    %1092 = vmatprep.subr.bf16.mxu0 %v1039
    %1093 = vmatpush1.bf16.msra.mxu0 %v1038
    %1094 = vmatprep.subr.bf16.mxu0 %v1035
    %1095 = vmatpush1.bf16.msra.mxu0 %v1034
    %1096 = vmatprep.subr.bf16.mxu0 %v1031
    %1097 = vmatpush1.bf16.msra.mxu0 %v1030
    %1098 = vmatprep.subr.bf16.mxu0 %v1027
    %1099 = vmatpush1.bf16.msra.mxu0 %v1026
    %1100 = vmatprep.subr.bf16.mxu0 %v1023
    %1101 = vmatpush1.bf16.msra.mxu0 %v1022
    %1102 = vmatprep.subr.bf16.mxu0 0
    %1103 = vmatpush2.bf16.msra.mxu0 0
    %1104 = vmatprep.subr.bf16.mxu0 0
    %1105 = vmatpush2.bf16.msra.mxu0 0
    %1106 = vmatprep.subr.bf16.mxu0 0
    %1107 = vmatpush2.bf16.msra.mxu0 0
    %1108 = vmatprep.subr.bf16.mxu0 0
    %1109 = vmatpush2.bf16.msra.mxu0 0
    %1110 = vmatprep.subr.bf16.mxu0 0
    %1111 = vmatpush2.bf16.msra.mxu0 0
    %1112 = vmatprep.subr.bf16.mxu0 0
    %1113 = vmatpush2.bf16.msra.mxu0 0
    %1114 = vmatprep.subr.bf16.mxu0 0
    %1115 = vmatpush2.bf16.msra.mxu0 0
    %1116 = vmatprep.subr.bf16.mxu0 0
    %1117 = vmatpush2.bf16.msra.mxu0 0
    %1118 = vmatprep.mubr.bf16.mxu0 0
    %1119 = vmatmul.mubr.bf16.gmra.mxu0 %v893
    %v1120 = vpop.f32.mrf.mxu0
    %v1121 = vadd.f32 %v817, %v1120
    %v1122 = vpop.f32.mrf.mxu0
    %v1123 = vadd.f32 %v819, %v1122
    %v1124 = vpop.f32.mrf.mxu0
    %v1125 = vpop.f32.mrf.mxu0
    %1126 = vdwg.mxu0
    %1127 = vmatprep.subr.bf16.mxu0 %v1053
    %1128 = vmatpush1.bf16.msra.mxu0 %v1052
    %1129 = vmatprep.subr.bf16.mxu0 %v1049
    %1130 = vmatpush1.bf16.msra.mxu0 %v1048
    %1131 = vmatprep.subr.bf16.mxu0 %v1045
    %1132 = vmatpush1.bf16.msra.mxu0 %v1044
    %1133 = vmatprep.subr.bf16.mxu0 %v1041
    %1134 = vmatpush1.bf16.msra.mxu0 %v1040
    %1135 = vmatprep.subr.bf16.mxu0 %v1037
    %1136 = vmatpush1.bf16.msra.mxu0 %v1036
    %1137 = vmatprep.subr.bf16.mxu0 %v1033
    %1138 = vmatpush1.bf16.msra.mxu0 %v1032
    %1139 = vmatprep.subr.bf16.mxu0 %v1029
    %1140 = vmatpush1.bf16.msra.mxu0 %v1028
    %1141 = vmatprep.subr.bf16.mxu0 %v1025
    %1142 = vmatpush1.bf16.msra.mxu0 %v1024
    %1143 = vmatprep.subr.bf16.mxu0 0
    %1144 = vmatpush2.bf16.msra.mxu0 0
    %1145 = vmatprep.subr.bf16.mxu0 0
    %1146 = vmatpush2.bf16.msra.mxu0 0
    %1147 = vmatprep.subr.bf16.mxu0 0
    %1148 = vmatpush2.bf16.msra.mxu0 0
    %1149 = vmatprep.subr.bf16.mxu0 0
    %1150 = vmatpush2.bf16.msra.mxu0 0
    %1151 = vmatprep.subr.bf16.mxu0 0
    %1152 = vmatpush2.bf16.msra.mxu0 0
    %1153 = vmatprep.subr.bf16.mxu0 0
    %1154 = vmatpush2.bf16.msra.mxu0 0
    %1155 = vmatprep.subr.bf16.mxu0 0
    %1156 = vmatpush2.bf16.msra.mxu0 0
    %1157 = vmatprep.subr.bf16.mxu0 0
    %1158 = vmatpush2.bf16.msra.mxu0 0
    %1159 = vmatprep.mubr.bf16.mxu0 0
    %1160 = vmatmul.mubr.bf16.gmra.mxu0 %v893
    %v1161 = vpop.f32.mrf.mxu0
    %v1162 = vadd.f32 %v860, %v1161
    %v1163 = vpop.f32.mrf.mxu0
    %v1164 = vadd.f32 %v862, %v1163
    %v1165 = vpop.f32.mrf.mxu0
    %v1166 = vpop.f32.mrf.mxu0
    %1167 = vdwg.mxu0
    %v1168 = vadd.f32 %v1121, %v356
    %v1169 = vadd.f32 %v1123, %v360
    %v1170 = vadd.f32 %v1162, %v364
    %v1171 = vadd.f32 %v1164, %v368
    %v1172 = vmul.f32 %v1168, 0.5
    %v1173 = vtanh.pop %v1172
    %v1174 = vmul.f32 %v1173, 0.5
    %v1175 = vadd.f32 %v1174, 0.5
    %v1176 = vmul.f32 %v1169, 0.5
    %v1177 = vtanh.pop %v1176
    %v1178 = vmul.f32 %v1177, 0.5
    %v1179 = vadd.f32 %v1178, 0.5
    %v1180 = vtanh.pop %v1170
    %v1181 = vmul.f32 %v1171, 0.5
    %v1182 = vtanh.pop %v1181
    %v1183 = vmul.f32 %v1182, 0.5
    %v1184 = vadd.f32 %v1183, 0.5
    %v1185 = vmul.f32 %v1179, %v378
    %v1186 = vmul.f32 %v1175, %v1180
    %v1187 = vadd.f32 %v1185, %v1186
    %v1188 = vtanh.pop %v1187
    %v1189 = vmul.f32 %v1184, %v1188
    %v1190 = vpack.c.bf16 %v1189, %v1189
    %v1192 = vrot.slane %v1190, 4
    %v1194 = vsel %vm385, %v893, %v383
    %v1197 = vsel %vm385, 0, %v1192
    %1199 = vmatprep.subr.bf16.mxu0 %v679
    %1200 = vmatpush1.bf16.msra.mxu0 %v678
    %1201 = vmatprep.subr.bf16.mxu0 %v675
    %1202 = vmatpush1.bf16.msra.mxu0 %v674
    %1203 = vmatprep.subr.bf16.mxu0 %v671
    %1204 = vmatpush1.bf16.msra.mxu0 %v670
    %1205 = vmatprep.subr.bf16.mxu0 %v667
    %1206 = vmatpush1.bf16.msra.mxu0 %v666
    %1207 = vmatprep.subr.bf16.mxu0 %v663
    %1208 = vmatpush1.bf16.msra.mxu0 %v662
    %1209 = vmatprep.subr.bf16.mxu0 %v659
    %1210 = vmatpush1.bf16.msra.mxu0 %v658
    %1211 = vmatprep.subr.bf16.mxu0 %v655
    %1212 = vmatpush1.bf16.msra.mxu0 %v654
    %1213 = vmatprep.subr.bf16.mxu0 %v651
    %1214 = vmatpush1.bf16.msra.mxu0 %v650
    %1215 = vmatprep.subr.bf16.mxu0 %v711
    %1216 = vmatpush2.bf16.msra.mxu0 %v710
    %1217 = vmatprep.subr.bf16.mxu0 %v707
    %1218 = vmatpush2.bf16.msra.mxu0 %v706
    %1219 = vmatprep.subr.bf16.mxu0 %v703
    %1220 = vmatpush2.bf16.msra.mxu0 %v702
    %1221 = vmatprep.subr.bf16.mxu0 %v699
    %1222 = vmatpush2.bf16.msra.mxu0 %v698
    %1223 = vmatprep.subr.bf16.mxu0 %v695
    %1224 = vmatpush2.bf16.msra.mxu0 %v694
    %1225 = vmatprep.subr.bf16.mxu0 %v691
    %1226 = vmatpush2.bf16.msra.mxu0 %v690
    %1227 = vmatprep.subr.bf16.mxu0 %v687
    %1228 = vmatpush2.bf16.msra.mxu0 %v686
    %1229 = vmatprep.subr.bf16.mxu0 %v683
    %1230 = vmatpush2.bf16.msra.mxu0 %v682
    %1231 = vmatprep.mubr.bf16.mxu0 %v1197
    %1232 = vmatmul.mubr.bf16.gmra.mxu0 %v1194
    %v1233 = vpop.f32.mrf.mxu0
    %v1234 = vadd.f32 0.0, %v1233
    %v1235 = vpop.f32.mrf.mxu0
    %v1236 = vadd.f32 0.0, %v1235
    %v1237 = vpop.f32.mrf.mxu0
    %v1238 = vadd.f32 0.0, %v1237
    %v1239 = vpop.f32.mrf.mxu0
    %v1240 = vadd.f32 0.0, %v1239
    %1241 = vdwg.mxu0
    %1242 = vmatprep.subr.bf16.mxu0 %v681
    %1243 = vmatpush1.bf16.msra.mxu0 %v680
    %1244 = vmatprep.subr.bf16.mxu0 %v677
    %1245 = vmatpush1.bf16.msra.mxu0 %v676
    %1246 = vmatprep.subr.bf16.mxu0 %v673
    %1247 = vmatpush1.bf16.msra.mxu0 %v672
    %1248 = vmatprep.subr.bf16.mxu0 %v669
    %1249 = vmatpush1.bf16.msra.mxu0 %v668
    %1250 = vmatprep.subr.bf16.mxu0 %v665
    %1251 = vmatpush1.bf16.msra.mxu0 %v664
    %1252 = vmatprep.subr.bf16.mxu0 %v661
    %1253 = vmatpush1.bf16.msra.mxu0 %v660
    %1254 = vmatprep.subr.bf16.mxu0 %v657
    %1255 = vmatpush1.bf16.msra.mxu0 %v656
    %1256 = vmatprep.subr.bf16.mxu0 %v653
    %1257 = vmatpush1.bf16.msra.mxu0 %v652
    %1258 = vmatprep.subr.bf16.mxu0 %v713
    %1259 = vmatpush2.bf16.msra.mxu0 %v712
    %1260 = vmatprep.subr.bf16.mxu0 %v709
    %1261 = vmatpush2.bf16.msra.mxu0 %v708
    %1262 = vmatprep.subr.bf16.mxu0 %v705
    %1263 = vmatpush2.bf16.msra.mxu0 %v704
    %1264 = vmatprep.subr.bf16.mxu0 %v701
    %1265 = vmatpush2.bf16.msra.mxu0 %v700
    %1266 = vmatprep.subr.bf16.mxu0 %v697
    %1267 = vmatpush2.bf16.msra.mxu0 %v696
    %1268 = vmatprep.subr.bf16.mxu0 %v693
    %1269 = vmatpush2.bf16.msra.mxu0 %v692
    %1270 = vmatprep.subr.bf16.mxu0 %v689
    %1271 = vmatpush2.bf16.msra.mxu0 %v688
    %1272 = vmatprep.subr.bf16.mxu0 %v685
    %1273 = vmatpush2.bf16.msra.mxu0 %v684
    %1274 = vmatprep.mubr.bf16.mxu0 %v1197
    %1275 = vmatmul.mubr.bf16.gmra.mxu0 %v1194
    %v1276 = vpop.f32.mrf.mxu0
    %v1277 = vadd.f32 0.0, %v1276
    %v1278 = vpop.f32.mrf.mxu0
    %v1279 = vadd.f32 0.0, %v1278
    %v1280 = vpop.f32.mrf.mxu0
    %v1281 = vadd.f32 0.0, %v1280
    %v1282 = vpop.f32.mrf.mxu0
    %v1283 = vadd.f32 0.0, %v1282
    %1284 = vdwg.mxu0
    %s1285 = smul.u32 1, 4
    %s1286 = smul.addr %s1285, 8
    %s1287 = scalar_lea.vmem [#allocation2], %s1286
    %v1288 = vld [vmem:[%s1287] sm:$0xff]
    %v1289 = vld [vmem:[%s1287 + $0x8] sm:$0xff]
    %v1290 = vld [vmem:[%s1287 + $0x10] sm:$0xff]
    %v1291 = vld [vmem:[%s1287 + $0x18] sm:$0xff]
    %v1292 = vadd.f32 %v1288, %v1234
    %v1293 = vadd.f32 %v1289, %v1236
    %v1294 = vadd.f32 %v1290, %v1277
    %v1295 = vadd.f32 %v1291, %v1279
    %v1296 = vmul.f32 %v1292, 0.5
    %v1297 = vtanh.pop %v1296
    %v1298 = vmul.f32 %v1297, 0.5
    %v1299 = vadd.f32 %v1298, 0.5
    %v1300 = vmul.f32 %v1293, 0.5
    %v1301 = vtanh.pop %v1300
    %v1302 = vmul.f32 %v1301, 0.5
    %v1303 = vadd.f32 %v1302, 0.5
    %v1304 = vtanh.pop %v1294
    %v1305 = vmul.f32 %v1295, 0.5
    %v1306 = vtanh.pop %v1305
    %v1307 = vmul.f32 %v1306, 0.5
    %v1308 = vadd.f32 %v1307, 0.5
    %v1309 = vmul.f32 %v1303, %v890
    %v1310 = vmul.f32 %v1299, %v1304
    %v1311 = vadd.f32 %v1309, %v1310
    %v1312 = vtanh.pop %v1311
    %v1313 = vmul.f32 %v1308, %v1312
    %v1314 = vpack.c.bf16 %v1313, %v1313
    %1315 = vmatprep.subr.bf16.mxu0 %v1051
    %1316 = vmatpush1.bf16.msra.mxu0 %v1050
    %1317 = vmatprep.subr.bf16.mxu0 %v1047
    %1318 = vmatpush1.bf16.msra.mxu0 %v1046
    %1319 = vmatprep.subr.bf16.mxu0 %v1043
    %1320 = vmatpush1.bf16.msra.mxu0 %v1042
    %1321 = vmatprep.subr.bf16.mxu0 %v1039
    %1322 = vmatpush1.bf16.msra.mxu0 %v1038
    %1323 = vmatprep.subr.bf16.mxu0 %v1035
    %1324 = vmatpush1.bf16.msra.mxu0 %v1034
    %1325 = vmatprep.subr.bf16.mxu0 %v1031
    %1326 = vmatpush1.bf16.msra.mxu0 %v1030
    %1327 = vmatprep.subr.bf16.mxu0 %v1027
    %1328 = vmatpush1.bf16.msra.mxu0 %v1026
    %1329 = vmatprep.subr.bf16.mxu0 %v1023
    %1330 = vmatpush1.bf16.msra.mxu0 %v1022
    %1331 = vmatprep.subr.bf16.mxu0 0
    %1332 = vmatpush2.bf16.msra.mxu0 0
    %1333 = vmatprep.subr.bf16.mxu0 0
    %1334 = vmatpush2.bf16.msra.mxu0 0
    %1335 = vmatprep.subr.bf16.mxu0 0
    %1336 = vmatpush2.bf16.msra.mxu0 0
    %1337 = vmatprep.subr.bf16.mxu0 0
    %1338 = vmatpush2.bf16.msra.mxu0 0
    %1339 = vmatprep.subr.bf16.mxu0 0
    %1340 = vmatpush2.bf16.msra.mxu0 0
    %1341 = vmatprep.subr.bf16.mxu0 0
    %1342 = vmatpush2.bf16.msra.mxu0 0
    %1343 = vmatprep.subr.bf16.mxu0 0
    %1344 = vmatpush2.bf16.msra.mxu0 0
    %1345 = vmatprep.subr.bf16.mxu0 0
    %1346 = vmatpush2.bf16.msra.mxu0 0
    %1347 = vmatprep.mubr.bf16.mxu0 0
    %1348 = vmatmul.mubr.bf16.gmra.mxu0 %v1314
    %v1349 = vpop.f32.mrf.mxu0
    %v1350 = vadd.f32 %v1238, %v1349
    %v1351 = vpop.f32.mrf.mxu0
    %v1352 = vadd.f32 %v1240, %v1351
    %v1353 = vpop.f32.mrf.mxu0
    %v1354 = vpop.f32.mrf.mxu0
    %1355 = vdwg.mxu0
    %1356 = vmatprep.subr.bf16.mxu0 %v1053
    %1357 = vmatpush1.bf16.msra.mxu0 %v1052
    %1358 = vmatprep.subr.bf16.mxu0 %v1049
    %1359 = vmatpush1.bf16.msra.mxu0 %v1048
    %1360 = vmatprep.subr.bf16.mxu0 %v1045
    %1361 = vmatpush1.bf16.msra.mxu0 %v1044
    %1362 = vmatprep.subr.bf16.mxu0 %v1041
    %1363 = vmatpush1.bf16.msra.mxu0 %v1040
    %1364 = vmatprep.subr.bf16.mxu0 %v1037
    %1365 = vmatpush1.bf16.msra.mxu0 %v1036
    %1366 = vmatprep.subr.bf16.mxu0 %v1033
    %1367 = vmatpush1.bf16.msra.mxu0 %v1032
    %1368 = vmatprep.subr.bf16.mxu0 %v1029
    %1369 = vmatpush1.bf16.msra.mxu0 %v1028
    %1370 = vmatprep.subr.bf16.mxu0 %v1025
    %1371 = vmatpush1.bf16.msra.mxu0 %v1024
    %1372 = vmatprep.subr.bf16.mxu0 0
    %1373 = vmatpush2.bf16.msra.mxu0 0
    %1374 = vmatprep.subr.bf16.mxu0 0
    %1375 = vmatpush2.bf16.msra.mxu0 0
    %1376 = vmatprep.subr.bf16.mxu0 0
    %1377 = vmatpush2.bf16.msra.mxu0 0
    %1378 = vmatprep.subr.bf16.mxu0 0
    %1379 = vmatpush2.bf16.msra.mxu0 0
    %1380 = vmatprep.subr.bf16.mxu0 0
    %1381 = vmatpush2.bf16.msra.mxu0 0
    %1382 = vmatprep.subr.bf16.mxu0 0
    %1383 = vmatpush2.bf16.msra.mxu0 0
    %1384 = vmatprep.subr.bf16.mxu0 0
    %1385 = vmatpush2.bf16.msra.mxu0 0
    %1386 = vmatprep.subr.bf16.mxu0 0
    %1387 = vmatpush2.bf16.msra.mxu0 0
    %1388 = vmatprep.mubr.bf16.mxu0 0
    %1389 = vmatmul.mubr.bf16.gmra.mxu0 %v1314
    %v1390 = vpop.f32.mrf.mxu0
    %v1391 = vadd.f32 %v1281, %v1390
    %v1392 = vpop.f32.mrf.mxu0
    %v1393 = vadd.f32 %v1283, %v1392
    %v1394 = vpop.f32.mrf.mxu0
    %v1395 = vpop.f32.mrf.mxu0
    %1396 = vdwg.mxu0
    %v1397 = vadd.f32 %v1350, %v356
    %v1398 = vadd.f32 %v1352, %v360
    %v1399 = vadd.f32 %v1391, %v364
    %v1400 = vadd.f32 %v1393, %v368
    %v1401 = vmul.f32 %v1397, 0.5
    %v1402 = vtanh.pop %v1401
    %v1403 = vmul.f32 %v1402, 0.5
    %v1404 = vadd.f32 %v1403, 0.5
    %v1405 = vmul.f32 %v1398, 0.5
    %v1406 = vtanh.pop %v1405
    %v1407 = vmul.f32 %v1406, 0.5
    %v1408 = vadd.f32 %v1407, 0.5
    %v1409 = vtanh.pop %v1399
    %v1410 = vmul.f32 %v1400, 0.5
    %v1411 = vtanh.pop %v1410
    %v1412 = vmul.f32 %v1411, 0.5
    %v1413 = vadd.f32 %v1412, 0.5
    %v1414 = vmul.f32 %v1408, %v1187
    %v1415 = vmul.f32 %v1404, %v1409
    %v1416 = vadd.f32 %v1414, %v1415
    %v1417 = vtanh.pop %v1416
    %v1418 = vmul.f32 %v1413, %v1417
    %v1419 = vpack.c.bf16 %v1418, %v1418
    %v1421 = vrot.slane %v1419, 4
    %v1423 = vsel %vm385, %v1314, %v383
    %v1426 = vsel %vm385, 0, %v1421
    %1428 = vmatprep.subr.bf16.mxu0 %v679
    %1429 = vmatpush1.bf16.msra.mxu0 %v678
    %1430 = vmatprep.subr.bf16.mxu0 %v675
    %1431 = vmatpush1.bf16.msra.mxu0 %v674
    %1432 = vmatprep.subr.bf16.mxu0 %v671
    %1433 = vmatpush1.bf16.msra.mxu0 %v670
    %1434 = vmatprep.subr.bf16.mxu0 %v667
    %1435 = vmatpush1.bf16.msra.mxu0 %v666
    %1436 = vmatprep.subr.bf16.mxu0 %v663
    %1437 = vmatpush1.bf16.msra.mxu0 %v662
    %1438 = vmatprep.subr.bf16.mxu0 %v659
    %1439 = vmatpush1.bf16.msra.mxu0 %v658
    %1440 = vmatprep.subr.bf16.mxu0 %v655
    %1441 = vmatpush1.bf16.msra.mxu0 %v654
    %1442 = vmatprep.subr.bf16.mxu0 %v651
    %1443 = vmatpush1.bf16.msra.mxu0 %v650
    %1444 = vmatprep.subr.bf16.mxu0 %v711
    %1445 = vmatpush2.bf16.msra.mxu0 %v710
    %1446 = vmatprep.subr.bf16.mxu0 %v707
    %1447 = vmatpush2.bf16.msra.mxu0 %v706
    %1448 = vmatprep.subr.bf16.mxu0 %v703
    %1449 = vmatpush2.bf16.msra.mxu0 %v702
    %1450 = vmatprep.subr.bf16.mxu0 %v699
    %1451 = vmatpush2.bf16.msra.mxu0 %v698
    %1452 = vmatprep.subr.bf16.mxu0 %v695
    %1453 = vmatpush2.bf16.msra.mxu0 %v694
    %1454 = vmatprep.subr.bf16.mxu0 %v691
    %1455 = vmatpush2.bf16.msra.mxu0 %v690
    %1456 = vmatprep.subr.bf16.mxu0 %v687
    %1457 = vmatpush2.bf16.msra.mxu0 %v686
    %1458 = vmatprep.subr.bf16.mxu0 %v683
    %1459 = vmatpush2.bf16.msra.mxu0 %v682
    %1460 = vmatprep.mubr.bf16.mxu0 %v1426
    %1461 = vmatmul.mubr.bf16.gmra.mxu0 %v1423
    %v1462 = vpop.f32.mrf.mxu0
    %v1463 = vadd.f32 0.0, %v1462
    %v1464 = vpop.f32.mrf.mxu0
    %v1465 = vadd.f32 0.0, %v1464
    %v1466 = vpop.f32.mrf.mxu0
    %v1467 = vadd.f32 0.0, %v1466
    %v1468 = vpop.f32.mrf.mxu0
    %v1469 = vadd.f32 0.0, %v1468
    %1470 = vdwg.mxu0
    %1471 = vmatprep.subr.bf16.mxu0 %v681
    %1472 = vmatpush1.bf16.msra.mxu0 %v680
    %1473 = vmatprep.subr.bf16.mxu0 %v677
    %1474 = vmatpush1.bf16.msra.mxu0 %v676
    %1475 = vmatprep.subr.bf16.mxu0 %v673
    %1476 = vmatpush1.bf16.msra.mxu0 %v672
    %1477 = vmatprep.subr.bf16.mxu0 %v669
    %1478 = vmatpush1.bf16.msra.mxu0 %v668
    %1479 = vmatprep.subr.bf16.mxu0 %v665
    %1480 = vmatpush1.bf16.msra.mxu0 %v664
    %1481 = vmatprep.subr.bf16.mxu0 %v661
    %1482 = vmatpush1.bf16.msra.mxu0 %v660
    %1483 = vmatprep.subr.bf16.mxu0 %v657
    %1484 = vmatpush1.bf16.msra.mxu0 %v656
    %1485 = vmatprep.subr.bf16.mxu0 %v653
    %1486 = vmatpush1.bf16.msra.mxu0 %v652
    %1487 = vmatprep.subr.bf16.mxu0 %v713
    %1488 = vmatpush2.bf16.msra.mxu0 %v712
    %1489 = vmatprep.subr.bf16.mxu0 %v709
    %1490 = vmatpush2.bf16.msra.mxu0 %v708
    %1491 = vmatprep.subr.bf16.mxu0 %v705
    %1492 = vmatpush2.bf16.msra.mxu0 %v704
    %1493 = vmatprep.subr.bf16.mxu0 %v701
    %1494 = vmatpush2.bf16.msra.mxu0 %v700
    %1495 = vmatprep.subr.bf16.mxu0 %v697
    %1496 = vmatpush2.bf16.msra.mxu0 %v696
    %1497 = vmatprep.subr.bf16.mxu0 %v693
    %1498 = vmatpush2.bf16.msra.mxu0 %v692
    %1499 = vmatprep.subr.bf16.mxu0 %v689
    %1500 = vmatpush2.bf16.msra.mxu0 %v688
    %1501 = vmatprep.subr.bf16.mxu0 %v685
    %1502 = vmatpush2.bf16.msra.mxu0 %v684
    %1503 = vmatprep.mubr.bf16.mxu0 %v1426
    %1504 = vmatmul.mubr.bf16.gmra.mxu0 %v1423
    %v1505 = vpop.f32.mrf.mxu0
    %v1506 = vadd.f32 0.0, %v1505
    %v1507 = vpop.f32.mrf.mxu0
    %v1508 = vadd.f32 0.0, %v1507
    %v1509 = vpop.f32.mrf.mxu0
    %v1510 = vadd.f32 0.0, %v1509
    %v1511 = vpop.f32.mrf.mxu0
    %v1512 = vadd.f32 0.0, %v1511
    %1513 = vdwg.mxu0
    %s1514 = smul.u32 2, 4
    %s1515 = smul.addr %s1514, 8
    %s1516 = scalar_lea.vmem [#allocation2], %s1515
    %v1517 = vld [vmem:[%s1516] sm:$0xff]
    %v1518 = vld [vmem:[%s1516 + $0x8] sm:$0xff]
    %v1519 = vld [vmem:[%s1516 + $0x10] sm:$0xff]
    %v1520 = vld [vmem:[%s1516 + $0x18] sm:$0xff]
    %v1521 = vadd.f32 %v1517, %v1463
    %v1522 = vadd.f32 %v1518, %v1465
    %v1523 = vadd.f32 %v1519, %v1506
    %v1524 = vadd.f32 %v1520, %v1508
    %v1525 = vmul.f32 %v1521, 0.5
    %v1526 = vtanh.pop %v1525
    %v1527 = vmul.f32 %v1526, 0.5
    %v1528 = vadd.f32 %v1527, 0.5
    %v1529 = vmul.f32 %v1522, 0.5
    %v1530 = vtanh.pop %v1529
    %v1531 = vmul.f32 %v1530, 0.5
    %v1532 = vadd.f32 %v1531, 0.5
    %v1533 = vtanh.pop %v1523
    %v1534 = vmul.f32 %v1524, 0.5
    %v1535 = vtanh.pop %v1534
    %v1536 = vmul.f32 %v1535, 0.5
    %v1537 = vadd.f32 %v1536, 0.5
    %v1538 = vmul.f32 %v1532, %v1311
    %v1539 = vmul.f32 %v1528, %v1533
    %v1540 = vadd.f32 %v1538, %v1539
    %v1541 = vtanh.pop %v1540
    %v1542 = vmul.f32 %v1537, %v1541
    %v1543 = vpack.c.bf16 %v1542, %v1542
    %1544 = vmatprep.subr.bf16.mxu0 %v1051
    %1545 = vmatpush1.bf16.msra.mxu0 %v1050
    %1546 = vmatprep.subr.bf16.mxu0 %v1047
    %1547 = vmatpush1.bf16.msra.mxu0 %v1046
    %1548 = vmatprep.subr.bf16.mxu0 %v1043
    %1549 = vmatpush1.bf16.msra.mxu0 %v1042
    %1550 = vmatprep.subr.bf16.mxu0 %v1039
    %1551 = vmatpush1.bf16.msra.mxu0 %v1038
    %1552 = vmatprep.subr.bf16.mxu0 %v1035
    %1553 = vmatpush1.bf16.msra.mxu0 %v1034
    %1554 = vmatprep.subr.bf16.mxu0 %v1031
    %1555 = vmatpush1.bf16.msra.mxu0 %v1030
    %1556 = vmatprep.subr.bf16.mxu0 %v1027
    %1557 = vmatpush1.bf16.msra.mxu0 %v1026
    %1558 = vmatprep.subr.bf16.mxu0 %v1023
    %1559 = vmatpush1.bf16.msra.mxu0 %v1022
    %1560 = vmatprep.subr.bf16.mxu0 0
    %1561 = vmatpush2.bf16.msra.mxu0 0
    %1562 = vmatprep.subr.bf16.mxu0 0
    %1563 = vmatpush2.bf16.msra.mxu0 0
    %1564 = vmatprep.subr.bf16.mxu0 0
    %1565 = vmatpush2.bf16.msra.mxu0 0
    %1566 = vmatprep.subr.bf16.mxu0 0
    %1567 = vmatpush2.bf16.msra.mxu0 0
    %1568 = vmatprep.subr.bf16.mxu0 0
    %1569 = vmatpush2.bf16.msra.mxu0 0
    %1570 = vmatprep.subr.bf16.mxu0 0
    %1571 = vmatpush2.bf16.msra.mxu0 0
    %1572 = vmatprep.subr.bf16.mxu0 0
    %1573 = vmatpush2.bf16.msra.mxu0 0
    %1574 = vmatprep.subr.bf16.mxu0 0
    %1575 = vmatpush2.bf16.msra.mxu0 0
    %1576 = vmatprep.mubr.bf16.mxu0 0
    %1577 = vmatmul.mubr.bf16.gmra.mxu0 %v1543
    %v1578 = vpop.f32.mrf.mxu0
    %v1579 = vadd.f32 %v1467, %v1578
    %v1580 = vpop.f32.mrf.mxu0
    %v1581 = vadd.f32 %v1469, %v1580
    %v1582 = vpop.f32.mrf.mxu0
    %v1583 = vpop.f32.mrf.mxu0
    %1584 = vdwg.mxu0
    %1585 = vmatprep.subr.bf16.mxu0 %v1053
    %1586 = vmatpush1.bf16.msra.mxu0 %v1052
    %1587 = vmatprep.subr.bf16.mxu0 %v1049
    %1588 = vmatpush1.bf16.msra.mxu0 %v1048
    %1589 = vmatprep.subr.bf16.mxu0 %v1045
    %1590 = vmatpush1.bf16.msra.mxu0 %v1044
    %1591 = vmatprep.subr.bf16.mxu0 %v1041
    %1592 = vmatpush1.bf16.msra.mxu0 %v1040
    %1593 = vmatprep.subr.bf16.mxu0 %v1037
    %1594 = vmatpush1.bf16.msra.mxu0 %v1036
    %1595 = vmatprep.subr.bf16.mxu0 %v1033
    %1596 = vmatpush1.bf16.msra.mxu0 %v1032
    %1597 = vmatprep.subr.bf16.mxu0 %v1029
    %1598 = vmatpush1.bf16.msra.mxu0 %v1028
    %1599 = vmatprep.subr.bf16.mxu0 %v1025
    %1600 = vmatpush1.bf16.msra.mxu0 %v1024
    %1601 = vmatprep.subr.bf16.mxu0 0
    %1602 = vmatpush2.bf16.msra.mxu0 0
    %1603 = vmatprep.subr.bf16.mxu0 0
    %1604 = vmatpush2.bf16.msra.mxu0 0
    %1605 = vmatprep.subr.bf16.mxu0 0
    %1606 = vmatpush2.bf16.msra.mxu0 0
    %1607 = vmatprep.subr.bf16.mxu0 0
    %1608 = vmatpush2.bf16.msra.mxu0 0
    %1609 = vmatprep.subr.bf16.mxu0 0
    %1610 = vmatpush2.bf16.msra.mxu0 0
    %1611 = vmatprep.subr.bf16.mxu0 0
    %1612 = vmatpush2.bf16.msra.mxu0 0
    %1613 = vmatprep.subr.bf16.mxu0 0
    %1614 = vmatpush2.bf16.msra.mxu0 0
    %1615 = vmatprep.subr.bf16.mxu0 0
    %1616 = vmatpush2.bf16.msra.mxu0 0
    %1617 = vmatprep.mubr.bf16.mxu0 0
    %1618 = vmatmul.mubr.bf16.gmra.mxu0 %v1543
    %v1619 = vpop.f32.mrf.mxu0
    %v1620 = vadd.f32 %v1510, %v1619
    %v1621 = vpop.f32.mrf.mxu0
    %v1622 = vadd.f32 %v1512, %v1621
    %v1623 = vpop.f32.mrf.mxu0
    %v1624 = vpop.f32.mrf.mxu0
    %1625 = vdwg.mxu0
    %v1626 = vadd.f32 %v1579, %v356
    %v1627 = vadd.f32 %v1581, %v360
    %v1628 = vadd.f32 %v1620, %v364
    %v1629 = vadd.f32 %v1622, %v368
    %v1630 = vmul.f32 %v1626, 0.5
    %v1631 = vtanh.pop %v1630
    %v1632 = vmul.f32 %v1631, 0.5
    %v1633 = vadd.f32 %v1632, 0.5
    %v1634 = vmul.f32 %v1627, 0.5
    %v1635 = vtanh.pop %v1634
    %v1636 = vmul.f32 %v1635, 0.5
    %v1637 = vadd.f32 %v1636, 0.5
    %v1638 = vtanh.pop %v1628
    %v1639 = vmul.f32 %v1629, 0.5
    %v1640 = vtanh.pop %v1639
    %v1641 = vmul.f32 %v1640, 0.5
    %v1642 = vadd.f32 %v1641, 0.5
    %v1643 = vmul.f32 %v1637, %v1416
    %v1644 = vmul.f32 %v1633, %v1638
    %v1645 = vadd.f32 %v1643, %v1644
    %v1646 = vtanh.pop %v1645
    %v1647 = vmul.f32 %v1642, %v1646
    %v1648 = vpack.c.bf16 %v1647, %v1647
    %v1650 = vrot.slane %v1648, 4
    %v1652 = vsel %vm385, %v1543, %v383
    %v1655 = vsel %vm385, 0, %v1650
    %1657 = vmatprep.subr.bf16.mxu0 %v679
    %1658 = vmatpush1.bf16.msra.mxu0 %v678
    %1659 = vmatprep.subr.bf16.mxu0 %v675
    %1660 = vmatpush1.bf16.msra.mxu0 %v674
    %1661 = vmatprep.subr.bf16.mxu0 %v671
    %1662 = vmatpush1.bf16.msra.mxu0 %v670
    %1663 = vmatprep.subr.bf16.mxu0 %v667
    %1664 = vmatpush1.bf16.msra.mxu0 %v666
    %1665 = vmatprep.subr.bf16.mxu0 %v663
    %1666 = vmatpush1.bf16.msra.mxu0 %v662
    %1667 = vmatprep.subr.bf16.mxu0 %v659
    %1668 = vmatpush1.bf16.msra.mxu0 %v658
    %1669 = vmatprep.subr.bf16.mxu0 %v655
    %1670 = vmatpush1.bf16.msra.mxu0 %v654
    %1671 = vmatprep.subr.bf16.mxu0 %v651
    %1672 = vmatpush1.bf16.msra.mxu0 %v650
    %1673 = vmatprep.subr.bf16.mxu0 %v711
    %1674 = vmatpush2.bf16.msra.mxu0 %v710
    %1675 = vmatprep.subr.bf16.mxu0 %v707
    %1676 = vmatpush2.bf16.msra.mxu0 %v706
    %1677 = vmatprep.subr.bf16.mxu0 %v703
    %1678 = vmatpush2.bf16.msra.mxu0 %v702
    %1679 = vmatprep.subr.bf16.mxu0 %v699
    %1680 = vmatpush2.bf16.msra.mxu0 %v698
    %1681 = vmatprep.subr.bf16.mxu0 %v695
    %1682 = vmatpush2.bf16.msra.mxu0 %v694
    %1683 = vmatprep.subr.bf16.mxu0 %v691
    %1684 = vmatpush2.bf16.msra.mxu0 %v690
    %1685 = vmatprep.subr.bf16.mxu0 %v687
    %1686 = vmatpush2.bf16.msra.mxu0 %v686
    %1687 = vmatprep.subr.bf16.mxu0 %v683
    %1688 = vmatpush2.bf16.msra.mxu0 %v682
    %1689 = vmatprep.mubr.bf16.mxu0 %v1655
    %1690 = vmatmul.mubr.bf16.gmra.mxu0 %v1652
    %v1691 = vpop.f32.mrf.mxu0
    %v1692 = vadd.f32 0.0, %v1691
    %v1693 = vpop.f32.mrf.mxu0
    %v1694 = vadd.f32 0.0, %v1693
    %v1695 = vpop.f32.mrf.mxu0
    %v1696 = vadd.f32 0.0, %v1695
    %v1697 = vpop.f32.mrf.mxu0
    %v1698 = vadd.f32 0.0, %v1697
    %1699 = vdwg.mxu0
    %1700 = vmatprep.subr.bf16.mxu0 %v681
    %1701 = vmatpush1.bf16.msra.mxu0 %v680
    %1702 = vmatprep.subr.bf16.mxu0 %v677
    %1703 = vmatpush1.bf16.msra.mxu0 %v676
    %1704 = vmatprep.subr.bf16.mxu0 %v673
    %1705 = vmatpush1.bf16.msra.mxu0 %v672
    %1706 = vmatprep.subr.bf16.mxu0 %v669
    %1707 = vmatpush1.bf16.msra.mxu0 %v668
    %1708 = vmatprep.subr.bf16.mxu0 %v665
    %1709 = vmatpush1.bf16.msra.mxu0 %v664
    %1710 = vmatprep.subr.bf16.mxu0 %v661
    %1711 = vmatpush1.bf16.msra.mxu0 %v660
    %1712 = vmatprep.subr.bf16.mxu0 %v657
    %1713 = vmatpush1.bf16.msra.mxu0 %v656
    %1714 = vmatprep.subr.bf16.mxu0 %v653
    %1715 = vmatpush1.bf16.msra.mxu0 %v652
    %1716 = vmatprep.subr.bf16.mxu0 %v713
    %1717 = vmatpush2.bf16.msra.mxu0 %v712
    %1718 = vmatprep.subr.bf16.mxu0 %v709
    %1719 = vmatpush2.bf16.msra.mxu0 %v708
    %1720 = vmatprep.subr.bf16.mxu0 %v705
    %1721 = vmatpush2.bf16.msra.mxu0 %v704
    %1722 = vmatprep.subr.bf16.mxu0 %v701
    %1723 = vmatpush2.bf16.msra.mxu0 %v700
    %1724 = vmatprep.subr.bf16.mxu0 %v697
    %1725 = vmatpush2.bf16.msra.mxu0 %v696
    %1726 = vmatprep.subr.bf16.mxu0 %v693
    %1727 = vmatpush2.bf16.msra.mxu0 %v692
    %1728 = vmatprep.subr.bf16.mxu0 %v689
    %1729 = vmatpush2.bf16.msra.mxu0 %v688
    %1730 = vmatprep.subr.bf16.mxu0 %v685
    %1731 = vmatpush2.bf16.msra.mxu0 %v684
    %1732 = vmatprep.mubr.bf16.mxu0 %v1655
    %1733 = vmatmul.mubr.bf16.gmra.mxu0 %v1652
    %v1734 = vpop.f32.mrf.mxu0
    %v1735 = vadd.f32 0.0, %v1734
    %v1736 = vpop.f32.mrf.mxu0
    %v1737 = vadd.f32 0.0, %v1736
    %v1738 = vpop.f32.mrf.mxu0
    %v1739 = vadd.f32 0.0, %v1738
    %v1740 = vpop.f32.mrf.mxu0
    %v1741 = vadd.f32 0.0, %v1740
    %1742 = vdwg.mxu0
    %s1743 = smul.u32 3, 4
    %s1744 = smul.addr %s1743, 8
    %s1745 = scalar_lea.vmem [#allocation2], %s1744
    %v1746 = vld [vmem:[%s1745] sm:$0xff]
    %v1747 = vld [vmem:[%s1745 + $0x8] sm:$0xff]
    %v1748 = vld [vmem:[%s1745 + $0x10] sm:$0xff]
    %v1749 = vld [vmem:[%s1745 + $0x18] sm:$0xff]
    %v1750 = vadd.f32 %v1746, %v1692
    %v1751 = vadd.f32 %v1747, %v1694
    %v1752 = vadd.f32 %v1748, %v1735
    %v1753 = vadd.f32 %v1749, %v1737
    %v1754 = vmul.f32 %v1750, 0.5
    %v1755 = vtanh.pop %v1754
    %v1756 = vmul.f32 %v1755, 0.5
    %v1757 = vadd.f32 %v1756, 0.5
    %v1758 = vmul.f32 %v1751, 0.5
    %v1759 = vtanh.pop %v1758
    %v1760 = vmul.f32 %v1759, 0.5
    %v1761 = vadd.f32 %v1760, 0.5
    %v1762 = vtanh.pop %v1752
    %v1763 = vmul.f32 %v1753, 0.5
    %v1764 = vtanh.pop %v1763
    %v1765 = vmul.f32 %v1764, 0.5
    %v1766 = vadd.f32 %v1765, 0.5
    %v1767 = vmul.f32 %v1761, %v1540
    %v1768 = vmul.f32 %v1757, %v1762
    %v1769 = vadd.f32 %v1767, %v1768
    %v1770 = vtanh.pop %v1769
    %v1771 = vmul.f32 %v1766, %v1770
    %v1772 = vpack.c.bf16 %v1771, %v1771
    %1773 = vmatprep.subr.bf16.mxu0 %v1051
    %1774 = vmatpush1.bf16.msra.mxu0 %v1050
    %1775 = vmatprep.subr.bf16.mxu0 %v1047
    %1776 = vmatpush1.bf16.msra.mxu0 %v1046
    %1777 = vmatprep.subr.bf16.mxu0 %v1043
    %1778 = vmatpush1.bf16.msra.mxu0 %v1042
    %1779 = vmatprep.subr.bf16.mxu0 %v1039
    %1780 = vmatpush1.bf16.msra.mxu0 %v1038
    %1781 = vmatprep.subr.bf16.mxu0 %v1035
    %1782 = vmatpush1.bf16.msra.mxu0 %v1034
    %1783 = vmatprep.subr.bf16.mxu0 %v1031
    %1784 = vmatpush1.bf16.msra.mxu0 %v1030
    %1785 = vmatprep.subr.bf16.mxu0 %v1027
    %1786 = vmatpush1.bf16.msra.mxu0 %v1026
    %1787 = vmatprep.subr.bf16.mxu0 %v1023
    %1788 = vmatpush1.bf16.msra.mxu0 %v1022
    %1789 = vmatprep.subr.bf16.mxu0 0
    %1790 = vmatpush2.bf16.msra.mxu0 0
    %1791 = vmatprep.subr.bf16.mxu0 0
    %1792 = vmatpush2.bf16.msra.mxu0 0
    %1793 = vmatprep.subr.bf16.mxu0 0
    %1794 = vmatpush2.bf16.msra.mxu0 0
    %1795 = vmatprep.subr.bf16.mxu0 0
    %1796 = vmatpush2.bf16.msra.mxu0 0
    %1797 = vmatprep.subr.bf16.mxu0 0
    %1798 = vmatpush2.bf16.msra.mxu0 0
    %1799 = vmatprep.subr.bf16.mxu0 0
    %1800 = vmatpush2.bf16.msra.mxu0 0
    %1801 = vmatprep.subr.bf16.mxu0 0
    %1802 = vmatpush2.bf16.msra.mxu0 0
    %1803 = vmatprep.subr.bf16.mxu0 0
    %1804 = vmatpush2.bf16.msra.mxu0 0
    %1805 = vmatprep.mubr.bf16.mxu0 0
    %1806 = vmatmul.mubr.bf16.gmra.mxu0 %v1772
    %v1807 = vpop.f32.mrf.mxu0
    %v1808 = vadd.f32 %v1696, %v1807
    %v1809 = vpop.f32.mrf.mxu0
    %v1810 = vadd.f32 %v1698, %v1809
    %v1811 = vpop.f32.mrf.mxu0
    %v1812 = vpop.f32.mrf.mxu0
    %1813 = vdwg.mxu0
    %1814 = vmatprep.subr.bf16.mxu0 %v1053
    %1815 = vmatpush1.bf16.msra.mxu0 %v1052
    %1816 = vmatprep.subr.bf16.mxu0 %v1049
    %1817 = vmatpush1.bf16.msra.mxu0 %v1048
    %1818 = vmatprep.subr.bf16.mxu0 %v1045
    %1819 = vmatpush1.bf16.msra.mxu0 %v1044
    %1820 = vmatprep.subr.bf16.mxu0 %v1041
    %1821 = vmatpush1.bf16.msra.mxu0 %v1040
    %1822 = vmatprep.subr.bf16.mxu0 %v1037
    %1823 = vmatpush1.bf16.msra.mxu0 %v1036
    %1824 = vmatprep.subr.bf16.mxu0 %v1033
    %1825 = vmatpush1.bf16.msra.mxu0 %v1032
    %1826 = vmatprep.subr.bf16.mxu0 %v1029
    %1827 = vmatpush1.bf16.msra.mxu0 %v1028
    %1828 = vmatprep.subr.bf16.mxu0 %v1025
    %1829 = vmatpush1.bf16.msra.mxu0 %v1024
    %1830 = vmatprep.subr.bf16.mxu0 0
    %1831 = vmatpush2.bf16.msra.mxu0 0
    %1832 = vmatprep.subr.bf16.mxu0 0
    %1833 = vmatpush2.bf16.msra.mxu0 0
    %1834 = vmatprep.subr.bf16.mxu0 0
    %1835 = vmatpush2.bf16.msra.mxu0 0
    %1836 = vmatprep.subr.bf16.mxu0 0
    %1837 = vmatpush2.bf16.msra.mxu0 0
    %1838 = vmatprep.subr.bf16.mxu0 0
    %1839 = vmatpush2.bf16.msra.mxu0 0
    %1840 = vmatprep.subr.bf16.mxu0 0
    %1841 = vmatpush2.bf16.msra.mxu0 0
    %1842 = vmatprep.subr.bf16.mxu0 0
    %1843 = vmatpush2.bf16.msra.mxu0 0
    %1844 = vmatprep.subr.bf16.mxu0 0
    %1845 = vmatpush2.bf16.msra.mxu0 0
    %1846 = vmatprep.mubr.bf16.mxu0 0
    %1847 = vmatmul.mubr.bf16.gmra.mxu0 %v1772
    %v1848 = vpop.f32.mrf.mxu0
    %v1849 = vadd.f32 %v1739, %v1848
    %v1850 = vpop.f32.mrf.mxu0
    %v1851 = vadd.f32 %v1741, %v1850
    %v1852 = vpop.f32.mrf.mxu0
    %v1853 = vpop.f32.mrf.mxu0
    %1854 = vdwg.mxu0
    %v1855 = vadd.f32 %v1808, %v356
    %v1856 = vadd.f32 %v1810, %v360
    %v1857 = vadd.f32 %v1849, %v364
    %v1858 = vadd.f32 %v1851, %v368
    %v1859 = vmul.f32 %v1855, 0.5
    %v1860 = vtanh.pop %v1859
    %v1861 = vmul.f32 %v1860, 0.5
    %v1862 = vadd.f32 %v1861, 0.5
    %v1863 = vmul.f32 %v1856, 0.5
    %v1864 = vtanh.pop %v1863
    %v1865 = vmul.f32 %v1864, 0.5
    %v1866 = vadd.f32 %v1865, 0.5
    %v1867 = vtanh.pop %v1857
    %v1868 = vmul.f32 %v1858, 0.5
    %v1869 = vtanh.pop %v1868
    %v1870 = vmul.f32 %v1869, 0.5
    %v1871 = vadd.f32 %v1870, 0.5
    %v1872 = vmul.f32 %v1866, %v1645
    %v1873 = vmul.f32 %v1862, %v1867
    %v1874 = vadd.f32 %v1872, %v1873
    %v1875 = vtanh.pop %v1874
    %v1876 = vmul.f32 %v1871, %v1875
    %v1877 = vpack.c.bf16 %v1876, %v1876
    %v1879 = vrot.slane %v1877, 4
    %v1881 = vsel %vm385, %v1772, %v383
    %v1884 = vsel %vm385, 0, %v1879
    %1886 = vmatprep.subr.bf16.mxu0 %v679
    %1887 = vmatpush1.bf16.msra.mxu0 %v678
    %1888 = vmatprep.subr.bf16.mxu0 %v675
    %1889 = vmatpush1.bf16.msra.mxu0 %v674
    %1890 = vmatprep.subr.bf16.mxu0 %v671
    %1891 = vmatpush1.bf16.msra.mxu0 %v670
    %1892 = vmatprep.subr.bf16.mxu0 %v667
    %1893 = vmatpush1.bf16.msra.mxu0 %v666
    %1894 = vmatprep.subr.bf16.mxu0 %v663
    %1895 = vmatpush1.bf16.msra.mxu0 %v662
    %1896 = vmatprep.subr.bf16.mxu0 %v659
    %1897 = vmatpush1.bf16.msra.mxu0 %v658
    %1898 = vmatprep.subr.bf16.mxu0 %v655
    %1899 = vmatpush1.bf16.msra.mxu0 %v654
    %1900 = vmatprep.subr.bf16.mxu0 %v651
    %1901 = vmatpush1.bf16.msra.mxu0 %v650
    %1902 = vmatprep.subr.bf16.mxu0 %v711
    %1903 = vmatpush2.bf16.msra.mxu0 %v710
    %1904 = vmatprep.subr.bf16.mxu0 %v707
    %1905 = vmatpush2.bf16.msra.mxu0 %v706
    %1906 = vmatprep.subr.bf16.mxu0 %v703
    %1907 = vmatpush2.bf16.msra.mxu0 %v702
    %1908 = vmatprep.subr.bf16.mxu0 %v699
    %1909 = vmatpush2.bf16.msra.mxu0 %v698
    %1910 = vmatprep.subr.bf16.mxu0 %v695
    %1911 = vmatpush2.bf16.msra.mxu0 %v694
    %1912 = vmatprep.subr.bf16.mxu0 %v691
    %1913 = vmatpush2.bf16.msra.mxu0 %v690
    %1914 = vmatprep.subr.bf16.mxu0 %v687
    %1915 = vmatpush2.bf16.msra.mxu0 %v686
    %1916 = vmatprep.subr.bf16.mxu0 %v683
    %1917 = vmatpush2.bf16.msra.mxu0 %v682
    %1918 = vmatprep.mubr.bf16.mxu0 %v1884
    %1919 = vmatmul.mubr.bf16.gmra.mxu0 %v1881
    %v1920 = vpop.f32.mrf.mxu0
    %v1921 = vadd.f32 0.0, %v1920
    %v1922 = vpop.f32.mrf.mxu0
    %v1923 = vadd.f32 0.0, %v1922
    %v1924 = vpop.f32.mrf.mxu0
    %v1925 = vadd.f32 0.0, %v1924
    %v1926 = vpop.f32.mrf.mxu0
    %v1927 = vadd.f32 0.0, %v1926
    %1928 = vdwg.mxu0
    %1929 = vmatprep.subr.bf16.mxu0 %v681
    %1930 = vmatpush1.bf16.msra.mxu0 %v680
    %1931 = vmatprep.subr.bf16.mxu0 %v677
    %1932 = vmatpush1.bf16.msra.mxu0 %v676
    %1933 = vmatprep.subr.bf16.mxu0 %v673
    %1934 = vmatpush1.bf16.msra.mxu0 %v672
    %1935 = vmatprep.subr.bf16.mxu0 %v669
    %1936 = vmatpush1.bf16.msra.mxu0 %v668
    %1937 = vmatprep.subr.bf16.mxu0 %v665
    %1938 = vmatpush1.bf16.msra.mxu0 %v664
    %1939 = vmatprep.subr.bf16.mxu0 %v661
    %1940 = vmatpush1.bf16.msra.mxu0 %v660
    %1941 = vmatprep.subr.bf16.mxu0 %v657
    %1942 = vmatpush1.bf16.msra.mxu0 %v656
    %1943 = vmatprep.subr.bf16.mxu0 %v653
    %1944 = vmatpush1.bf16.msra.mxu0 %v652
    %1945 = vmatprep.subr.bf16.mxu0 %v713
    %1946 = vmatpush2.bf16.msra.mxu0 %v712
    %1947 = vmatprep.subr.bf16.mxu0 %v709
    %1948 = vmatpush2.bf16.msra.mxu0 %v708
    %1949 = vmatprep.subr.bf16.mxu0 %v705
    %1950 = vmatpush2.bf16.msra.mxu0 %v704
    %1951 = vmatprep.subr.bf16.mxu0 %v701
    %1952 = vmatpush2.bf16.msra.mxu0 %v700
    %1953 = vmatprep.subr.bf16.mxu0 %v697
    %1954 = vmatpush2.bf16.msra.mxu0 %v696
    %1955 = vmatprep.subr.bf16.mxu0 %v693
    %1956 = vmatpush2.bf16.msra.mxu0 %v692
    %1957 = vmatprep.subr.bf16.mxu0 %v689
    %1958 = vmatpush2.bf16.msra.mxu0 %v688
    %1959 = vmatprep.subr.bf16.mxu0 %v685
    %1960 = vmatpush2.bf16.msra.mxu0 %v684
    %1961 = vmatprep.mubr.bf16.mxu0 %v1884
    %1962 = vmatmul.mubr.bf16.gmra.mxu0 %v1881
    %v1963 = vpop.f32.mrf.mxu0
    %v1964 = vadd.f32 0.0, %v1963
    %v1965 = vpop.f32.mrf.mxu0
    %v1966 = vadd.f32 0.0, %v1965
    %v1967 = vpop.f32.mrf.mxu0
    %v1968 = vadd.f32 0.0, %v1967
    %v1969 = vpop.f32.mrf.mxu0
    %v1970 = vadd.f32 0.0, %v1969
    %1971 = vdwg.mxu0
    %s1972 = smul.u32 4, 4
    %s1973 = smul.addr %s1972, 8
    %s1974 = scalar_lea.vmem [#allocation2], %s1973
    %v1975 = vld [vmem:[%s1974] sm:$0xff]
    %v1976 = vld [vmem:[%s1974 + $0x8] sm:$0xff]
    %v1977 = vld [vmem:[%s1974 + $0x10] sm:$0xff]
    %v1978 = vld [vmem:[%s1974 + $0x18] sm:$0xff]
    %v1979 = vadd.f32 %v1975, %v1921
    %v1980 = vadd.f32 %v1976, %v1923
    %v1981 = vadd.f32 %v1977, %v1964
    %v1982 = vadd.f32 %v1978, %v1966
    %v1983 = vmul.f32 %v1979, 0.5
    %v1984 = vtanh.pop %v1983
    %v1985 = vmul.f32 %v1984, 0.5
    %v1986 = vadd.f32 %v1985, 0.5
    %v1987 = vmul.f32 %v1980, 0.5
    %v1988 = vtanh.pop %v1987
    %v1989 = vmul.f32 %v1988, 0.5
    %v1990 = vadd.f32 %v1989, 0.5
    %v1991 = vtanh.pop %v1981
    %v1992 = vmul.f32 %v1982, 0.5
    %v1993 = vtanh.pop %v1992
    %v1994 = vmul.f32 %v1993, 0.5
    %v1995 = vadd.f32 %v1994, 0.5
    %v1996 = vmul.f32 %v1990, %v1769
    %v1997 = vmul.f32 %v1986, %v1991
    %v1998 = vadd.f32 %v1996, %v1997
    %v1999 = vtanh.pop %v1998
    %v2000 = vmul.f32 %v1995, %v1999
    %v2001 = vpack.c.bf16 %v2000, %v2000
    %2002 = vmatprep.subr.bf16.mxu0 %v1051
    %2003 = vmatpush1.bf16.msra.mxu0 %v1050
    %2004 = vmatprep.subr.bf16.mxu0 %v1047
    %2005 = vmatpush1.bf16.msra.mxu0 %v1046
    %2006 = vmatprep.subr.bf16.mxu0 %v1043
    %2007 = vmatpush1.bf16.msra.mxu0 %v1042
    %2008 = vmatprep.subr.bf16.mxu0 %v1039
    %2009 = vmatpush1.bf16.msra.mxu0 %v1038
    %2010 = vmatprep.subr.bf16.mxu0 %v1035
    %2011 = vmatpush1.bf16.msra.mxu0 %v1034
    %2012 = vmatprep.subr.bf16.mxu0 %v1031
    %2013 = vmatpush1.bf16.msra.mxu0 %v1030
    %2014 = vmatprep.subr.bf16.mxu0 %v1027
    %2015 = vmatpush1.bf16.msra.mxu0 %v1026
    %2016 = vmatprep.subr.bf16.mxu0 %v1023
    %2017 = vmatpush1.bf16.msra.mxu0 %v1022
    %2018 = vmatprep.subr.bf16.mxu0 0
    %2019 = vmatpush2.bf16.msra.mxu0 0
    %2020 = vmatprep.subr.bf16.mxu0 0
    %2021 = vmatpush2.bf16.msra.mxu0 0
    %2022 = vmatprep.subr.bf16.mxu0 0
    %2023 = vmatpush2.bf16.msra.mxu0 0
    %2024 = vmatprep.subr.bf16.mxu0 0
    %2025 = vmatpush2.bf16.msra.mxu0 0
    %2026 = vmatprep.subr.bf16.mxu0 0
    %2027 = vmatpush2.bf16.msra.mxu0 0
    %2028 = vmatprep.subr.bf16.mxu0 0
    %2029 = vmatpush2.bf16.msra.mxu0 0
    %2030 = vmatprep.subr.bf16.mxu0 0
    %2031 = vmatpush2.bf16.msra.mxu0 0
    %2032 = vmatprep.subr.bf16.mxu0 0
    %2033 = vmatpush2.bf16.msra.mxu0 0
    %2034 = vmatprep.mubr.bf16.mxu0 0
    %2035 = vmatmul.mubr.bf16.gmra.mxu0 %v2001
    %v2036 = vpop.f32.mrf.mxu0
    %v2037 = vadd.f32 %v1925, %v2036
    %v2038 = vpop.f32.mrf.mxu0
    %v2039 = vadd.f32 %v1927, %v2038
    %v2040 = vpop.f32.mrf.mxu0
    %v2041 = vpop.f32.mrf.mxu0
    %2042 = vdwg.mxu0
    %2043 = vmatprep.subr.bf16.mxu0 %v1053
    %2044 = vmatpush1.bf16.msra.mxu0 %v1052
    %2045 = vmatprep.subr.bf16.mxu0 %v1049
    %2046 = vmatpush1.bf16.msra.mxu0 %v1048
    %2047 = vmatprep.subr.bf16.mxu0 %v1045
    %2048 = vmatpush1.bf16.msra.mxu0 %v1044
    %2049 = vmatprep.subr.bf16.mxu0 %v1041
    %2050 = vmatpush1.bf16.msra.mxu0 %v1040
    %2051 = vmatprep.subr.bf16.mxu0 %v1037
    %2052 = vmatpush1.bf16.msra.mxu0 %v1036
    %2053 = vmatprep.subr.bf16.mxu0 %v1033
    %2054 = vmatpush1.bf16.msra.mxu0 %v1032
    %2055 = vmatprep.subr.bf16.mxu0 %v1029
    %2056 = vmatpush1.bf16.msra.mxu0 %v1028
    %2057 = vmatprep.subr.bf16.mxu0 %v1025
    %2058 = vmatpush1.bf16.msra.mxu0 %v1024
    %2059 = vmatprep.subr.bf16.mxu0 0
    %2060 = vmatpush2.bf16.msra.mxu0 0
    %2061 = vmatprep.subr.bf16.mxu0 0
    %2062 = vmatpush2.bf16.msra.mxu0 0
    %2063 = vmatprep.subr.bf16.mxu0 0
    %2064 = vmatpush2.bf16.msra.mxu0 0
    %2065 = vmatprep.subr.bf16.mxu0 0
    %2066 = vmatpush2.bf16.msra.mxu0 0
    %2067 = vmatprep.subr.bf16.mxu0 0
    %2068 = vmatpush2.bf16.msra.mxu0 0
    %2069 = vmatprep.subr.bf16.mxu0 0
    %2070 = vmatpush2.bf16.msra.mxu0 0
    %2071 = vmatprep.subr.bf16.mxu0 0
    %2072 = vmatpush2.bf16.msra.mxu0 0
    %2073 = vmatprep.subr.bf16.mxu0 0
    %2074 = vmatpush2.bf16.msra.mxu0 0
    %2075 = vmatprep.mubr.bf16.mxu0 0
    %2076 = vmatmul.mubr.bf16.gmra.mxu0 %v2001
    %v2077 = vpop.f32.mrf.mxu0
    %v2078 = vadd.f32 %v1968, %v2077
    %v2079 = vpop.f32.mrf.mxu0
    %v2080 = vadd.f32 %v1970, %v2079
    %v2081 = vpop.f32.mrf.mxu0
    %v2082 = vpop.f32.mrf.mxu0
    %2083 = vdwg.mxu0
    %v2084 = vadd.f32 %v2037, %v356
    %v2085 = vadd.f32 %v2039, %v360
    %v2086 = vadd.f32 %v2078, %v364
    %v2087 = vadd.f32 %v2080, %v368
    %v2088 = vmul.f32 %v2084, 0.5
    %v2089 = vtanh.pop %v2088
    %v2090 = vmul.f32 %v2089, 0.5
    %v2091 = vadd.f32 %v2090, 0.5
    %v2092 = vmul.f32 %v2085, 0.5
    %v2093 = vtanh.pop %v2092
    %v2094 = vmul.f32 %v2093, 0.5
    %v2095 = vadd.f32 %v2094, 0.5
    %v2096 = vtanh.pop %v2086
    %v2097 = vmul.f32 %v2087, 0.5
    %v2098 = vtanh.pop %v2097
    %v2099 = vmul.f32 %v2098, 0.5
    %v2100 = vadd.f32 %v2099, 0.5
    %v2101 = vmul.f32 %v2095, %v1874
    %v2102 = vmul.f32 %v2091, %v2096
    %v2103 = vadd.f32 %v2101, %v2102
    %v2104 = vtanh.pop %v2103
    %v2105 = vmul.f32 %v2100, %v2104
    %v2106 = vpack.c.bf16 %v2105, %v2105
    %v2108 = vrot.slane %v2106, 4
    %v2110 = vsel %vm385, %v2001, %v383
    %v2113 = vsel %vm385, 0, %v2108
    %2115 = vmatprep.subr.bf16.mxu0 %v679
    %2116 = vmatpush1.bf16.msra.mxu0 %v678
    %2117 = vmatprep.subr.bf16.mxu0 %v675
    %2118 = vmatpush1.bf16.msra.mxu0 %v674
    %2119 = vmatprep.subr.bf16.mxu0 %v671
    %2120 = vmatpush1.bf16.msra.mxu0 %v670
    %2121 = vmatprep.subr.bf16.mxu0 %v667
    %2122 = vmatpush1.bf16.msra.mxu0 %v666
    %2123 = vmatprep.subr.bf16.mxu0 %v663
    %2124 = vmatpush1.bf16.msra.mxu0 %v662
    %2125 = vmatprep.subr.bf16.mxu0 %v659
    %2126 = vmatpush1.bf16.msra.mxu0 %v658
    %2127 = vmatprep.subr.bf16.mxu0 %v655
    %2128 = vmatpush1.bf16.msra.mxu0 %v654
    %2129 = vmatprep.subr.bf16.mxu0 %v651
    %2130 = vmatpush1.bf16.msra.mxu0 %v650
    %2131 = vmatprep.subr.bf16.mxu0 %v711
    %2132 = vmatpush2.bf16.msra.mxu0 %v710
    %2133 = vmatprep.subr.bf16.mxu0 %v707
    %2134 = vmatpush2.bf16.msra.mxu0 %v706
    %2135 = vmatprep.subr.bf16.mxu0 %v703
    %2136 = vmatpush2.bf16.msra.mxu0 %v702
    %2137 = vmatprep.subr.bf16.mxu0 %v699
    %2138 = vmatpush2.bf16.msra.mxu0 %v698
    %2139 = vmatprep.subr.bf16.mxu0 %v695
    %2140 = vmatpush2.bf16.msra.mxu0 %v694
    %2141 = vmatprep.subr.bf16.mxu0 %v691
    %2142 = vmatpush2.bf16.msra.mxu0 %v690
    %2143 = vmatprep.subr.bf16.mxu0 %v687
    %2144 = vmatpush2.bf16.msra.mxu0 %v686
    %2145 = vmatprep.subr.bf16.mxu0 %v683
    %2146 = vmatpush2.bf16.msra.mxu0 %v682
    %2147 = vmatprep.mubr.bf16.mxu0 %v2113
    %2148 = vmatmul.mubr.bf16.gmra.mxu0 %v2110
    %v2149 = vpop.f32.mrf.mxu0
    %v2150 = vadd.f32 0.0, %v2149
    %v2151 = vpop.f32.mrf.mxu0
    %v2152 = vadd.f32 0.0, %v2151
    %v2153 = vpop.f32.mrf.mxu0
    %v2154 = vadd.f32 0.0, %v2153
    %v2155 = vpop.f32.mrf.mxu0
    %v2156 = vadd.f32 0.0, %v2155
    %2157 = vdwg.mxu0
    %2158 = vmatprep.subr.bf16.mxu0 %v681
    %2159 = vmatpush1.bf16.msra.mxu0 %v680
    %2160 = vmatprep.subr.bf16.mxu0 %v677
    %2161 = vmatpush1.bf16.msra.mxu0 %v676
    %2162 = vmatprep.subr.bf16.mxu0 %v673
    %2163 = vmatpush1.bf16.msra.mxu0 %v672
    %2164 = vmatprep.subr.bf16.mxu0 %v669
    %2165 = vmatpush1.bf16.msra.mxu0 %v668
    %2166 = vmatprep.subr.bf16.mxu0 %v665
    %2167 = vmatpush1.bf16.msra.mxu0 %v664
    %2168 = vmatprep.subr.bf16.mxu0 %v661
    %2169 = vmatpush1.bf16.msra.mxu0 %v660
    %2170 = vmatprep.subr.bf16.mxu0 %v657
    %2171 = vmatpush1.bf16.msra.mxu0 %v656
    %2172 = vmatprep.subr.bf16.mxu0 %v653
    %2173 = vmatpush1.bf16.msra.mxu0 %v652
    %2174 = vmatprep.subr.bf16.mxu0 %v713
    %2175 = vmatpush2.bf16.msra.mxu0 %v712
    %2176 = vmatprep.subr.bf16.mxu0 %v709
    %2177 = vmatpush2.bf16.msra.mxu0 %v708
    %2178 = vmatprep.subr.bf16.mxu0 %v705
    %2179 = vmatpush2.bf16.msra.mxu0 %v704
    %2180 = vmatprep.subr.bf16.mxu0 %v701
    %2181 = vmatpush2.bf16.msra.mxu0 %v700
    %2182 = vmatprep.subr.bf16.mxu0 %v697
    %2183 = vmatpush2.bf16.msra.mxu0 %v696
    %2184 = vmatprep.subr.bf16.mxu0 %v693
    %2185 = vmatpush2.bf16.msra.mxu0 %v692
    %2186 = vmatprep.subr.bf16.mxu0 %v689
    %2187 = vmatpush2.bf16.msra.mxu0 %v688
    %2188 = vmatprep.subr.bf16.mxu0 %v685
    %2189 = vmatpush2.bf16.msra.mxu0 %v684
    %2190 = vmatprep.mubr.bf16.mxu0 %v2113
    %2191 = vmatmul.mubr.bf16.gmra.mxu0 %v2110
    %v2192 = vpop.f32.mrf.mxu0
    %v2193 = vadd.f32 0.0, %v2192
    %v2194 = vpop.f32.mrf.mxu0
    %v2195 = vadd.f32 0.0, %v2194
    %v2196 = vpop.f32.mrf.mxu0
    %v2197 = vadd.f32 0.0, %v2196
    %v2198 = vpop.f32.mrf.mxu0
    %v2199 = vadd.f32 0.0, %v2198
    %2200 = vdwg.mxu0
    %s2201 = smul.u32 5, 4
    %s2202 = smul.addr %s2201, 8
    %s2203 = scalar_lea.vmem [#allocation2], %s2202
    %v2204 = vld [vmem:[%s2203] sm:$0xff]
    %v2205 = vld [vmem:[%s2203 + $0x8] sm:$0xff]
    %v2206 = vld [vmem:[%s2203 + $0x10] sm:$0xff]
    %v2207 = vld [vmem:[%s2203 + $0x18] sm:$0xff]
    %v2208 = vadd.f32 %v2204, %v2150
    %v2209 = vadd.f32 %v2205, %v2152
    %v2210 = vadd.f32 %v2206, %v2193
    %v2211 = vadd.f32 %v2207, %v2195
    %v2212 = vmul.f32 %v2208, 0.5
    %v2213 = vtanh.pop %v2212
    %v2214 = vmul.f32 %v2213, 0.5
    %v2215 = vadd.f32 %v2214, 0.5
    %v2216 = vmul.f32 %v2209, 0.5
    %v2217 = vtanh.pop %v2216
    %v2218 = vmul.f32 %v2217, 0.5
    %v2219 = vadd.f32 %v2218, 0.5
    %v2220 = vtanh.pop %v2210
    %v2221 = vmul.f32 %v2211, 0.5
    %v2222 = vtanh.pop %v2221
    %v2223 = vmul.f32 %v2222, 0.5
    %v2224 = vadd.f32 %v2223, 0.5
    %v2225 = vmul.f32 %v2219, %v1998
    %v2226 = vmul.f32 %v2215, %v2220
    %v2227 = vadd.f32 %v2225, %v2226
    %v2228 = vtanh.pop %v2227
    %v2229 = vmul.f32 %v2224, %v2228
    %v2230 = vpack.c.bf16 %v2229, %v2229
    %2231 = vmatprep.subr.bf16.mxu0 %v1051
    %2232 = vmatpush1.bf16.msra.mxu0 %v1050
    %2233 = vmatprep.subr.bf16.mxu0 %v1047
    %2234 = vmatpush1.bf16.msra.mxu0 %v1046
    %2235 = vmatprep.subr.bf16.mxu0 %v1043
    %2236 = vmatpush1.bf16.msra.mxu0 %v1042
    %2237 = vmatprep.subr.bf16.mxu0 %v1039
    %2238 = vmatpush1.bf16.msra.mxu0 %v1038
    %2239 = vmatprep.subr.bf16.mxu0 %v1035
    %2240 = vmatpush1.bf16.msra.mxu0 %v1034
    %2241 = vmatprep.subr.bf16.mxu0 %v1031
    %2242 = vmatpush1.bf16.msra.mxu0 %v1030
    %2243 = vmatprep.subr.bf16.mxu0 %v1027
    %2244 = vmatpush1.bf16.msra.mxu0 %v1026
    %2245 = vmatprep.subr.bf16.mxu0 %v1023
    %2246 = vmatpush1.bf16.msra.mxu0 %v1022
    %2247 = vmatprep.subr.bf16.mxu0 0
    %2248 = vmatpush2.bf16.msra.mxu0 0
    %2249 = vmatprep.subr.bf16.mxu0 0
    %2250 = vmatpush2.bf16.msra.mxu0 0
    %2251 = vmatprep.subr.bf16.mxu0 0
    %2252 = vmatpush2.bf16.msra.mxu0 0
    %2253 = vmatprep.subr.bf16.mxu0 0
    %2254 = vmatpush2.bf16.msra.mxu0 0
    %2255 = vmatprep.subr.bf16.mxu0 0
    %2256 = vmatpush2.bf16.msra.mxu0 0
    %2257 = vmatprep.subr.bf16.mxu0 0
    %2258 = vmatpush2.bf16.msra.mxu0 0
    %2259 = vmatprep.subr.bf16.mxu0 0
    %2260 = vmatpush2.bf16.msra.mxu0 0
    %2261 = vmatprep.subr.bf16.mxu0 0
    %2262 = vmatpush2.bf16.msra.mxu0 0
    %2263 = vmatprep.mubr.bf16.mxu0 0
    %2264 = vmatmul.mubr.bf16.gmra.mxu0 %v2230
    %v2265 = vpop.f32.mrf.mxu0
    %v2266 = vadd.f32 %v2154, %v2265
    %v2267 = vpop.f32.mrf.mxu0
    %v2268 = vadd.f32 %v2156, %v2267
    %v2269 = vpop.f32.mrf.mxu0
    %v2270 = vpop.f32.mrf.mxu0
    %2271 = vdwg.mxu0
    %2272 = vmatprep.subr.bf16.mxu0 %v1053
    %2273 = vmatpush1.bf16.msra.mxu0 %v1052
    %2274 = vmatprep.subr.bf16.mxu0 %v1049
    %2275 = vmatpush1.bf16.msra.mxu0 %v1048
    %2276 = vmatprep.subr.bf16.mxu0 %v1045
    %2277 = vmatpush1.bf16.msra.mxu0 %v1044
    %2278 = vmatprep.subr.bf16.mxu0 %v1041
    %2279 = vmatpush1.bf16.msra.mxu0 %v1040
    %2280 = vmatprep.subr.bf16.mxu0 %v1037
    %2281 = vmatpush1.bf16.msra.mxu0 %v1036
    %2282 = vmatprep.subr.bf16.mxu0 %v1033
    %2283 = vmatpush1.bf16.msra.mxu0 %v1032
    %2284 = vmatprep.subr.bf16.mxu0 %v1029
    %2285 = vmatpush1.bf16.msra.mxu0 %v1028
    %2286 = vmatprep.subr.bf16.mxu0 %v1025
    %2287 = vmatpush1.bf16.msra.mxu0 %v1024
    %2288 = vmatprep.subr.bf16.mxu0 0
    %2289 = vmatpush2.bf16.msra.mxu0 0
    %2290 = vmatprep.subr.bf16.mxu0 0
    %2291 = vmatpush2.bf16.msra.mxu0 0
    %2292 = vmatprep.subr.bf16.mxu0 0
    %2293 = vmatpush2.bf16.msra.mxu0 0
    %2294 = vmatprep.subr.bf16.mxu0 0
    %2295 = vmatpush2.bf16.msra.mxu0 0
    %2296 = vmatprep.subr.bf16.mxu0 0
    %2297 = vmatpush2.bf16.msra.mxu0 0
    %2298 = vmatprep.subr.bf16.mxu0 0
    %2299 = vmatpush2.bf16.msra.mxu0 0
    %2300 = vmatprep.subr.bf16.mxu0 0
    %2301 = vmatpush2.bf16.msra.mxu0 0
    %2302 = vmatprep.subr.bf16.mxu0 0
    %2303 = vmatpush2.bf16.msra.mxu0 0
    %2304 = vmatprep.mubr.bf16.mxu0 0
    %2305 = vmatmul.mubr.bf16.gmra.mxu0 %v2230
    %v2306 = vpop.f32.mrf.mxu0
    %v2307 = vadd.f32 %v2197, %v2306
    %v2308 = vpop.f32.mrf.mxu0
    %v2309 = vadd.f32 %v2199, %v2308
    %v2310 = vpop.f32.mrf.mxu0
    %v2311 = vpop.f32.mrf.mxu0
    %2312 = vdwg.mxu0
    %v2313 = vadd.f32 %v2266, %v356
    %v2314 = vadd.f32 %v2268, %v360
    %v2315 = vadd.f32 %v2307, %v364
    %v2316 = vadd.f32 %v2309, %v368
    %v2317 = vmul.f32 %v2313, 0.5
    %v2318 = vtanh.pop %v2317
    %v2319 = vmul.f32 %v2318, 0.5
    %v2320 = vadd.f32 %v2319, 0.5
    %v2321 = vmul.f32 %v2314, 0.5
    %v2322 = vtanh.pop %v2321
    %v2323 = vmul.f32 %v2322, 0.5
    %v2324 = vadd.f32 %v2323, 0.5
    %v2325 = vtanh.pop %v2315
    %v2326 = vmul.f32 %v2316, 0.5
    %v2327 = vtanh.pop %v2326
    %v2328 = vmul.f32 %v2327, 0.5
    %v2329 = vadd.f32 %v2328, 0.5
    %v2330 = vmul.f32 %v2324, %v2103
    %v2331 = vmul.f32 %v2320, %v2325
    %v2332 = vadd.f32 %v2330, %v2331
    %v2333 = vtanh.pop %v2332
    %v2334 = vmul.f32 %v2329, %v2333
    %v2335 = vpack.c.bf16 %v2334, %v2334
    %v2337 = vrot.slane %v2335, 4
    %v2339 = vsel %vm385, %v2230, %v383
    %v2342 = vsel %vm385, 0, %v2337
    %2344 = vmatprep.subr.bf16.mxu0 %v679
    %2345 = vmatpush1.bf16.msra.mxu0 %v678
    %2346 = vmatprep.subr.bf16.mxu0 %v675
    %2347 = vmatpush1.bf16.msra.mxu0 %v674
    %2348 = vmatprep.subr.bf16.mxu0 %v671
    %2349 = vmatpush1.bf16.msra.mxu0 %v670
    %2350 = vmatprep.subr.bf16.mxu0 %v667
    %2351 = vmatpush1.bf16.msra.mxu0 %v666
    %2352 = vmatprep.subr.bf16.mxu0 %v663
    %2353 = vmatpush1.bf16.msra.mxu0 %v662
    %2354 = vmatprep.subr.bf16.mxu0 %v659
    %2355 = vmatpush1.bf16.msra.mxu0 %v658
    %2356 = vmatprep.subr.bf16.mxu0 %v655
    %2357 = vmatpush1.bf16.msra.mxu0 %v654
    %2358 = vmatprep.subr.bf16.mxu0 %v651
    %2359 = vmatpush1.bf16.msra.mxu0 %v650
    %2360 = vmatprep.subr.bf16.mxu0 %v711
    %2361 = vmatpush2.bf16.msra.mxu0 %v710
    %2362 = vmatprep.subr.bf16.mxu0 %v707
    %2363 = vmatpush2.bf16.msra.mxu0 %v706
    %2364 = vmatprep.subr.bf16.mxu0 %v703
    %2365 = vmatpush2.bf16.msra.mxu0 %v702
    %2366 = vmatprep.subr.bf16.mxu0 %v699
    %2367 = vmatpush2.bf16.msra.mxu0 %v698
    %2368 = vmatprep.subr.bf16.mxu0 %v695
    %2369 = vmatpush2.bf16.msra.mxu0 %v694
    %2370 = vmatprep.subr.bf16.mxu0 %v691
    %2371 = vmatpush2.bf16.msra.mxu0 %v690
    %2372 = vmatprep.subr.bf16.mxu0 %v687
    %2373 = vmatpush2.bf16.msra.mxu0 %v686
    %2374 = vmatprep.subr.bf16.mxu0 %v683
    %2375 = vmatpush2.bf16.msra.mxu0 %v682
    %2376 = vmatprep.mubr.bf16.mxu0 %v2342
    %2377 = vmatmul.mubr.bf16.gmra.mxu0 %v2339
    %v2378 = vpop.f32.mrf.mxu0
    %v2379 = vadd.f32 0.0, %v2378
    %v2380 = vpop.f32.mrf.mxu0
    %v2381 = vadd.f32 0.0, %v2380
    %v2382 = vpop.f32.mrf.mxu0
    %v2383 = vadd.f32 0.0, %v2382
    %v2384 = vpop.f32.mrf.mxu0
    %v2385 = vadd.f32 0.0, %v2384
    %2386 = vdwg.mxu0
    %2387 = vmatprep.subr.bf16.mxu0 %v681
    %2388 = vmatpush1.bf16.msra.mxu0 %v680
    %2389 = vmatprep.subr.bf16.mxu0 %v677
    %2390 = vmatpush1.bf16.msra.mxu0 %v676
    %2391 = vmatprep.subr.bf16.mxu0 %v673
    %2392 = vmatpush1.bf16.msra.mxu0 %v672
    %2393 = vmatprep.subr.bf16.mxu0 %v669
    %2394 = vmatpush1.bf16.msra.mxu0 %v668
    %2395 = vmatprep.subr.bf16.mxu0 %v665
    %2396 = vmatpush1.bf16.msra.mxu0 %v664
    %2397 = vmatprep.subr.bf16.mxu0 %v661
    %2398 = vmatpush1.bf16.msra.mxu0 %v660
    %2399 = vmatprep.subr.bf16.mxu0 %v657
    %2400 = vmatpush1.bf16.msra.mxu0 %v656
    %2401 = vmatprep.subr.bf16.mxu0 %v653
    %2402 = vmatpush1.bf16.msra.mxu0 %v652
    %2403 = vmatprep.subr.bf16.mxu0 %v713
    %2404 = vmatpush2.bf16.msra.mxu0 %v712
    %2405 = vmatprep.subr.bf16.mxu0 %v709
    %2406 = vmatpush2.bf16.msra.mxu0 %v708
    %2407 = vmatprep.subr.bf16.mxu0 %v705
    %2408 = vmatpush2.bf16.msra.mxu0 %v704
    %2409 = vmatprep.subr.bf16.mxu0 %v701
    %2410 = vmatpush2.bf16.msra.mxu0 %v700
    %2411 = vmatprep.subr.bf16.mxu0 %v697
    %2412 = vmatpush2.bf16.msra.mxu0 %v696
    %2413 = vmatprep.subr.bf16.mxu0 %v693
    %2414 = vmatpush2.bf16.msra.mxu0 %v692
    %2415 = vmatprep.subr.bf16.mxu0 %v689
    %2416 = vmatpush2.bf16.msra.mxu0 %v688
    %2417 = vmatprep.subr.bf16.mxu0 %v685
    %2418 = vmatpush2.bf16.msra.mxu0 %v684
    %2419 = vmatprep.mubr.bf16.mxu0 %v2342
    %2420 = vmatmul.mubr.bf16.gmra.mxu0 %v2339
    %v2421 = vpop.f32.mrf.mxu0
    %v2422 = vadd.f32 0.0, %v2421
    %v2423 = vpop.f32.mrf.mxu0
    %v2424 = vadd.f32 0.0, %v2423
    %v2425 = vpop.f32.mrf.mxu0
    %v2426 = vadd.f32 0.0, %v2425
    %v2427 = vpop.f32.mrf.mxu0
    %v2428 = vadd.f32 0.0, %v2427
    %2429 = vdwg.mxu0
    %s2430 = smul.u32 6, 4
    %s2431 = smul.addr %s2430, 8
    %s2432 = scalar_lea.vmem [#allocation2], %s2431
    %v2433 = vld [vmem:[%s2432] sm:$0xff]
    %v2434 = vld [vmem:[%s2432 + $0x8] sm:$0xff]
    %v2435 = vld [vmem:[%s2432 + $0x10] sm:$0xff]
    %v2436 = vld [vmem:[%s2432 + $0x18] sm:$0xff]
    %v2437 = vadd.f32 %v2433, %v2379
    %v2438 = vadd.f32 %v2434, %v2381
    %v2439 = vadd.f32 %v2435, %v2422
    %v2440 = vadd.f32 %v2436, %v2424
    %v2441 = vmul.f32 %v2437, 0.5
    %v2442 = vtanh.pop %v2441
    %v2443 = vmul.f32 %v2442, 0.5
    %v2444 = vadd.f32 %v2443, 0.5
    %v2445 = vmul.f32 %v2438, 0.5
    %v2446 = vtanh.pop %v2445
    %v2447 = vmul.f32 %v2446, 0.5
    %v2448 = vadd.f32 %v2447, 0.5
    %v2449 = vtanh.pop %v2439
    %v2450 = vmul.f32 %v2440, 0.5
    %v2451 = vtanh.pop %v2450
    %v2452 = vmul.f32 %v2451, 0.5
    %v2453 = vadd.f32 %v2452, 0.5
    %v2454 = vmul.f32 %v2448, %v2227
    %v2455 = vmul.f32 %v2444, %v2449
    %v2456 = vadd.f32 %v2454, %v2455
    %v2457 = vtanh.pop %v2456
    %v2458 = vmul.f32 %v2453, %v2457
    %v2459 = vpack.c.bf16 %v2458, %v2458
    %2460 = vmatprep.subr.bf16.mxu0 %v1051
    %2461 = vmatpush1.bf16.msra.mxu0 %v1050
    %2462 = vmatprep.subr.bf16.mxu0 %v1047
    %2463 = vmatpush1.bf16.msra.mxu0 %v1046
    %2464 = vmatprep.subr.bf16.mxu0 %v1043
    %2465 = vmatpush1.bf16.msra.mxu0 %v1042
    %2466 = vmatprep.subr.bf16.mxu0 %v1039
    %2467 = vmatpush1.bf16.msra.mxu0 %v1038
    %2468 = vmatprep.subr.bf16.mxu0 %v1035
    %2469 = vmatpush1.bf16.msra.mxu0 %v1034
    %2470 = vmatprep.subr.bf16.mxu0 %v1031
    %2471 = vmatpush1.bf16.msra.mxu0 %v1030
    %2472 = vmatprep.subr.bf16.mxu0 %v1027
    %2473 = vmatpush1.bf16.msra.mxu0 %v1026
    %2474 = vmatprep.subr.bf16.mxu0 %v1023
    %2475 = vmatpush1.bf16.msra.mxu0 %v1022
    %2476 = vmatprep.subr.bf16.mxu0 0
    %2477 = vmatpush2.bf16.msra.mxu0 0
    %2478 = vmatprep.subr.bf16.mxu0 0
    %2479 = vmatpush2.bf16.msra.mxu0 0
    %2480 = vmatprep.subr.bf16.mxu0 0
    %2481 = vmatpush2.bf16.msra.mxu0 0
    %2482 = vmatprep.subr.bf16.mxu0 0
    %2483 = vmatpush2.bf16.msra.mxu0 0
    %2484 = vmatprep.subr.bf16.mxu0 0
    %2485 = vmatpush2.bf16.msra.mxu0 0
    %2486 = vmatprep.subr.bf16.mxu0 0
    %2487 = vmatpush2.bf16.msra.mxu0 0
    %2488 = vmatprep.subr.bf16.mxu0 0
    %2489 = vmatpush2.bf16.msra.mxu0 0
    %2490 = vmatprep.subr.bf16.mxu0 0
    %2491 = vmatpush2.bf16.msra.mxu0 0
    %2492 = vmatprep.mubr.bf16.mxu0 0
    %2493 = vmatmul.mubr.bf16.gmra.mxu0 %v2459
    %v2494 = vpop.f32.mrf.mxu0
    %v2495 = vadd.f32 %v2383, %v2494
    %v2496 = vpop.f32.mrf.mxu0
    %v2497 = vadd.f32 %v2385, %v2496
    %v2498 = vpop.f32.mrf.mxu0
    %v2499 = vpop.f32.mrf.mxu0
    %2500 = vdwg.mxu0
    %2501 = vmatprep.subr.bf16.mxu0 %v1053
    %2502 = vmatpush1.bf16.msra.mxu0 %v1052
    %2503 = vmatprep.subr.bf16.mxu0 %v1049
    %2504 = vmatpush1.bf16.msra.mxu0 %v1048
    %2505 = vmatprep.subr.bf16.mxu0 %v1045
    %2506 = vmatpush1.bf16.msra.mxu0 %v1044
    %2507 = vmatprep.subr.bf16.mxu0 %v1041
    %2508 = vmatpush1.bf16.msra.mxu0 %v1040
    %2509 = vmatprep.subr.bf16.mxu0 %v1037
    %2510 = vmatpush1.bf16.msra.mxu0 %v1036
    %2511 = vmatprep.subr.bf16.mxu0 %v1033
    %2512 = vmatpush1.bf16.msra.mxu0 %v1032
    %2513 = vmatprep.subr.bf16.mxu0 %v1029
    %2514 = vmatpush1.bf16.msra.mxu0 %v1028
    %2515 = vmatprep.subr.bf16.mxu0 %v1025
    %2516 = vmatpush1.bf16.msra.mxu0 %v1024
    %2517 = vmatprep.subr.bf16.mxu0 0
    %2518 = vmatpush2.bf16.msra.mxu0 0
    %2519 = vmatprep.subr.bf16.mxu0 0
    %2520 = vmatpush2.bf16.msra.mxu0 0
    %2521 = vmatprep.subr.bf16.mxu0 0
    %2522 = vmatpush2.bf16.msra.mxu0 0
    %2523 = vmatprep.subr.bf16.mxu0 0
    %2524 = vmatpush2.bf16.msra.mxu0 0
    %2525 = vmatprep.subr.bf16.mxu0 0
    %2526 = vmatpush2.bf16.msra.mxu0 0
    %2527 = vmatprep.subr.bf16.mxu0 0
    %2528 = vmatpush2.bf16.msra.mxu0 0
    %2529 = vmatprep.subr.bf16.mxu0 0
    %2530 = vmatpush2.bf16.msra.mxu0 0
    %2531 = vmatprep.subr.bf16.mxu0 0
    %2532 = vmatpush2.bf16.msra.mxu0 0
    %2533 = vmatprep.mubr.bf16.mxu0 0
    %2534 = vmatmul.mubr.bf16.gmra.mxu0 %v2459
    %v2535 = vpop.f32.mrf.mxu0
    %v2536 = vadd.f32 %v2426, %v2535
    %v2537 = vpop.f32.mrf.mxu0
    %v2538 = vadd.f32 %v2428, %v2537
    %v2539 = vpop.f32.mrf.mxu0
    %v2540 = vpop.f32.mrf.mxu0
    %2541 = vdwg.mxu0
    %v2542 = vadd.f32 %v2495, %v356
    %v2543 = vadd.f32 %v2497, %v360
    %v2544 = vadd.f32 %v2536, %v364
    %v2545 = vadd.f32 %v2538, %v368
    %v2546 = vmul.f32 %v2542, 0.5
    %v2547 = vtanh.pop %v2546
    %v2548 = vmul.f32 %v2547, 0.5
    %v2549 = vadd.f32 %v2548, 0.5
    %v2550 = vmul.f32 %v2543, 0.5
    %v2551 = vtanh.pop %v2550
    %v2552 = vmul.f32 %v2551, 0.5
    %v2553 = vadd.f32 %v2552, 0.5
    %v2554 = vtanh.pop %v2544
    %v2555 = vmul.f32 %v2545, 0.5
    %v2556 = vtanh.pop %v2555
    %v2557 = vmul.f32 %v2556, 0.5
    %v2558 = vadd.f32 %v2557, 0.5
    %v2559 = vmul.f32 %v2553, %v2332
    %v2560 = vmul.f32 %v2549, %v2554
    %v2561 = vadd.f32 %v2559, %v2560
    %v2562 = vtanh.pop %v2561
    %v2563 = vmul.f32 %v2558, %v2562
    %v2564 = vpack.c.bf16 %v2563, %v2563
    %v2566 = vrot.slane %v2564, 4
    %v2568 = vsel %vm385, %v2459, %v383
    %v2571 = vsel %vm385, 0, %v2566
    %2573 = vmatprep.subr.bf16.mxu0 %v679
    %2574 = vmatpush1.bf16.msra.mxu0 %v678
    %2575 = vmatprep.subr.bf16.mxu0 %v675
    %2576 = vmatpush1.bf16.msra.mxu0 %v674
    %2577 = vmatprep.subr.bf16.mxu0 %v671
    %2578 = vmatpush1.bf16.msra.mxu0 %v670
    %2579 = vmatprep.subr.bf16.mxu0 %v667
    %2580 = vmatpush1.bf16.msra.mxu0 %v666
    %2581 = vmatprep.subr.bf16.mxu0 %v663
    %2582 = vmatpush1.bf16.msra.mxu0 %v662
    %2583 = vmatprep.subr.bf16.mxu0 %v659
    %2584 = vmatpush1.bf16.msra.mxu0 %v658
    %2585 = vmatprep.subr.bf16.mxu0 %v655
    %2586 = vmatpush1.bf16.msra.mxu0 %v654
    %2587 = vmatprep.subr.bf16.mxu0 %v651
    %2588 = vmatpush1.bf16.msra.mxu0 %v650
    %2589 = vmatprep.subr.bf16.mxu0 %v711
    %2590 = vmatpush2.bf16.msra.mxu0 %v710
    %2591 = vmatprep.subr.bf16.mxu0 %v707
    %2592 = vmatpush2.bf16.msra.mxu0 %v706
    %2593 = vmatprep.subr.bf16.mxu0 %v703
    %2594 = vmatpush2.bf16.msra.mxu0 %v702
    %2595 = vmatprep.subr.bf16.mxu0 %v699
    %2596 = vmatpush2.bf16.msra.mxu0 %v698
    %2597 = vmatprep.subr.bf16.mxu0 %v695
    %2598 = vmatpush2.bf16.msra.mxu0 %v694
    %2599 = vmatprep.subr.bf16.mxu0 %v691
    %2600 = vmatpush2.bf16.msra.mxu0 %v690
    %2601 = vmatprep.subr.bf16.mxu0 %v687
    %2602 = vmatpush2.bf16.msra.mxu0 %v686
    %2603 = vmatprep.subr.bf16.mxu0 %v683
    %2604 = vmatpush2.bf16.msra.mxu0 %v682
    %2605 = vmatprep.mubr.bf16.mxu0 %v2571
    %2606 = vmatmul.mubr.bf16.gmra.mxu0 %v2568
    %v2607 = vpop.f32.mrf.mxu0
    %v2608 = vadd.f32 0.0, %v2607
    %v2609 = vpop.f32.mrf.mxu0
    %v2610 = vadd.f32 0.0, %v2609
    %v2611 = vpop.f32.mrf.mxu0
    %v2612 = vadd.f32 0.0, %v2611
    %v2613 = vpop.f32.mrf.mxu0
    %v2614 = vadd.f32 0.0, %v2613
    %2615 = vdwg.mxu0
    %2616 = vmatprep.subr.bf16.mxu0 %v681
    %2617 = vmatpush1.bf16.msra.mxu0 %v680
    %2618 = vmatprep.subr.bf16.mxu0 %v677
    %2619 = vmatpush1.bf16.msra.mxu0 %v676
    %2620 = vmatprep.subr.bf16.mxu0 %v673
    %2621 = vmatpush1.bf16.msra.mxu0 %v672
    %2622 = vmatprep.subr.bf16.mxu0 %v669
    %2623 = vmatpush1.bf16.msra.mxu0 %v668
    %2624 = vmatprep.subr.bf16.mxu0 %v665
    %2625 = vmatpush1.bf16.msra.mxu0 %v664
    %2626 = vmatprep.subr.bf16.mxu0 %v661
    %2627 = vmatpush1.bf16.msra.mxu0 %v660
    %2628 = vmatprep.subr.bf16.mxu0 %v657
    %2629 = vmatpush1.bf16.msra.mxu0 %v656
    %2630 = vmatprep.subr.bf16.mxu0 %v653
    %2631 = vmatpush1.bf16.msra.mxu0 %v652
    %2632 = vmatprep.subr.bf16.mxu0 %v713
    %2633 = vmatpush2.bf16.msra.mxu0 %v712
    %2634 = vmatprep.subr.bf16.mxu0 %v709
    %2635 = vmatpush2.bf16.msra.mxu0 %v708
    %2636 = vmatprep.subr.bf16.mxu0 %v705
    %2637 = vmatpush2.bf16.msra.mxu0 %v704
    %2638 = vmatprep.subr.bf16.mxu0 %v701
    %2639 = vmatpush2.bf16.msra.mxu0 %v700
    %2640 = vmatprep.subr.bf16.mxu0 %v697
    %2641 = vmatpush2.bf16.msra.mxu0 %v696
    %2642 = vmatprep.subr.bf16.mxu0 %v693
    %2643 = vmatpush2.bf16.msra.mxu0 %v692
    %2644 = vmatprep.subr.bf16.mxu0 %v689
    %2645 = vmatpush2.bf16.msra.mxu0 %v688
    %2646 = vmatprep.subr.bf16.mxu0 %v685
    %2647 = vmatpush2.bf16.msra.mxu0 %v684
    %2648 = vmatprep.mubr.bf16.mxu0 %v2571
    %2649 = vmatmul.mubr.bf16.gmra.mxu0 %v2568
    %v2650 = vpop.f32.mrf.mxu0
    %v2651 = vadd.f32 0.0, %v2650
    %v2652 = vpop.f32.mrf.mxu0
    %v2653 = vadd.f32 0.0, %v2652
    %v2654 = vpop.f32.mrf.mxu0
    %v2655 = vadd.f32 0.0, %v2654
    %v2656 = vpop.f32.mrf.mxu0
    %v2657 = vadd.f32 0.0, %v2656
    %2658 = vdwg.mxu0
    %s2659 = smul.u32 7, 4
    %s2660 = smul.addr %s2659, 8
    %s2661 = scalar_lea.vmem [#allocation2], %s2660
    %v2662 = vld [vmem:[%s2661] sm:$0xff]
    %v2663 = vld [vmem:[%s2661 + $0x8] sm:$0xff]
    %v2664 = vld [vmem:[%s2661 + $0x10] sm:$0xff]
    %v2665 = vld [vmem:[%s2661 + $0x18] sm:$0xff]
    %v2666 = vadd.f32 %v2662, %v2608
    %v2667 = vadd.f32 %v2663, %v2610
    %v2668 = vadd.f32 %v2664, %v2651
    %v2669 = vadd.f32 %v2665, %v2653
    %v2670 = vmul.f32 %v2666, 0.5
    %v2671 = vtanh.pop %v2670
    %v2672 = vmul.f32 %v2671, 0.5
    %v2673 = vadd.f32 %v2672, 0.5
    %v2674 = vmul.f32 %v2667, 0.5
    %v2675 = vtanh.pop %v2674
    %v2676 = vmul.f32 %v2675, 0.5
    %v2677 = vadd.f32 %v2676, 0.5
    %v2678 = vtanh.pop %v2668
    %v2679 = vmul.f32 %v2669, 0.5
    %v2680 = vtanh.pop %v2679
    %v2681 = vmul.f32 %v2680, 0.5
    %v2682 = vadd.f32 %v2681, 0.5
    %v2683 = vmul.f32 %v2677, %v2456
    %v2684 = vmul.f32 %v2673, %v2678
    %v2685 = vadd.f32 %v2683, %v2684
    %v2686 = vtanh.pop %v2685
    %v2687 = vmul.f32 %v2682, %v2686
    %v2688 = vpack.c.bf16 %v2687, %v2687
    %2689 = vmatprep.subr.bf16.mxu0 %v1051
    %2690 = vmatpush1.bf16.msra.mxu0 %v1050
    %2691 = vmatprep.subr.bf16.mxu0 %v1047
    %2692 = vmatpush1.bf16.msra.mxu0 %v1046
    %2693 = vmatprep.subr.bf16.mxu0 %v1043
    %2694 = vmatpush1.bf16.msra.mxu0 %v1042
    %2695 = vmatprep.subr.bf16.mxu0 %v1039
    %2696 = vmatpush1.bf16.msra.mxu0 %v1038
    %2697 = vmatprep.subr.bf16.mxu0 %v1035
    %2698 = vmatpush1.bf16.msra.mxu0 %v1034
    %2699 = vmatprep.subr.bf16.mxu0 %v1031
    %2700 = vmatpush1.bf16.msra.mxu0 %v1030
    %2701 = vmatprep.subr.bf16.mxu0 %v1027
    %2702 = vmatpush1.bf16.msra.mxu0 %v1026
    %2703 = vmatprep.subr.bf16.mxu0 %v1023
    %2704 = vmatpush1.bf16.msra.mxu0 %v1022
    %2705 = vmatprep.subr.bf16.mxu0 0
    %2706 = vmatpush2.bf16.msra.mxu0 0
    %2707 = vmatprep.subr.bf16.mxu0 0
    %2708 = vmatpush2.bf16.msra.mxu0 0
    %2709 = vmatprep.subr.bf16.mxu0 0
    %2710 = vmatpush2.bf16.msra.mxu0 0
    %2711 = vmatprep.subr.bf16.mxu0 0
    %2712 = vmatpush2.bf16.msra.mxu0 0
    %2713 = vmatprep.subr.bf16.mxu0 0
    %2714 = vmatpush2.bf16.msra.mxu0 0
    %2715 = vmatprep.subr.bf16.mxu0 0
    %2716 = vmatpush2.bf16.msra.mxu0 0
    %2717 = vmatprep.subr.bf16.mxu0 0
    %2718 = vmatpush2.bf16.msra.mxu0 0
    %2719 = vmatprep.subr.bf16.mxu0 0
    %2720 = vmatpush2.bf16.msra.mxu0 0
    %2721 = vmatprep.mubr.bf16.mxu0 0
    %2722 = vmatmul.mubr.bf16.gmra.mxu0 %v2688
    %v2723 = vpop.f32.mrf.mxu0
    %v2724 = vadd.f32 %v2612, %v2723
    %v2725 = vpop.f32.mrf.mxu0
    %v2726 = vadd.f32 %v2614, %v2725
    %v2727 = vpop.f32.mrf.mxu0
    %v2728 = vpop.f32.mrf.mxu0
    %2729 = vdwg.mxu0
    %2730 = vmatprep.subr.bf16.mxu0 %v1053
    %2731 = vmatpush1.bf16.msra.mxu0 %v1052
    %2732 = vmatprep.subr.bf16.mxu0 %v1049
    %2733 = vmatpush1.bf16.msra.mxu0 %v1048
    %2734 = vmatprep.subr.bf16.mxu0 %v1045
    %2735 = vmatpush1.bf16.msra.mxu0 %v1044
    %2736 = vmatprep.subr.bf16.mxu0 %v1041
    %2737 = vmatpush1.bf16.msra.mxu0 %v1040
    %2738 = vmatprep.subr.bf16.mxu0 %v1037
    %2739 = vmatpush1.bf16.msra.mxu0 %v1036
    %2740 = vmatprep.subr.bf16.mxu0 %v1033
    %2741 = vmatpush1.bf16.msra.mxu0 %v1032
    %2742 = vmatprep.subr.bf16.mxu0 %v1029
    %2743 = vmatpush1.bf16.msra.mxu0 %v1028
    %2744 = vmatprep.subr.bf16.mxu0 %v1025
    %2745 = vmatpush1.bf16.msra.mxu0 %v1024
    %2746 = vmatprep.subr.bf16.mxu0 0
    %2747 = vmatpush2.bf16.msra.mxu0 0
    %2748 = vmatprep.subr.bf16.mxu0 0
    %2749 = vmatpush2.bf16.msra.mxu0 0
    %2750 = vmatprep.subr.bf16.mxu0 0
    %2751 = vmatpush2.bf16.msra.mxu0 0
    %2752 = vmatprep.subr.bf16.mxu0 0
    %2753 = vmatpush2.bf16.msra.mxu0 0
    %2754 = vmatprep.subr.bf16.mxu0 0
    %2755 = vmatpush2.bf16.msra.mxu0 0
    %2756 = vmatprep.subr.bf16.mxu0 0
    %2757 = vmatpush2.bf16.msra.mxu0 0
    %2758 = vmatprep.subr.bf16.mxu0 0
    %2759 = vmatpush2.bf16.msra.mxu0 0
    %2760 = vmatprep.subr.bf16.mxu0 0
    %2761 = vmatpush2.bf16.msra.mxu0 0
    %2762 = vmatprep.mubr.bf16.mxu0 0
    %2763 = vmatmul.mubr.bf16.gmra.mxu0 %v2688
    %v2764 = vpop.f32.mrf.mxu0
    %v2765 = vadd.f32 %v2655, %v2764
    %v2766 = vpop.f32.mrf.mxu0
    %v2767 = vadd.f32 %v2657, %v2766
    %v2768 = vpop.f32.mrf.mxu0
    %v2769 = vpop.f32.mrf.mxu0
    %2770 = vdwg.mxu0
    %v2771 = vadd.f32 %v2724, %v356
    %v2772 = vadd.f32 %v2726, %v360
    %v2773 = vadd.f32 %v2765, %v364
    %v2774 = vadd.f32 %v2767, %v368
    %v2775 = vmul.f32 %v2771, 0.5
    %v2776 = vtanh.pop %v2775
    %v2777 = vmul.f32 %v2776, 0.5
    %v2778 = vadd.f32 %v2777, 0.5
    %v2779 = vmul.f32 %v2772, 0.5
    %v2780 = vtanh.pop %v2779
    %v2781 = vmul.f32 %v2780, 0.5
    %v2782 = vadd.f32 %v2781, 0.5
    %v2783 = vtanh.pop %v2773
    %v2784 = vmul.f32 %v2774, 0.5
    %v2785 = vtanh.pop %v2784
    %v2786 = vmul.f32 %v2785, 0.5
    %v2787 = vadd.f32 %v2786, 0.5
    %v2788 = vmul.f32 %v2782, %v2561
    %v2789 = vmul.f32 %v2778, %v2783
    %v2790 = vadd.f32 %v2788, %v2789
    %v2791 = vtanh.pop %v2790
    %v2792 = vmul.f32 %v2787, %v2791
    %v2793 = vpack.c.bf16 %v2792, %v2792
    %v2794 = vld [vmem:[#allocation7] sm:$0xf]
    %v2795 = vld [vmem:[#allocation7 + $0x4] sm:$0xf]
    %v2796 = vld [vmem:[#allocation7 + $0x8] sm:$0xf]
    %v2797 = vld [vmem:[#allocation7 + $0xc] sm:$0xf]
    %v2798 = vld [vmem:[#allocation7 + $0x10] sm:$0xf]
    %v2799 = vld [vmem:[#allocation7 + $0x14] sm:$0xf]
    %v2800 = vld [vmem:[#allocation7 + $0x18] sm:$0xf]
    %v2801 = vld [vmem:[#allocation7 + $0x1c] sm:$0xf]
    %v2802 = vld [vmem:[#allocation7 + $0x20] sm:$0xf]
    %v2803 = vld [vmem:[#allocation7 + $0x24] sm:$0xf]
    %v2804 = vld [vmem:[#allocation7 + $0x28] sm:$0xf]
    %v2805 = vld [vmem:[#allocation7 + $0x2c] sm:$0xf]
    %v2806 = vld [vmem:[#allocation7 + $0x30] sm:$0xf]
    %v2807 = vld [vmem:[#allocation7 + $0x34] sm:$0xf]
    %v2808 = vld [vmem:[#allocation7 + $0x38] sm:$0xf]
    %v2809 = vld [vmem:[#allocation7 + $0x3c] sm:$0xf]
    %v2810 = vld [vmem:[%s9] sm:$0x1]
    %v2812 = vlaneseq
    %v2813 = vshrl.u32 %v2812, 7
    %v2814 = vsub.s32 0, %v2813
    %v2815 = vrot.slane %v2810, %v2814
    %v2833 = vunpack.c.l.b16 %v2794
    %v2834 = vunpack.c.l.b16 %v2795
    %v2835 = vunpack.c.l.b16 %v2796
    %v2836 = vunpack.c.l.b16 %v2797
    %v2837 = vunpack.c.l.b16 %v2798
    %v2838 = vunpack.c.l.b16 %v2799
    %v2839 = vunpack.c.l.b16 %v2800
    %v2840 = vunpack.c.l.b16 %v2801
    %v2841 = vunpack.c.l.b16 %v2802
    %v2842 = vunpack.c.l.b16 %v2803
    %v2843 = vunpack.c.l.b16 %v2804
    %v2844 = vunpack.c.l.b16 %v2805
    %v2845 = vunpack.c.l.b16 %v2806
    %v2846 = vunpack.c.l.b16 %v2807
    %v2847 = vunpack.c.l.b16 %v2808
    %v2848 = vunpack.c.l.b16 %v2809
    %v2849 = vpack.c.b16 %v2834, %v2833
    %v2850 = vpack.c.b16 %v2836, %v2835
    %v2851 = vpack.c.b16 %v2838, %v2837
    %v2852 = vpack.c.b16 %v2840, %v2839
    %v2853 = vpack.c.b16 %v2842, %v2841
    %v2854 = vpack.c.b16 %v2844, %v2843
    %v2855 = vpack.c.b16 %v2846, %v2845
    %v2856 = vpack.c.b16 %v2848, %v2847
    %2865 = vmatprep.subr.bf16.mxu0 0
    %2866 = vmatpush1.bf16.msra.mxu0 %v2856
    %2867 = vmatprep.subr.bf16.mxu0 0
    %2868 = vmatpush1.bf16.msra.mxu0 %v2855
    %2869 = vmatprep.subr.bf16.mxu0 0
    %2870 = vmatpush1.bf16.msra.mxu0 %v2854
    %2871 = vmatprep.subr.bf16.mxu0 0
    %2872 = vmatpush1.bf16.msra.mxu0 %v2853
    %2873 = vmatprep.subr.bf16.mxu0 0
    %2874 = vmatpush1.bf16.msra.mxu0 %v2852
    %2875 = vmatprep.subr.bf16.mxu0 0
    %2876 = vmatpush1.bf16.msra.mxu0 %v2851
    %2877 = vmatprep.subr.bf16.mxu0 0
    %2878 = vmatpush1.bf16.msra.mxu0 %v2850
    %2879 = vmatprep.subr.bf16.mxu0 0
    %2880 = vmatpush1.bf16.msra.mxu0 %v2849
    %2881 = vmatprep.subr.bf16.mxu0 0
    %2882 = vmatpush2.bf16.msra.mxu0 0
    %2883 = vmatprep.subr.bf16.mxu0 0
    %2884 = vmatpush2.bf16.msra.mxu0 0
    %2885 = vmatprep.subr.bf16.mxu0 0
    %2886 = vmatpush2.bf16.msra.mxu0 0
    %2887 = vmatprep.subr.bf16.mxu0 0
    %2888 = vmatpush2.bf16.msra.mxu0 0
    %2889 = vmatprep.subr.bf16.mxu0 0
    %2890 = vmatpush2.bf16.msra.mxu0 0
    %2891 = vmatprep.subr.bf16.mxu0 0
    %2892 = vmatpush2.bf16.msra.mxu0 0
    %2893 = vmatprep.subr.bf16.mxu0 0
    %2894 = vmatpush2.bf16.msra.mxu0 0
    %2895 = vmatprep.subr.bf16.mxu0 0
    %2896 = vmatpush2.bf16.msra.mxu0 0
    %2897 = vmatprep.mubr.bf16.mxu0 0
    %2898 = vmatmul.mubr.bf16.gmra.mxu0 %v2793
    %v2899 = vpop.f32.mrf.mxu0
    %v2900 = vadd.f32 %v2815, %v2899
    %v2901 = vpop.f32.mrf.mxu0
    %v2902 = vpop.f32.mrf.mxu0
    %v2903 = vpop.f32.mrf.mxu0
    %2904 = vdwg.mxu0
    %2905 = vmax.xlane.f32.xlu0 %v2900
    %v2906 = vpop.xlane.xlu0 %2905
    %v2907 = vsub.f32 %v2900, %v2906
    %v2908 = vmul.f32 %v2907, 1.442695
    %v2909 = vpow.pop %v2908
    %2910 = vadd.xlane.f32.xlu0 %v2909
    %v2911 = vpop.xlane.xlu0 %2910
    %v2912 = vlog2.pop %v2911
    %v2913 = vmul.f32 %v2912, 0.6931472
    %v2914 = vsub.f32 %v2907, %v2913
    %2915 = vst [vmem:[%s10] sm:$0xff] %v2914
    // Predicated region
    $region54: #{cnn_lstm_forward.1} parent=1 // pred_check
      _
    $region55: #{cnn_lstm_forward.1} parent=1 // pred_check_branch
      %2917 = sbr.rel (0) target = $region57
    $region56: #{cnn_lstm_forward.1} parent=1 // pred_region
      _
    $region57: #{cnn_lstm_forward.1} parent=1 // pred_fallthru
      _
    // Predicated region
    $region58: #{cnn_lstm_forward.1} parent=1 // pred_check
      _
    $region59: #{cnn_lstm_forward.1} parent=1 // pred_check_branch
      %2919 = sbr.rel (0) target = $region61
    $region60: #{cnn_lstm_forward.1} parent=1 // pred_region
      _
    $region61: #{cnn_lstm_forward.1} parent=1 // pred_fallthru
      _
    %2920 = vsyncpa [#allocation4], 1
    %2921 = vsyncpa [#allocation6], 1

</llo_original>
